<compile_context>
chip_gen: v7x
topology: tpu7x:2x2x1
jax: 0.10.0
libtpu: 0.0.40
codegen_flags: <defaults>
</compile_context>

<pallas_src>
import functools

import jax
import jax.numpy as jnp
from jax import lax
from jax.experimental import pallas as pl
from jax.experimental.pallas import tpu as pltpu


# ---------------------------------------------------------------------------
# small in-kernel helpers
# ---------------------------------------------------------------------------
def _sigmoid(x):
    # x is finite everywhere this is used (the +/-inf mask logits of the
    # reference never enter the kernel).
    return 1.0 / (1.0 + jnp.exp(-x))


def _log_sigmoid(x):
    # stable for finite x of either sign.
    return jnp.where(x >= 0.0,
                     -jnp.log(1.0 + jnp.exp(-x)),
                     x - jnp.log(1.0 + jnp.exp(x)))


def _dot(a, b):
    return jnp.dot(a, b, preferred_element_type=jnp.float32)


def _dot_t(a, b):
    # a @ b.T without materializing a transpose.
    return lax.dot_general(a, b, (((1,), (1,)), ((), ())),
                           preferred_element_type=jnp.float32)


def _block_expand(J, H):
    """S[j, j*H + h] = 1 else 0  ([J, J*H]).  Built from iota + compares only.

    Used to (a) expand per-capsule coefficients [I, J] -> [I, J*H] with an MXU
    matmul, (b) reduce lane-flattened H-blocks back to J via X @ S^T, and
    (c) build the block-diagonal input matrix for routing2's per-input weights.
    """
    kk = lax.broadcasted_iota(jnp.int32, (J, J * H), 1)
    jj = lax.broadcasted_iota(jnp.int32, (J, J * H), 0)
    return jnp.where((kk >= jj * H) & (kk < (jj + 1) * H), 1.0, 0.0
                     ).astype(jnp.float32)


def _route(V, f_a, beta_use, beta_ign, S, *, n_out, n_iters, eps):
    """Heinsen routing (d_cov == 1) on lane-flattened capsules.

    V        [I, J*H]  votes (bias already added)
    f_a      [I, 1]    sigmoid(a_inp)
    beta_*   [1, J] or [I, J]
    S        [J, J*H]  block-expansion matrix
    returns  a_out [1, J], mu_out [1, J*H], sig2_out [1, J*H]
    """
    n_i = V.shape[0]
    J = n_out
    a_out = mu_f = sig2_f = Vlm2 = None
    for it in range(n_iters):
        if it == 0:
            R = jnp.full((n_i, J), 1.0 / J, dtype=jnp.float32)
        else:
            inv2sig = 0.5 * pl.reciprocal(sig2_f, approx=True)           # [1, J*H]
            # -log p[i,j] = sum_h (Vlm2*inv2sig + 0.5*log sig2)  (one MXU reduce)
            neg_log_p = _dot_t(Vlm2 * inv2sig + 0.5 * jnp.log(sig2_f), S)  # [I, J]
            z = _log_sigmoid(a_out) - neg_log_p                          # [I, J]
            z = z - jnp.max(z, axis=-1, keepdims=True)
            ez = jnp.exp(z)
            R = ez / jnp.sum(ez, axis=-1, keepdims=True)                 # softmax_j
        D_use = f_a * R                                                  # [I, J]
        D_ign = f_a - D_use
        a_out = (jnp.sum(beta_use * D_use, axis=0, keepdims=True)
                 - jnp.sum(beta_ign * D_ign, axis=0, keepdims=True))     # [1, J]
        over = pl.reciprocal(jnp.sum(D_use, axis=0, keepdims=True) + eps,
                             approx=True)                                # [1, J]
        Dn = _dot(D_use * over, S)                                       # [I, J*H]
        mu_f = jnp.sum(Dn * V, axis=0, keepdims=True)                    # [1, J*H]
        Vlm2 = (V - mu_f) ** 2                                           # [I, J*H]
        sig2_f = jnp.sum(Dn * Vlm2, axis=0, keepdims=True) + eps         # [1, J*H]
    return a_out, mu_f, sig2_f


# ---------------------------------------------------------------------------
# fused kernel: detect_parts -> routing1 -> routing2, one batch element / step
# ---------------------------------------------------------------------------
def _sst_kernel(x_ref, depth_ref, fa_ref,
                wl_ref, bl_ref, g_ref, be_ref,
                w1_ref, b1_ref, bu1_ref, bi1_ref,
                w2_ref, b2_ref, bu2_ref, bi2_ref,
                a_ref, mu_ref, sig2_ref,
                *, n_parts, n_classes, d_cap, n_iters, eps):
    J1, H1 = n_parts, d_cap
    J2, H2 = n_classes, d_cap

    # ---- detect_parts: Linear -> Swish -> LayerNorm (MXU + VPU/EUP) ----
    x = x_ref[0] + depth_ref[...]                                   # [I, d_emb]
    h = _dot(x, wl_ref[...]) + bl_ref[...]                          # [I, d_inp]
    s = h * _sigmoid(h)                                             # Swish
    m = jnp.mean(s, axis=-1, keepdims=True)
    var = jnp.mean(s * s, axis=-1, keepdims=True) - m * m           # biased (torch LN)
    mu = (s - m) * lax.rsqrt(var + 1e-5)
    mu = mu * g_ref[...] + be_ref[...]                              # [I, d_inp]

    # ---- routing 1: n*d_depth -> n_parts (W shared over inputs) ----
    S1 = _block_expand(J1, H1)                                      # [J1, J1*H1]
    V1 = _dot(mu, w1_ref[...]) + b1_ref[...]                        # [I, J1*H1]
    a1, mu1, _ = _route(V1, fa_ref[0], bu1_ref[...], bi1_ref[...], S1,
                        n_out=J1, n_iters=n_iters, eps=eps)

    # ---- routing 2: n_parts -> n_classes (W varies per input capsule) ----
    # (S1 * mu1)[i, i*H1 + d] == mu1_capsule[i, d] and 0 elsewhere, so one
    # 2-D matmul against the flattened [J1*H1, J2*H2] weights gives
    # V2[i, j*H2+h] = sum_d mu1[i, d] * W2[i, j, d, h].
    fa_row = _sigmoid(a1)                                           # [1, J1]
    ii = lax.broadcasted_iota(jnp.int32, (J1, J1), 0)
    jj = lax.broadcasted_iota(jnp.int32, (J1, J1), 1)
    eye = jnp.where(ii == jj, 1.0, 0.0).astype(jnp.float32)
    fa2 = jnp.sum(eye * fa_row, axis=1, keepdims=True)              # [J1, 1] (row -> col)
    S2 = _block_expand(J2, H2)                                      # [J2, J2*H2]
    V2 = _dot(S1 * mu1, w2_ref[...]) + b2_ref[...]                  # [J1, J2*H2]
    a2, mu2, sig2 = _route(V2, fa2, bu2_ref[...], bi2_ref[...], S2,
                           n_out=J2, n_iters=n_iters, eps=eps)

    a_ref[0] = a2                                                   # [1, J2]
    mu_ref[0] = mu2                                                 # [1, J2*H2]
    sig2_ref[0] = sig2                                              # [1, J2*H2]


# ---------------------------------------------------------------------------
# wrapper: parameter reshapes (host-side glue only) + pallas_call
# ---------------------------------------------------------------------------
def sst_classifier_forward(params, mask, embs, *, n_iters=3, eps=1e-5):
    B, n, d_depth, d_emb = embs.shape
    I = n * d_depth
    d_inp = params["lin_w"].shape[1]
    n_parts = params["W1"].shape[1]
    d_cap = params["W1"].shape[3]
    n_classes = params["W2"].shape[1]
    J1H1 = n_parts * d_cap
    J2H2 = n_classes * d_cap
    f32 = jnp.float32

    x = embs.reshape(B, I, d_emb).astype(f32)
    depth_tile = jnp.tile(params["depth_emb"].astype(f32), (n, 1))      # [I, d_emb]
    # sigmoid(log(mask/(1-mask))) == mask -> feed probabilities directly.
    f_a = jnp.repeat(mask.astype(f32), d_depth, axis=-1)[..., None]     # [B, I, 1]

    # pure parameter reshapes (no data-sized broadcasts):
    w1 = jnp.transpose(params["W1"][0].astype(f32), (1, 0, 2)).reshape(d_inp, J1H1)
    b1 = params["B1"].astype(f32).reshape(1, J1H1)
    w2 = jnp.transpose(params["W2"].astype(f32), (0, 2, 1, 3)).reshape(n_parts * d_cap, J2H2)
    b2 = params["B2"].astype(f32).reshape(n_parts, J2H2)

    kernel = functools.partial(_sst_kernel, n_parts=n_parts, n_classes=n_classes,
                               d_cap=d_cap, n_iters=n_iters, eps=eps)

    rep = lambda b: (0, 0)   # resident parameter blocks (re-fetch skipped)
    a_out, mu_out, sig2_out = pl.pallas_call(
        kernel,
        out_shape=(
            jax.ShapeDtypeStruct((B, 1, n_classes), f32),
            jax.ShapeDtypeStruct((B, 1, J2H2), f32),
            jax.ShapeDtypeStruct((B, 1, J2H2), f32),
        ),
        grid=(B,),
        in_specs=[
            pl.BlockSpec((1, I, d_emb), lambda b: (b, 0, 0)),      # embs rows
            pl.BlockSpec((I, d_emb), rep),                         # depth emb (tiled)
            pl.BlockSpec((1, I, 1), lambda b: (b, 0, 0)),          # f(a) = mask probs
            pl.BlockSpec((d_emb, d_inp), rep),                     # linear W
            pl.BlockSpec((1, d_inp), rep),                         # linear b
            pl.BlockSpec((1, d_inp), rep),                         # LN gamma
            pl.BlockSpec((1, d_inp), rep),                         # LN beta
            pl.BlockSpec((d_inp, J1H1), rep),                      # routing1 W (2-D)
            pl.BlockSpec((1, J1H1), rep),                          # routing1 B
            pl.BlockSpec((1, n_parts), rep),                       # routing1 beta_use
            pl.BlockSpec((1, n_parts), rep),                       # routing1 beta_ign
            pl.BlockSpec((n_parts * d_cap, J2H2), rep),            # routing2 W (2-D)
            pl.BlockSpec((n_parts, J2H2), rep),                    # routing2 B
            pl.BlockSpec((n_parts, n_classes), rep),               # routing2 beta_use
            pl.BlockSpec((n_parts, n_classes), rep),               # routing2 beta_ign
        ],
        out_specs=(
            pl.BlockSpec((1, 1, n_classes), lambda b: (b, 0, 0)),
            pl.BlockSpec((1, 1, J2H2), lambda b: (b, 0, 0)),
            pl.BlockSpec((1, 1, J2H2), lambda b: (b, 0, 0)),
        ),
        compiler_params=pltpu.CompilerParams(
            dimension_semantics=("parallel",),          # shard batch over TCs (v7x)
            vmem_limit_bytes=32 * 1024 * 1024,          # explicit, fits every chip
        ),
    )(x, depth_tile, f_a,
      params["lin_w"].astype(f32), params["lin_b"].astype(f32),
      params["ln_g"].astype(f32), params["ln_b"].astype(f32),
      w1, b1, params["beta_use1"].astype(f32), params["beta_ign1"].astype(f32),
      w2, b2, params["beta_use2"].astype(f32), params["beta_ign2"].astype(f32))

    a_out = a_out.reshape(B, n_classes)
    mu_out = mu_out.reshape(B, n_classes, d_cap)[:, :, None, :]
    sig2_out = sig2_out.reshape(B, n_classes, d_cap)[:, :, None, :]
    return a_out, mu_out, sig2_out


def init_params(key, d_depth, d_emb, d_inp, d_cap, n_parts, n_classes):
    ks = jax.random.split(key, 10)
    p = {}
    p["depth_emb"] = 0.02 * jax.random.normal(ks[0], (d_depth, d_emb), jnp.float32)
    p["lin_w"] = jax.random.normal(ks[1], (d_emb, d_inp), jnp.float32) * jnp.sqrt(2.0 / d_emb)
    p["lin_b"] = jnp.zeros((1, d_inp), jnp.float32)
    p["ln_g"] = jnp.ones((1, d_inp), jnp.float32)
    p["ln_b"] = jnp.zeros((1, d_inp), jnp.float32)
    # Routing(d_cov=1, d_inp=d_inp, d_out=d_cap, n_out=n_parts): n_inp free -> dim 0 is 1
    p["W1"] = jax.random.normal(ks[2], (1, n_parts, d_inp, d_cap), jnp.float32) / d_inp
    p["B1"] = 0.01 * jax.random.normal(ks[3], (1, n_parts, 1, d_cap), jnp.float32)
    p["beta_use1"] = 0.1 * jax.random.normal(ks[4], (1, n_parts), jnp.float32)
    p["beta_ign1"] = 0.1 * jax.random.normal(ks[5], (1, n_parts), jnp.float32)
    # Routing(d_cov=1, d_inp=d_cap, d_out=d_cap, n_inp=n_parts, n_out=n_classes)
    p["W2"] = jax.random.normal(ks[6], (n_parts, n_classes, d_cap, d_cap), jnp.float32) / d_cap
    p["B2"] = 0.01 * jax.random.normal(ks[7], (n_parts, n_classes, 1, d_cap), jnp.float32)
    p["beta_use2"] = 0.1 * jax.random.normal(ks[8], (n_parts, n_classes), jnp.float32)
    p["beta_ign2"] = 0.1 * jax.random.normal(ks[9], (n_parts, n_classes), jnp.float32)
    return p


if __name__ == "__main__":
    B, n, d_depth, d_emb = 2, 6, 2, 16
    d_inp, d_cap, n_parts, n_classes = 32, 16, 8, 4

    key = jax.random.PRNGKey(0)
    kp, ke = jax.random.split(key)
    params = init_params(kp, d_depth, d_emb, d_inp, d_cap, n_parts, n_classes)

    embs = jax.random.normal(ke, (B, n, d_depth, d_emb), jnp.float32)
    mask = jnp.array([[1., 1., 1., 1., 1., 0.],
                      [1., 1., 1., 1., 0., 0.]], jnp.float32)

    a_out, mu_out, sig2_out = jax.jit(sst_classifier_forward)(params, mask, embs)
    jax.block_until_ready((a_out, mu_out, sig2_out))

    assert a_out.shape == (B, n_classes)
    assert mu_out.shape == (B, n_classes, 1, d_cap)
    assert sig2_out.shape == (B, n_classes, 1, d_cap)
    assert bool(jnp.isfinite(a_out).all())
    assert bool(jnp.isfinite(mu_out).all())
    assert bool(jnp.isfinite(sig2_out).all())
    assert bool((sig2_out > 0).all())
    print("KERNEL_OK")
</pallas_src>

<mosaic_0001>
module attributes {stable_mosaic.version = 11 : i64} {
  func.func @_sst_kernel(%arg0: i32, %arg1: memref<1x12x16xf32, #tpu.memory_space<vmem>>, %arg2: memref<12x16xf32, #tpu.memory_space<vmem>>, %arg3: memref<1x12x1xf32, #tpu.memory_space<vmem>>, %arg4: memref<16x32xf32, #tpu.memory_space<vmem>>, %arg5: memref<1x32xf32, #tpu.memory_space<vmem>>, %arg6: memref<1x32xf32, #tpu.memory_space<vmem>>, %arg7: memref<1x32xf32, #tpu.memory_space<vmem>>, %arg8: memref<32x128xf32, #tpu.memory_space<vmem>>, %arg9: memref<1x128xf32, #tpu.memory_space<vmem>>, %arg10: memref<1x8xf32, #tpu.memory_space<vmem>>, %arg11: memref<1x8xf32, #tpu.memory_space<vmem>>, %arg12: memref<128x64xf32, #tpu.memory_space<vmem>>, %arg13: memref<8x64xf32, #tpu.memory_space<vmem>>, %arg14: memref<8x4xf32, #tpu.memory_space<vmem>>, %arg15: memref<8x4xf32, #tpu.memory_space<vmem>>, %arg16: memref<1x1x4xf32, #tpu.memory_space<vmem>>, %arg17: memref<1x1x64xf32, #tpu.memory_space<vmem>>, %arg18: memref<1x1x64xf32, #tpu.memory_space<vmem>>) attributes {dimension_semantics = [#tpu.dimension_semantics<parallel>], iteration_bounds = array<i64: 2>, scalar_prefetch = 0 : i64, scratch_operands = 0 : i64, tpu.core_type = #tpu.core_type<tc>, window_params = [{transform_indices = @transform_0, window_bounds = array<i64: 1, 12, 16>}, {pipeline_mode = #tpu.pipeline_mode<synchronous>, transform_indices = @transform_1, window_bounds = array<i64: 12, 16>}, {transform_indices = @transform_2, window_bounds = array<i64: 1, 12, 1>}, {pipeline_mode = #tpu.pipeline_mode<synchronous>, transform_indices = @transform_3, window_bounds = array<i64: 16, 32>}, {pipeline_mode = #tpu.pipeline_mode<synchronous>, transform_indices = @transform_4, window_bounds = array<i64: 1, 32>}, {pipeline_mode = #tpu.pipeline_mode<synchronous>, transform_indices = @transform_5, window_bounds = array<i64: 1, 32>}, {pipeline_mode = #tpu.pipeline_mode<synchronous>, transform_indices = @transform_6, window_bounds = array<i64: 1, 32>}, {pipeline_mode = #tpu.pipeline_mode<synchronous>, transform_indices = @transform_7, window_bounds = array<i64: 32, 128>}, {pipeline_mode = #tpu.pipeline_mode<synchronous>, transform_indices = @transform_8, window_bounds = array<i64: 1, 128>}, {pipeline_mode = #tpu.pipeline_mode<synchronous>, transform_indices = @transform_9, window_bounds = array<i64: 1, 8>}, {pipeline_mode = #tpu.pipeline_mode<synchronous>, transform_indices = @transform_10, window_bounds = array<i64: 1, 8>}, {pipeline_mode = #tpu.pipeline_mode<synchronous>, transform_indices = @transform_11, window_bounds = array<i64: 128, 64>}, {pipeline_mode = #tpu.pipeline_mode<synchronous>, transform_indices = @transform_12, window_bounds = array<i64: 8, 64>}, {pipeline_mode = #tpu.pipeline_mode<synchronous>, transform_indices = @transform_13, window_bounds = array<i64: 8, 4>}, {pipeline_mode = #tpu.pipeline_mode<synchronous>, transform_indices = @transform_14, window_bounds = array<i64: 8, 4>}, {transform_indices = @transform_15, window_bounds = array<i64: 1, 1, 4>}, {transform_indices = @transform_16, window_bounds = array<i64: 1, 1, 64>}, {transform_indices = @transform_17, window_bounds = array<i64: 1, 1, 64>}]} {
    %c0 = arith.constant 0 : index
    %c0_0 = arith.constant 0 : index
    %c0_1 = arith.constant 0 : index
    %0 = vector.load %arg1[%c0, %c0_0, %c0_1] : memref<1x12x16xf32, #tpu.memory_space<vmem>>, vector<1x12x16xf32>
    %1 = vector.shape_cast %0 : vector<1x12x16xf32> to vector<12x16xf32>
    %c0_2 = arith.constant 0 : index
    %c0_3 = arith.constant 0 : index
    %2 = vector.load %arg2[%c0_2, %c0_3] : memref<12x16xf32, #tpu.memory_space<vmem>>, vector<12x16xf32>
    %3 = arith.addf %1, %2 : vector<12x16xf32>
    %c0_4 = arith.constant 0 : index
    %c0_5 = arith.constant 0 : index
    %4 = vector.load %arg4[%c0_4, %c0_5] : memref<16x32xf32, #tpu.memory_space<vmem>>, vector<16x32xf32>
    %cst = arith.constant dense<0.000000e+00> : vector<12x32xf32>
    %5 = tpu.matmul %3, %4, %cst {dimension_numbers = #tpu.dot_dimension_numbers<[1], [0], [0], [1], [0, 0, 1, 1], [], []>} : vector<12x16xf32>, vector<16x32xf32>, vector<12x32xf32> -> vector<12x32xf32>
    %c0_6 = arith.constant 0 : index
    %c0_7 = arith.constant 0 : index
    %6 = vector.load %arg5[%c0_6, %c0_7] : memref<1x32xf32, #tpu.memory_space<vmem>>, vector<1x32xf32>
    %7 = vector.broadcast %6 : vector<1x32xf32> to vector<12x32xf32>
    %8 = arith.addf %5, %7 : vector<12x32xf32>
    %cst_8 = arith.constant 0.000000e+00 : f32
    %9 = vector.broadcast %cst_8 : f32 to vector<12x32xf32>
    %10 = arith.subf %9, %8 : vector<12x32xf32>
    %11 = math.exp %10 : vector<12x32xf32>
    %cst_9 = arith.constant 1.000000e+00 : f32
    %12 = vector.broadcast %cst_9 : f32 to vector<12x32xf32>
    %13 = arith.addf %12, %11 : vector<12x32xf32>
    %cst_10 = arith.constant 1.000000e+00 : f32
    %14 = vector.broadcast %cst_10 : f32 to vector<12x32xf32>
    %15 = arith.divf %14, %13 : vector<12x32xf32>
    %16 = arith.mulf %8, %15 : vector<12x32xf32>
    %cst_11 = arith.constant dense<0.000000e+00> : vector<12xf32>
    %17 = vector.multi_reduction <add>, %16, %cst_11 [1] : vector<12x32xf32> to vector<12xf32>
    %18 = vector.shape_cast %17 : vector<12xf32> to vector<12x1xf32>
    %cst_12 = arith.constant 3.200000e+01 : f32
    %19 = vector.broadcast %cst_12 : f32 to vector<12x1xf32>
    %20 = arith.divf %18, %19 : vector<12x1xf32>
    %21 = arith.mulf %16, %16 : vector<12x32xf32>
    %cst_13 = arith.constant dense<0.000000e+00> : vector<12xf32>
    %22 = vector.multi_reduction <add>, %21, %cst_13 [1] : vector<12x32xf32> to vector<12xf32>
    %23 = vector.shape_cast %22 : vector<12xf32> to vector<12x1xf32>
    %cst_14 = arith.constant 3.200000e+01 : f32
    %24 = vector.broadcast %cst_14 : f32 to vector<12x1xf32>
    %25 = arith.divf %23, %24 : vector<12x1xf32>
    %26 = arith.mulf %20, %20 : vector<12x1xf32>
    %27 = arith.subf %25, %26 : vector<12x1xf32>
    %28 = vector.broadcast %20 : vector<12x1xf32> to vector<12x32xf32>
    %29 = arith.subf %16, %28 : vector<12x32xf32>
    %cst_15 = arith.constant 9.99999974E-6 : f32
    %30 = vector.broadcast %cst_15 : f32 to vector<12x1xf32>
    %31 = arith.addf %27, %30 : vector<12x1xf32>
    %32 = math.rsqrt %31 : vector<12x1xf32>
    %33 = vector.broadcast %32 : vector<12x1xf32> to vector<12x32xf32>
    %34 = arith.mulf %29, %33 : vector<12x32xf32>
    %c0_16 = arith.constant 0 : index
    %c0_17 = arith.constant 0 : index
    %35 = vector.load %arg6[%c0_16, %c0_17] : memref<1x32xf32, #tpu.memory_space<vmem>>, vector<1x32xf32>
    %36 = vector.broadcast %35 : vector<1x32xf32> to vector<12x32xf32>
    %37 = arith.mulf %34, %36 : vector<12x32xf32>
    %c0_18 = arith.constant 0 : index
    %c0_19 = arith.constant 0 : index
    %38 = vector.load %arg7[%c0_18, %c0_19] : memref<1x32xf32, #tpu.memory_space<vmem>>, vector<1x32xf32>
    %39 = vector.broadcast %38 : vector<1x32xf32> to vector<12x32xf32>
    %40 = arith.addf %37, %39 : vector<12x32xf32>
    %41 = tpu.iota {dimensions = array<i32: 1>} : vector<8x128xi32>
    %42 = tpu.iota {dimensions = array<i32: 0>} : vector<8x128xi32>
    %c16_i32 = arith.constant 16 : i32
    %43 = vector.broadcast %c16_i32 : i32 to vector<8x128xi32>
    %44 = arith.muli %42, %43 : vector<8x128xi32>
    %45 = arith.cmpi sge, %41, %44 : vector<8x128xi32>
    %c1_i32 = arith.constant 1 : i32
    %46 = vector.broadcast %c1_i32 : i32 to vector<8x128xi32>
    %47 = arith.addi %42, %46 : vector<8x128xi32>
    %c16_i32_20 = arith.constant 16 : i32
    %48 = vector.broadcast %c16_i32_20 : i32 to vector<8x128xi32>
    %49 = arith.muli %47, %48 : vector<8x128xi32>
    %50 = arith.cmpi slt, %41, %49 : vector<8x128xi32>
    %51 = arith.andi %45, %50 : vector<8x128xi1>
    %cst_21 = arith.constant 1.000000e+00 : f32
    %cst_22 = arith.constant 0.000000e+00 : f32
    %52 = vector.broadcast %cst_21 : f32 to vector<8x128xf32>
    %53 = vector.broadcast %cst_22 : f32 to vector<8x128xf32>
    %54 = arith.select %51, %52, %53 : vector<8x128xi1>, vector<8x128xf32>
    %c0_23 = arith.constant 0 : index
    %c0_24 = arith.constant 0 : index
    %55 = vector.load %arg8[%c0_23, %c0_24] : memref<32x128xf32, #tpu.memory_space<vmem>>, vector<32x128xf32>
    %cst_25 = arith.constant dense<0.000000e+00> : vector<12x128xf32>
    %56 = tpu.matmul %40, %55, %cst_25 {dimension_numbers = #tpu.dot_dimension_numbers<[1], [0], [0], [1], [0, 0, 1, 1], [], []>} : vector<12x32xf32>, vector<32x128xf32>, vector<12x128xf32> -> vector<12x128xf32>
    %c0_26 = arith.constant 0 : index
    %c0_27 = arith.constant 0 : index
    %57 = vector.load %arg9[%c0_26, %c0_27] : memref<1x128xf32, #tpu.memory_space<vmem>>, vector<1x128xf32>
    %58 = vector.broadcast %57 : vector<1x128xf32> to vector<12x128xf32>
    %59 = arith.addf %56, %58 : vector<12x128xf32>
    %c0_28 = arith.constant 0 : index
    %c0_29 = arith.constant 0 : index
    %c0_30 = arith.constant 0 : index
    %60 = vector.load %arg3[%c0_28, %c0_29, %c0_30] : memref<1x12x1xf32, #tpu.memory_space<vmem>>, vector<1x12x1xf32>
    %61 = vector.shape_cast %60 : vector<1x12x1xf32> to vector<12x1xf32>
    %c0_31 = arith.constant 0 : index
    %c0_32 = arith.constant 0 : index
    %62 = vector.load %arg10[%c0_31, %c0_32] : memref<1x8xf32, #tpu.memory_space<vmem>>, vector<1x8xf32>
    %c0_33 = arith.constant 0 : index
    %c0_34 = arith.constant 0 : index
    %63 = vector.load %arg11[%c0_33, %c0_34] : memref<1x8xf32, #tpu.memory_space<vmem>>, vector<1x8xf32>
    %cst_35 = arith.constant 1.250000e-01 : f32
    %64 = vector.broadcast %cst_35 : f32 to vector<12x8xf32>
    %65 = vector.broadcast %61 : vector<12x1xf32> to vector<12x8xf32>
    %66 = arith.mulf %65, %64 : vector<12x8xf32>
    %67 = vector.broadcast %61 : vector<12x1xf32> to vector<12x8xf32>
    %68 = arith.subf %67, %66 : vector<12x8xf32>
    %69 = vector.broadcast %62 : vector<1x8xf32> to vector<12x8xf32>
    %70 = arith.mulf %69, %66 : vector<12x8xf32>
    %cst_36 = arith.constant dense<0.000000e+00> : vector<8xf32>
    %71 = vector.multi_reduction <add>, %70, %cst_36 [0] : vector<12x8xf32> to vector<8xf32>
    %72 = vector.shape_cast %71 : vector<8xf32> to vector<1x8xf32>
    %73 = vector.broadcast %63 : vector<1x8xf32> to vector<12x8xf32>
    %74 = arith.mulf %73, %68 : vector<12x8xf32>
    %cst_37 = arith.constant dense<0.000000e+00> : vector<8xf32>
    %75 = vector.multi_reduction <add>, %74, %cst_37 [0] : vector<12x8xf32> to vector<8xf32>
    %76 = vector.shape_cast %75 : vector<8xf32> to vector<1x8xf32>
    %77 = arith.subf %72, %76 : vector<1x8xf32>
    %cst_38 = arith.constant dense<0.000000e+00> : vector<8xf32>
    %78 = vector.multi_reduction <add>, %66, %cst_38 [0] : vector<12x8xf32> to vector<8xf32>
    %79 = vector.shape_cast %78 : vector<8xf32> to vector<1x8xf32>
    %cst_39 = arith.constant 9.99999974E-6 : f32
    %80 = vector.broadcast %cst_39 : f32 to vector<1x8xf32>
    %81 = arith.addf %79, %80 : vector<1x8xf32>
    %82 = tpu.reciprocal %81 {approx = true} : vector<1x8xf32> -> vector<1x8xf32>
    %83 = vector.broadcast %82 : vector<1x8xf32> to vector<12x8xf32>
    %84 = arith.mulf %66, %83 : vector<12x8xf32>
    %cst_40 = arith.constant dense<0.000000e+00> : vector<12x128xf32>
    %85 = tpu.matmul %84, %54, %cst_40 {dimension_numbers = #tpu.dot_dimension_numbers<[1], [0], [0], [1], [0, 0, 1, 1], [], []>} : vector<12x8xf32>, vector<8x128xf32>, vector<12x128xf32> -> vector<12x128xf32>
    %86 = arith.mulf %85, %59 : vector<12x128xf32>
    %cst_41 = arith.constant dense<0.000000e+00> : vector<128xf32>
    %87 = vector.multi_reduction <add>, %86, %cst_41 [0] : vector<12x128xf32> to vector<128xf32>
    %88 = vector.shape_cast %87 : vector<128xf32> to vector<1x128xf32>
    %89 = vector.broadcast %88 : vector<1x128xf32> to vector<12x128xf32>
    %90 = arith.subf %59, %89 : vector<12x128xf32>
    %91 = arith.mulf %90, %90 : vector<12x128xf32>
    %92 = arith.mulf %85, %91 : vector<12x128xf32>
    %cst_42 = arith.constant dense<0.000000e+00> : vector<128xf32>
    %93 = vector.multi_reduction <add>, %92, %cst_42 [0] : vector<12x128xf32> to vector<128xf32>
    %94 = vector.shape_cast %93 : vector<128xf32> to vector<1x128xf32>
    %cst_43 = arith.constant 9.99999974E-6 : f32
    %95 = vector.broadcast %cst_43 : f32 to vector<1x128xf32>
    %96 = arith.addf %94, %95 : vector<1x128xf32>
    %97 = tpu.reciprocal %96 {approx = true} : vector<1x128xf32> -> vector<1x128xf32>
    %cst_44 = arith.constant 5.000000e-01 : f32
    %98 = vector.broadcast %cst_44 : f32 to vector<1x128xf32>
    %99 = arith.mulf %98, %97 : vector<1x128xf32>
    %100 = vector.broadcast %99 : vector<1x128xf32> to vector<12x128xf32>
    %101 = arith.mulf %91, %100 : vector<12x128xf32>
    %102 = math.log %96 : vector<1x128xf32>
    %cst_45 = arith.constant 5.000000e-01 : f32
    %103 = vector.broadcast %cst_45 : f32 to vector<1x128xf32>
    %104 = arith.mulf %103, %102 : vector<1x128xf32>
    %105 = vector.broadcast %104 : vector<1x128xf32> to vector<12x128xf32>
    %106 = arith.addf %101, %105 : vector<12x128xf32>
    %cst_46 = arith.constant dense<0.000000e+00> : vector<12x8xf32>
    %107 = tpu.matmul %106, %54, %cst_46 {dimension_numbers = #tpu.dot_dimension_numbers<[1], [1], [0], [0], [0, 0, 1, 0], [], []>} : vector<12x128xf32>, vector<8x128xf32>, vector<12x8xf32> -> vector<12x8xf32>
    %cst_47 = arith.constant 0.000000e+00 : f32
    %108 = vector.broadcast %cst_47 : f32 to vector<1x8xf32>
    %109 = arith.cmpf oge, %77, %108 : vector<1x8xf32>
    %cst_48 = arith.constant 0.000000e+00 : f32
    %110 = vector.broadcast %cst_48 : f32 to vector<1x8xf32>
    %111 = arith.subf %110, %77 : vector<1x8xf32>
    %112 = math.exp %111 : vector<1x8xf32>
    %cst_49 = arith.constant 1.000000e+00 : f32
    %113 = vector.broadcast %cst_49 : f32 to vector<1x8xf32>
    %114 = arith.addf %113, %112 : vector<1x8xf32>
    %115 = math.log %114 : vector<1x8xf32>
    %cst_50 = arith.constant 0.000000e+00 : f32
    %116 = vector.broadcast %cst_50 : f32 to vector<1x8xf32>
    %117 = arith.subf %116, %115 : vector<1x8xf32>
    %118 = math.exp %77 : vector<1x8xf32>
    %cst_51 = arith.constant 1.000000e+00 : f32
    %119 = vector.broadcast %cst_51 : f32 to vector<1x8xf32>
    %120 = arith.addf %119, %118 : vector<1x8xf32>
    %121 = math.log %120 : vector<1x8xf32>
    %122 = arith.subf %77, %121 : vector<1x8xf32>
    %123 = arith.select %109, %117, %122 : vector<1x8xi1>, vector<1x8xf32>
    %124 = vector.broadcast %123 : vector<1x8xf32> to vector<12x8xf32>
    %125 = arith.subf %124, %107 : vector<12x8xf32>
    %cst_52 = arith.constant dense<0xFF800000> : vector<12xf32>
    %126 = vector.multi_reduction <maximumf>, %125, %cst_52 [1] : vector<12x8xf32> to vector<12xf32>
    %127 = vector.shape_cast %126 : vector<12xf32> to vector<12x1xf32>
    %128 = vector.broadcast %127 : vector<12x1xf32> to vector<12x8xf32>
    %129 = arith.subf %125, %128 : vector<12x8xf32>
    %130 = math.exp %129 : vector<12x8xf32>
    %cst_53 = arith.constant dense<0.000000e+00> : vector<12xf32>
    %131 = vector.multi_reduction <add>, %130, %cst_53 [1] : vector<12x8xf32> to vector<12xf32>
    %132 = vector.shape_cast %131 : vector<12xf32> to vector<12x1xf32>
    %133 = vector.broadcast %132 : vector<12x1xf32> to vector<12x8xf32>
    %134 = arith.divf %130, %133 : vector<12x8xf32>
    %135 = vector.broadcast %61 : vector<12x1xf32> to vector<12x8xf32>
    %136 = arith.mulf %135, %134 : vector<12x8xf32>
    %137 = vector.broadcast %61 : vector<12x1xf32> to vector<12x8xf32>
    %138 = arith.subf %137, %136 : vector<12x8xf32>
    %139 = vector.broadcast %62 : vector<1x8xf32> to vector<12x8xf32>
    %140 = arith.mulf %139, %136 : vector<12x8xf32>
    %cst_54 = arith.constant dense<0.000000e+00> : vector<8xf32>
    %141 = vector.multi_reduction <add>, %140, %cst_54 [0] : vector<12x8xf32> to vector<8xf32>
    %142 = vector.shape_cast %141 : vector<8xf32> to vector<1x8xf32>
    %143 = vector.broadcast %63 : vector<1x8xf32> to vector<12x8xf32>
    %144 = arith.mulf %143, %138 : vector<12x8xf32>
    %cst_55 = arith.constant dense<0.000000e+00> : vector<8xf32>
    %145 = vector.multi_reduction <add>, %144, %cst_55 [0] : vector<12x8xf32> to vector<8xf32>
    %146 = vector.shape_cast %145 : vector<8xf32> to vector<1x8xf32>
    %147 = arith.subf %142, %146 : vector<1x8xf32>
    %cst_56 = arith.constant dense<0.000000e+00> : vector<8xf32>
    %148 = vector.multi_reduction <add>, %136, %cst_56 [0] : vector<12x8xf32> to vector<8xf32>
    %149 = vector.shape_cast %148 : vector<8xf32> to vector<1x8xf32>
    %cst_57 = arith.constant 9.99999974E-6 : f32
    %150 = vector.broadcast %cst_57 : f32 to vector<1x8xf32>
    %151 = arith.addf %149, %150 : vector<1x8xf32>
    %152 = tpu.reciprocal %151 {approx = true} : vector<1x8xf32> -> vector<1x8xf32>
    %153 = vector.broadcast %152 : vector<1x8xf32> to vector<12x8xf32>
    %154 = arith.mulf %136, %153 : vector<12x8xf32>
    %cst_58 = arith.constant dense<0.000000e+00> : vector<12x128xf32>
    %155 = tpu.matmul %154, %54, %cst_58 {dimension_numbers = #tpu.dot_dimension_numbers<[1], [0], [0], [1], [0, 0, 1, 1], [], []>} : vector<12x8xf32>, vector<8x128xf32>, vector<12x128xf32> -> vector<12x128xf32>
    %156 = arith.mulf %155, %59 : vector<12x128xf32>
    %cst_59 = arith.constant dense<0.000000e+00> : vector<128xf32>
    %157 = vector.multi_reduction <add>, %156, %cst_59 [0] : vector<12x128xf32> to vector<128xf32>
    %158 = vector.shape_cast %157 : vector<128xf32> to vector<1x128xf32>
    %159 = vector.broadcast %158 : vector<1x128xf32> to vector<12x128xf32>
    %160 = arith.subf %59, %159 : vector<12x128xf32>
    %161 = arith.mulf %160, %160 : vector<12x128xf32>
    %162 = arith.mulf %155, %161 : vector<12x128xf32>
    %cst_60 = arith.constant dense<0.000000e+00> : vector<128xf32>
    %163 = vector.multi_reduction <add>, %162, %cst_60 [0] : vector<12x128xf32> to vector<128xf32>
    %164 = vector.shape_cast %163 : vector<128xf32> to vector<1x128xf32>
    %cst_61 = arith.constant 9.99999974E-6 : f32
    %165 = vector.broadcast %cst_61 : f32 to vector<1x128xf32>
    %166 = arith.addf %164, %165 : vector<1x128xf32>
    %167 = tpu.reciprocal %166 {approx = true} : vector<1x128xf32> -> vector<1x128xf32>
    %cst_62 = arith.constant 5.000000e-01 : f32
    %168 = vector.broadcast %cst_62 : f32 to vector<1x128xf32>
    %169 = arith.mulf %168, %167 : vector<1x128xf32>
    %170 = vector.broadcast %169 : vector<1x128xf32> to vector<12x128xf32>
    %171 = arith.mulf %161, %170 : vector<12x128xf32>
    %172 = math.log %166 : vector<1x128xf32>
    %cst_63 = arith.constant 5.000000e-01 : f32
    %173 = vector.broadcast %cst_63 : f32 to vector<1x128xf32>
    %174 = arith.mulf %173, %172 : vector<1x128xf32>
    %175 = vector.broadcast %174 : vector<1x128xf32> to vector<12x128xf32>
    %176 = arith.addf %171, %175 : vector<12x128xf32>
    %cst_64 = arith.constant dense<0.000000e+00> : vector<12x8xf32>
    %177 = tpu.matmul %176, %54, %cst_64 {dimension_numbers = #tpu.dot_dimension_numbers<[1], [1], [0], [0], [0, 0, 1, 0], [], []>} : vector<12x128xf32>, vector<8x128xf32>, vector<12x8xf32> -> vector<12x8xf32>
    %cst_65 = arith.constant 0.000000e+00 : f32
    %178 = vector.broadcast %cst_65 : f32 to vector<1x8xf32>
    %179 = arith.cmpf oge, %147, %178 : vector<1x8xf32>
    %cst_66 = arith.constant 0.000000e+00 : f32
    %180 = vector.broadcast %cst_66 : f32 to vector<1x8xf32>
    %181 = arith.subf %180, %147 : vector<1x8xf32>
    %182 = math.exp %181 : vector<1x8xf32>
    %cst_67 = arith.constant 1.000000e+00 : f32
    %183 = vector.broadcast %cst_67 : f32 to vector<1x8xf32>
    %184 = arith.addf %183, %182 : vector<1x8xf32>
    %185 = math.log %184 : vector<1x8xf32>
    %cst_68 = arith.constant 0.000000e+00 : f32
    %186 = vector.broadcast %cst_68 : f32 to vector<1x8xf32>
    %187 = arith.subf %186, %185 : vector<1x8xf32>
    %188 = math.exp %147 : vector<1x8xf32>
    %cst_69 = arith.constant 1.000000e+00 : f32
    %189 = vector.broadcast %cst_69 : f32 to vector<1x8xf32>
    %190 = arith.addf %189, %188 : vector<1x8xf32>
    %191 = math.log %190 : vector<1x8xf32>
    %192 = arith.subf %147, %191 : vector<1x8xf32>
    %193 = arith.select %179, %187, %192 : vector<1x8xi1>, vector<1x8xf32>
    %194 = vector.broadcast %193 : vector<1x8xf32> to vector<12x8xf32>
    %195 = arith.subf %194, %177 : vector<12x8xf32>
    %cst_70 = arith.constant dense<0xFF800000> : vector<12xf32>
    %196 = vector.multi_reduction <maximumf>, %195, %cst_70 [1] : vector<12x8xf32> to vector<12xf32>
    %197 = vector.shape_cast %196 : vector<12xf32> to vector<12x1xf32>
    %198 = vector.broadcast %197 : vector<12x1xf32> to vector<12x8xf32>
    %199 = arith.subf %195, %198 : vector<12x8xf32>
    %200 = math.exp %199 : vector<12x8xf32>
    %cst_71 = arith.constant dense<0.000000e+00> : vector<12xf32>
    %201 = vector.multi_reduction <add>, %200, %cst_71 [1] : vector<12x8xf32> to vector<12xf32>
    %202 = vector.shape_cast %201 : vector<12xf32> to vector<12x1xf32>
    %203 = vector.broadcast %202 : vector<12x1xf32> to vector<12x8xf32>
    %204 = arith.divf %200, %203 : vector<12x8xf32>
    %205 = vector.broadcast %61 : vector<12x1xf32> to vector<12x8xf32>
    %206 = arith.mulf %205, %204 : vector<12x8xf32>
    %207 = vector.broadcast %61 : vector<12x1xf32> to vector<12x8xf32>
    %208 = arith.subf %207, %206 : vector<12x8xf32>
    %209 = vector.broadcast %62 : vector<1x8xf32> to vector<12x8xf32>
    %210 = arith.mulf %209, %206 : vector<12x8xf32>
    %cst_72 = arith.constant dense<0.000000e+00> : vector<8xf32>
    %211 = vector.multi_reduction <add>, %210, %cst_72 [0] : vector<12x8xf32> to vector<8xf32>
    %212 = vector.shape_cast %211 : vector<8xf32> to vector<1x8xf32>
    %213 = vector.broadcast %63 : vector<1x8xf32> to vector<12x8xf32>
    %214 = arith.mulf %213, %208 : vector<12x8xf32>
    %cst_73 = arith.constant dense<0.000000e+00> : vector<8xf32>
    %215 = vector.multi_reduction <add>, %214, %cst_73 [0] : vector<12x8xf32> to vector<8xf32>
    %216 = vector.shape_cast %215 : vector<8xf32> to vector<1x8xf32>
    %217 = arith.subf %212, %216 : vector<1x8xf32>
    %cst_74 = arith.constant dense<0.000000e+00> : vector<8xf32>
    %218 = vector.multi_reduction <add>, %206, %cst_74 [0] : vector<12x8xf32> to vector<8xf32>
    %219 = vector.shape_cast %218 : vector<8xf32> to vector<1x8xf32>
    %cst_75 = arith.constant 9.99999974E-6 : f32
    %220 = vector.broadcast %cst_75 : f32 to vector<1x8xf32>
    %221 = arith.addf %219, %220 : vector<1x8xf32>
    %222 = tpu.reciprocal %221 {approx = true} : vector<1x8xf32> -> vector<1x8xf32>
    %223 = vector.broadcast %222 : vector<1x8xf32> to vector<12x8xf32>
    %224 = arith.mulf %206, %223 : vector<12x8xf32>
    %cst_76 = arith.constant dense<0.000000e+00> : vector<12x128xf32>
    %225 = tpu.matmul %224, %54, %cst_76 {dimension_numbers = #tpu.dot_dimension_numbers<[1], [0], [0], [1], [0, 0, 1, 1], [], []>} : vector<12x8xf32>, vector<8x128xf32>, vector<12x128xf32> -> vector<12x128xf32>
    %226 = arith.mulf %225, %59 : vector<12x128xf32>
    %cst_77 = arith.constant dense<0.000000e+00> : vector<128xf32>
    %227 = vector.multi_reduction <add>, %226, %cst_77 [0] : vector<12x128xf32> to vector<128xf32>
    %228 = vector.shape_cast %227 : vector<128xf32> to vector<1x128xf32>
    %cst_78 = arith.constant 0.000000e+00 : f32
    %229 = vector.broadcast %cst_78 : f32 to vector<1x8xf32>
    %230 = arith.subf %229, %217 : vector<1x8xf32>
    %231 = math.exp %230 : vector<1x8xf32>
    %cst_79 = arith.constant 1.000000e+00 : f32
    %232 = vector.broadcast %cst_79 : f32 to vector<1x8xf32>
    %233 = arith.addf %232, %231 : vector<1x8xf32>
    %cst_80 = arith.constant 1.000000e+00 : f32
    %234 = vector.broadcast %cst_80 : f32 to vector<1x8xf32>
    %235 = arith.divf %234, %233 : vector<1x8xf32>
    %236 = tpu.iota {dimensions = array<i32: 0>} : vector<8x8xi32>
    %237 = tpu.iota {dimensions = array<i32: 1>} : vector<8x8xi32>
    %238 = arith.cmpi eq, %236, %237 : vector<8x8xi32>
    %cst_81 = arith.constant 1.000000e+00 : f32
    %cst_82 = arith.constant 0.000000e+00 : f32
    %239 = vector.broadcast %cst_81 : f32 to vector<8x8xf32>
    %240 = vector.broadcast %cst_82 : f32 to vector<8x8xf32>
    %241 = arith.select %238, %239, %240 : vector<8x8xi1>, vector<8x8xf32>
    %242 = vector.broadcast %235 : vector<1x8xf32> to vector<8x8xf32>
    %243 = arith.mulf %241, %242 : vector<8x8xf32>
    %cst_83 = arith.constant dense<0.000000e+00> : vector<8xf32>
    %244 = vector.multi_reduction <add>, %243, %cst_83 [1] : vector<8x8xf32> to vector<8xf32>
    %245 = vector.shape_cast %244 : vector<8xf32> to vector<8x1xf32>
    %246 = tpu.iota {dimensions = array<i32: 1>} : vector<4x64xi32>
    %247 = tpu.iota {dimensions = array<i32: 0>} : vector<4x64xi32>
    %c16_i32_84 = arith.constant 16 : i32
    %248 = vector.broadcast %c16_i32_84 : i32 to vector<4x64xi32>
    %249 = arith.muli %247, %248 : vector<4x64xi32>
    %250 = arith.cmpi sge, %246, %249 : vector<4x64xi32>
    %c1_i32_85 = arith.constant 1 : i32
    %251 = vector.broadcast %c1_i32_85 : i32 to vector<4x64xi32>
    %252 = arith.addi %247, %251 : vector<4x64xi32>
    %c16_i32_86 = arith.constant 16 : i32
    %253 = vector.broadcast %c16_i32_86 : i32 to vector<4x64xi32>
    %254 = arith.muli %252, %253 : vector<4x64xi32>
    %255 = arith.cmpi slt, %246, %254 : vector<4x64xi32>
    %256 = arith.andi %250, %255 : vector<4x64xi1>
    %cst_87 = arith.constant 1.000000e+00 : f32
    %cst_88 = arith.constant 0.000000e+00 : f32
    %257 = vector.broadcast %cst_87 : f32 to vector<4x64xf32>
    %258 = vector.broadcast %cst_88 : f32 to vector<4x64xf32>
    %259 = arith.select %256, %257, %258 : vector<4x64xi1>, vector<4x64xf32>
    %260 = vector.broadcast %228 : vector<1x128xf32> to vector<8x128xf32>
    %261 = arith.mulf %54, %260 : vector<8x128xf32>
    %c0_89 = arith.constant 0 : index
    %c0_90 = arith.constant 0 : index
    %262 = vector.load %arg12[%c0_89, %c0_90] : memref<128x64xf32, #tpu.memory_space<vmem>>, vector<128x64xf32>
    %cst_91 = arith.constant dense<0.000000e+00> : vector<8x64xf32>
    %263 = tpu.matmul %261, %262, %cst_91 {dimension_numbers = #tpu.dot_dimension_numbers<[1], [0], [0], [1], [0, 0, 1, 1], [], []>} : vector<8x128xf32>, vector<128x64xf32>, vector<8x64xf32> -> vector<8x64xf32>
    %c0_92 = arith.constant 0 : index
    %c0_93 = arith.constant 0 : index
    %264 = vector.load %arg13[%c0_92, %c0_93] : memref<8x64xf32, #tpu.memory_space<vmem>>, vector<8x64xf32>
    %265 = arith.addf %263, %264 : vector<8x64xf32>
    %c0_94 = arith.constant 0 : index
    %c0_95 = arith.constant 0 : index
    %266 = vector.load %arg14[%c0_94, %c0_95] : memref<8x4xf32, #tpu.memory_space<vmem>>, vector<8x4xf32>
    %c0_96 = arith.constant 0 : index
    %c0_97 = arith.constant 0 : index
    %267 = vector.load %arg15[%c0_96, %c0_97] : memref<8x4xf32, #tpu.memory_space<vmem>>, vector<8x4xf32>
    %cst_98 = arith.constant 2.500000e-01 : f32
    %268 = vector.broadcast %cst_98 : f32 to vector<8x4xf32>
    %269 = vector.broadcast %245 : vector<8x1xf32> to vector<8x4xf32>
    %270 = arith.mulf %269, %268 : vector<8x4xf32>
    %271 = vector.broadcast %245 : vector<8x1xf32> to vector<8x4xf32>
    %272 = arith.subf %271, %270 : vector<8x4xf32>
    %273 = arith.mulf %266, %270 : vector<8x4xf32>
    %cst_99 = arith.constant dense<0.000000e+00> : vector<4xf32>
    %274 = vector.multi_reduction <add>, %273, %cst_99 [0] : vector<8x4xf32> to vector<4xf32>
    %275 = vector.shape_cast %274 : vector<4xf32> to vector<1x4xf32>
    %276 = arith.mulf %267, %272 : vector<8x4xf32>
    %cst_100 = arith.constant dense<0.000000e+00> : vector<4xf32>
    %277 = vector.multi_reduction <add>, %276, %cst_100 [0] : vector<8x4xf32> to vector<4xf32>
    %278 = vector.shape_cast %277 : vector<4xf32> to vector<1x4xf32>
    %279 = arith.subf %275, %278 : vector<1x4xf32>
    %cst_101 = arith.constant dense<0.000000e+00> : vector<4xf32>
    %280 = vector.multi_reduction <add>, %270, %cst_101 [0] : vector<8x4xf32> to vector<4xf32>
    %281 = vector.shape_cast %280 : vector<4xf32> to vector<1x4xf32>
    %cst_102 = arith.constant 9.99999974E-6 : f32
    %282 = vector.broadcast %cst_102 : f32 to vector<1x4xf32>
    %283 = arith.addf %281, %282 : vector<1x4xf32>
    %284 = tpu.reciprocal %283 {approx = true} : vector<1x4xf32> -> vector<1x4xf32>
    %285 = vector.broadcast %284 : vector<1x4xf32> to vector<8x4xf32>
    %286 = arith.mulf %270, %285 : vector<8x4xf32>
    %cst_103 = arith.constant dense<0.000000e+00> : vector<8x64xf32>
    %287 = tpu.matmul %286, %259, %cst_103 {dimension_numbers = #tpu.dot_dimension_numbers<[1], [0], [0], [1], [0, 0, 1, 1], [], []>} : vector<8x4xf32>, vector<4x64xf32>, vector<8x64xf32> -> vector<8x64xf32>
    %288 = arith.mulf %287, %265 : vector<8x64xf32>
    %cst_104 = arith.constant dense<0.000000e+00> : vector<64xf32>
    %289 = vector.multi_reduction <add>, %288, %cst_104 [0] : vector<8x64xf32> to vector<64xf32>
    %290 = vector.shape_cast %289 : vector<64xf32> to vector<1x64xf32>
    %291 = vector.broadcast %290 : vector<1x64xf32> to vector<8x64xf32>
    %292 = arith.subf %265, %291 : vector<8x64xf32>
    %293 = arith.mulf %292, %292 : vector<8x64xf32>
    %294 = arith.mulf %287, %293 : vector<8x64xf32>
    %cst_105 = arith.constant dense<0.000000e+00> : vector<64xf32>
    %295 = vector.multi_reduction <add>, %294, %cst_105 [0] : vector<8x64xf32> to vector<64xf32>
    %296 = vector.shape_cast %295 : vector<64xf32> to vector<1x64xf32>
    %cst_106 = arith.constant 9.99999974E-6 : f32
    %297 = vector.broadcast %cst_106 : f32 to vector<1x64xf32>
    %298 = arith.addf %296, %297 : vector<1x64xf32>
    %299 = tpu.reciprocal %298 {approx = true} : vector<1x64xf32> -> vector<1x64xf32>
    %cst_107 = arith.constant 5.000000e-01 : f32
    %300 = vector.broadcast %cst_107 : f32 to vector<1x64xf32>
    %301 = arith.mulf %300, %299 : vector<1x64xf32>
    %302 = vector.broadcast %301 : vector<1x64xf32> to vector<8x64xf32>
    %303 = arith.mulf %293, %302 : vector<8x64xf32>
    %304 = math.log %298 : vector<1x64xf32>
    %cst_108 = arith.constant 5.000000e-01 : f32
    %305 = vector.broadcast %cst_108 : f32 to vector<1x64xf32>
    %306 = arith.mulf %305, %304 : vector<1x64xf32>
    %307 = vector.broadcast %306 : vector<1x64xf32> to vector<8x64xf32>
    %308 = arith.addf %303, %307 : vector<8x64xf32>
    %cst_109 = arith.constant dense<0.000000e+00> : vector<8x4xf32>
    %309 = tpu.matmul %308, %259, %cst_109 {dimension_numbers = #tpu.dot_dimension_numbers<[1], [1], [0], [0], [0, 0, 1, 0], [], []>} : vector<8x64xf32>, vector<4x64xf32>, vector<8x4xf32> -> vector<8x4xf32>
    %cst_110 = arith.constant 0.000000e+00 : f32
    %310 = vector.broadcast %cst_110 : f32 to vector<1x4xf32>
    %311 = arith.cmpf oge, %279, %310 : vector<1x4xf32>
    %cst_111 = arith.constant 0.000000e+00 : f32
    %312 = vector.broadcast %cst_111 : f32 to vector<1x4xf32>
    %313 = arith.subf %312, %279 : vector<1x4xf32>
    %314 = math.exp %313 : vector<1x4xf32>
    %cst_112 = arith.constant 1.000000e+00 : f32
    %315 = vector.broadcast %cst_112 : f32 to vector<1x4xf32>
    %316 = arith.addf %315, %314 : vector<1x4xf32>
    %317 = math.log %316 : vector<1x4xf32>
    %cst_113 = arith.constant 0.000000e+00 : f32
    %318 = vector.broadcast %cst_113 : f32 to vector<1x4xf32>
    %319 = arith.subf %318, %317 : vector<1x4xf32>
    %320 = math.exp %279 : vector<1x4xf32>
    %cst_114 = arith.constant 1.000000e+00 : f32
    %321 = vector.broadcast %cst_114 : f32 to vector<1x4xf32>
    %322 = arith.addf %321, %320 : vector<1x4xf32>
    %323 = math.log %322 : vector<1x4xf32>
    %324 = arith.subf %279, %323 : vector<1x4xf32>
    %325 = arith.select %311, %319, %324 : vector<1x4xi1>, vector<1x4xf32>
    %326 = vector.broadcast %325 : vector<1x4xf32> to vector<8x4xf32>
    %327 = arith.subf %326, %309 : vector<8x4xf32>
    %cst_115 = arith.constant dense<0xFF800000> : vector<8xf32>
    %328 = vector.multi_reduction <maximumf>, %327, %cst_115 [1] : vector<8x4xf32> to vector<8xf32>
    %329 = vector.shape_cast %328 : vector<8xf32> to vector<8x1xf32>
    %330 = vector.broadcast %329 : vector<8x1xf32> to vector<8x4xf32>
    %331 = arith.subf %327, %330 : vector<8x4xf32>
    %332 = math.exp %331 : vector<8x4xf32>
    %cst_116 = arith.constant dense<0.000000e+00> : vector<8xf32>
    %333 = vector.multi_reduction <add>, %332, %cst_116 [1] : vector<8x4xf32> to vector<8xf32>
    %334 = vector.shape_cast %333 : vector<8xf32> to vector<8x1xf32>
    %335 = vector.broadcast %334 : vector<8x1xf32> to vector<8x4xf32>
    %336 = arith.divf %332, %335 : vector<8x4xf32>
    %337 = vector.broadcast %245 : vector<8x1xf32> to vector<8x4xf32>
    %338 = arith.mulf %337, %336 : vector<8x4xf32>
    %339 = vector.broadcast %245 : vector<8x1xf32> to vector<8x4xf32>
    %340 = arith.subf %339, %338 : vector<8x4xf32>
    %341 = arith.mulf %266, %338 : vector<8x4xf32>
    %cst_117 = arith.constant dense<0.000000e+00> : vector<4xf32>
    %342 = vector.multi_reduction <add>, %341, %cst_117 [0] : vector<8x4xf32> to vector<4xf32>
    %343 = vector.shape_cast %342 : vector<4xf32> to vector<1x4xf32>
    %344 = arith.mulf %267, %340 : vector<8x4xf32>
    %cst_118 = arith.constant dense<0.000000e+00> : vector<4xf32>
    %345 = vector.multi_reduction <add>, %344, %cst_118 [0] : vector<8x4xf32> to vector<4xf32>
    %346 = vector.shape_cast %345 : vector<4xf32> to vector<1x4xf32>
    %347 = arith.subf %343, %346 : vector<1x4xf32>
    %cst_119 = arith.constant dense<0.000000e+00> : vector<4xf32>
    %348 = vector.multi_reduction <add>, %338, %cst_119 [0] : vector<8x4xf32> to vector<4xf32>
    %349 = vector.shape_cast %348 : vector<4xf32> to vector<1x4xf32>
    %cst_120 = arith.constant 9.99999974E-6 : f32
    %350 = vector.broadcast %cst_120 : f32 to vector<1x4xf32>
    %351 = arith.addf %349, %350 : vector<1x4xf32>
    %352 = tpu.reciprocal %351 {approx = true} : vector<1x4xf32> -> vector<1x4xf32>
    %353 = vector.broadcast %352 : vector<1x4xf32> to vector<8x4xf32>
    %354 = arith.mulf %338, %353 : vector<8x4xf32>
    %cst_121 = arith.constant dense<0.000000e+00> : vector<8x64xf32>
    %355 = tpu.matmul %354, %259, %cst_121 {dimension_numbers = #tpu.dot_dimension_numbers<[1], [0], [0], [1], [0, 0, 1, 1], [], []>} : vector<8x4xf32>, vector<4x64xf32>, vector<8x64xf32> -> vector<8x64xf32>
    %356 = arith.mulf %355, %265 : vector<8x64xf32>
    %cst_122 = arith.constant dense<0.000000e+00> : vector<64xf32>
    %357 = vector.multi_reduction <add>, %356, %cst_122 [0] : vector<8x64xf32> to vector<64xf32>
    %358 = vector.shape_cast %357 : vector<64xf32> to vector<1x64xf32>
    %359 = vector.broadcast %358 : vector<1x64xf32> to vector<8x64xf32>
    %360 = arith.subf %265, %359 : vector<8x64xf32>
    %361 = arith.mulf %360, %360 : vector<8x64xf32>
    %362 = arith.mulf %355, %361 : vector<8x64xf32>
    %cst_123 = arith.constant dense<0.000000e+00> : vector<64xf32>
    %363 = vector.multi_reduction <add>, %362, %cst_123 [0] : vector<8x64xf32> to vector<64xf32>
    %364 = vector.shape_cast %363 : vector<64xf32> to vector<1x64xf32>
    %cst_124 = arith.constant 9.99999974E-6 : f32
    %365 = vector.broadcast %cst_124 : f32 to vector<1x64xf32>
    %366 = arith.addf %364, %365 : vector<1x64xf32>
    %367 = tpu.reciprocal %366 {approx = true} : vector<1x64xf32> -> vector<1x64xf32>
    %cst_125 = arith.constant 5.000000e-01 : f32
    %368 = vector.broadcast %cst_125 : f32 to vector<1x64xf32>
    %369 = arith.mulf %368, %367 : vector<1x64xf32>
    %370 = vector.broadcast %369 : vector<1x64xf32> to vector<8x64xf32>
    %371 = arith.mulf %361, %370 : vector<8x64xf32>
    %372 = math.log %366 : vector<1x64xf32>
    %cst_126 = arith.constant 5.000000e-01 : f32
    %373 = vector.broadcast %cst_126 : f32 to vector<1x64xf32>
    %374 = arith.mulf %373, %372 : vector<1x64xf32>
    %375 = vector.broadcast %374 : vector<1x64xf32> to vector<8x64xf32>
    %376 = arith.addf %371, %375 : vector<8x64xf32>
    %cst_127 = arith.constant dense<0.000000e+00> : vector<8x4xf32>
    %377 = tpu.matmul %376, %259, %cst_127 {dimension_numbers = #tpu.dot_dimension_numbers<[1], [1], [0], [0], [0, 0, 1, 0], [], []>} : vector<8x64xf32>, vector<4x64xf32>, vector<8x4xf32> -> vector<8x4xf32>
    %cst_128 = arith.constant 0.000000e+00 : f32
    %378 = vector.broadcast %cst_128 : f32 to vector<1x4xf32>
    %379 = arith.cmpf oge, %347, %378 : vector<1x4xf32>
    %cst_129 = arith.constant 0.000000e+00 : f32
    %380 = vector.broadcast %cst_129 : f32 to vector<1x4xf32>
    %381 = arith.subf %380, %347 : vector<1x4xf32>
    %382 = math.exp %381 : vector<1x4xf32>
    %cst_130 = arith.constant 1.000000e+00 : f32
    %383 = vector.broadcast %cst_130 : f32 to vector<1x4xf32>
    %384 = arith.addf %383, %382 : vector<1x4xf32>
    %385 = math.log %384 : vector<1x4xf32>
    %cst_131 = arith.constant 0.000000e+00 : f32
    %386 = vector.broadcast %cst_131 : f32 to vector<1x4xf32>
    %387 = arith.subf %386, %385 : vector<1x4xf32>
    %388 = math.exp %347 : vector<1x4xf32>
    %cst_132 = arith.constant 1.000000e+00 : f32
    %389 = vector.broadcast %cst_132 : f32 to vector<1x4xf32>
    %390 = arith.addf %389, %388 : vector<1x4xf32>
    %391 = math.log %390 : vector<1x4xf32>
    %392 = arith.subf %347, %391 : vector<1x4xf32>
    %393 = arith.select %379, %387, %392 : vector<1x4xi1>, vector<1x4xf32>
    %394 = vector.broadcast %393 : vector<1x4xf32> to vector<8x4xf32>
    %395 = arith.subf %394, %377 : vector<8x4xf32>
    %cst_133 = arith.constant dense<0xFF800000> : vector<8xf32>
    %396 = vector.multi_reduction <maximumf>, %395, %cst_133 [1] : vector<8x4xf32> to vector<8xf32>
    %397 = vector.shape_cast %396 : vector<8xf32> to vector<8x1xf32>
    %398 = vector.broadcast %397 : vector<8x1xf32> to vector<8x4xf32>
    %399 = arith.subf %395, %398 : vector<8x4xf32>
    %400 = math.exp %399 : vector<8x4xf32>
    %cst_134 = arith.constant dense<0.000000e+00> : vector<8xf32>
    %401 = vector.multi_reduction <add>, %400, %cst_134 [1] : vector<8x4xf32> to vector<8xf32>
    %402 = vector.shape_cast %401 : vector<8xf32> to vector<8x1xf32>
    %403 = vector.broadcast %402 : vector<8x1xf32> to vector<8x4xf32>
    %404 = arith.divf %400, %403 : vector<8x4xf32>
    %405 = vector.broadcast %245 : vector<8x1xf32> to vector<8x4xf32>
    %406 = arith.mulf %405, %404 : vector<8x4xf32>
    %407 = vector.broadcast %245 : vector<8x1xf32> to vector<8x4xf32>
    %408 = arith.subf %407, %406 : vector<8x4xf32>
    %409 = arith.mulf %266, %406 : vector<8x4xf32>
    %cst_135 = arith.constant dense<0.000000e+00> : vector<4xf32>
    %410 = vector.multi_reduction <add>, %409, %cst_135 [0] : vector<8x4xf32> to vector<4xf32>
    %411 = vector.shape_cast %410 : vector<4xf32> to vector<1x4xf32>
    %412 = arith.mulf %267, %408 : vector<8x4xf32>
    %cst_136 = arith.constant dense<0.000000e+00> : vector<4xf32>
    %413 = vector.multi_reduction <add>, %412, %cst_136 [0] : vector<8x4xf32> to vector<4xf32>
    %414 = vector.shape_cast %413 : vector<4xf32> to vector<1x4xf32>
    %415 = arith.subf %411, %414 : vector<1x4xf32>
    %cst_137 = arith.constant dense<0.000000e+00> : vector<4xf32>
    %416 = vector.multi_reduction <add>, %406, %cst_137 [0] : vector<8x4xf32> to vector<4xf32>
    %417 = vector.shape_cast %416 : vector<4xf32> to vector<1x4xf32>
    %cst_138 = arith.constant 9.99999974E-6 : f32
    %418 = vector.broadcast %cst_138 : f32 to vector<1x4xf32>
    %419 = arith.addf %417, %418 : vector<1x4xf32>
    %420 = tpu.reciprocal %419 {approx = true} : vector<1x4xf32> -> vector<1x4xf32>
    %421 = vector.broadcast %420 : vector<1x4xf32> to vector<8x4xf32>
    %422 = arith.mulf %406, %421 : vector<8x4xf32>
    %cst_139 = arith.constant dense<0.000000e+00> : vector<8x64xf32>
    %423 = tpu.matmul %422, %259, %cst_139 {dimension_numbers = #tpu.dot_dimension_numbers<[1], [0], [0], [1], [0, 0, 1, 1], [], []>} : vector<8x4xf32>, vector<4x64xf32>, vector<8x64xf32> -> vector<8x64xf32>
    %424 = arith.mulf %423, %265 : vector<8x64xf32>
    %cst_140 = arith.constant dense<0.000000e+00> : vector<64xf32>
    %425 = vector.multi_reduction <add>, %424, %cst_140 [0] : vector<8x64xf32> to vector<64xf32>
    %426 = vector.shape_cast %425 : vector<64xf32> to vector<1x64xf32>
    %427 = vector.broadcast %426 : vector<1x64xf32> to vector<8x64xf32>
    %428 = arith.subf %265, %427 : vector<8x64xf32>
    %429 = arith.mulf %428, %428 : vector<8x64xf32>
    %430 = arith.mulf %423, %429 : vector<8x64xf32>
    %cst_141 = arith.constant dense<0.000000e+00> : vector<64xf32>
    %431 = vector.multi_reduction <add>, %430, %cst_141 [0] : vector<8x64xf32> to vector<64xf32>
    %432 = vector.shape_cast %431 : vector<64xf32> to vector<1x64xf32>
    %cst_142 = arith.constant 9.99999974E-6 : f32
    %433 = vector.broadcast %cst_142 : f32 to vector<1x64xf32>
    %434 = arith.addf %432, %433 : vector<1x64xf32>
    %c0_143 = arith.constant 0 : index
    %c0_144 = arith.constant 0 : index
    %c0_145 = arith.constant 0 : index
    %435 = vector.load %arg16[%c0_143, %c0_144, %c0_145] : memref<1x1x4xf32, #tpu.memory_space<vmem>>, vector<1x1x4xf32>
    %436 = vector.shape_cast %435 : vector<1x1x4xf32> to vector<1x4xf32>
    %437 = vector.shape_cast %415 : vector<1x4xf32> to vector<1x1x4xf32>
    tpu.vector_store %arg16[%c0_143, %c0_144, %c0_145], %437 {strides = array<i32>} : memref<1x1x4xf32, #tpu.memory_space<vmem>>, vector<1x1x4xf32>,
    %c0_146 = arith.constant 0 : index
    %c0_147 = arith.constant 0 : index
    %c0_148 = arith.constant 0 : index
    %438 = vector.load %arg17[%c0_146, %c0_147, %c0_148] : memref<1x1x64xf32, #tpu.memory_space<vmem>>, vector<1x1x64xf32>
    %439 = vector.shape_cast %438 : vector<1x1x64xf32> to vector<1x64xf32>
    %440 = vector.shape_cast %426 : vector<1x64xf32> to vector<1x1x64xf32>
    tpu.vector_store %arg17[%c0_146, %c0_147, %c0_148], %440 {strides = array<i32>} : memref<1x1x64xf32, #tpu.memory_space<vmem>>, vector<1x1x64xf32>,
    %c0_149 = arith.constant 0 : index
    %c0_150 = arith.constant 0 : index
    %c0_151 = arith.constant 0 : index
    %441 = vector.load %arg18[%c0_149, %c0_150, %c0_151] : memref<1x1x64xf32, #tpu.memory_space<vmem>>, vector<1x1x64xf32>
    %442 = vector.shape_cast %441 : vector<1x1x64xf32> to vector<1x64xf32>
    %443 = vector.shape_cast %434 : vector<1x64xf32> to vector<1x1x64xf32>
    tpu.vector_store %arg18[%c0_149, %c0_150, %c0_151], %443 {strides = array<i32>} : memref<1x1x64xf32, #tpu.memory_space<vmem>>, vector<1x1x64xf32>,
    return
  }
  func.func @transform_0(%arg0: i32) -> (i32, i32, i32) {
    %c0_i32 = arith.constant 0 : i32
    %c0_i32_0 = arith.constant 0 : i32
    %c0_i32_1 = arith.constant 0 : i32
    return %arg0, %c0_i32, %c0_i32_0 : i32, i32, i32
  }
  func.func @transform_1(%arg0: i32) -> (i32, i32) {
    %c0_i32 = arith.constant 0 : i32
    %c0_i32_0 = arith.constant 0 : i32
    %c0_i32_1 = arith.constant 0 : i32
    return %c0_i32, %c0_i32_0 : i32, i32
  }
  func.func @transform_2(%arg0: i32) -> (i32, i32, i32) {
    %c0_i32 = arith.constant 0 : i32
    %c0_i32_0 = arith.constant 0 : i32
    %c0_i32_1 = arith.constant 0 : i32
    return %arg0, %c0_i32, %c0_i32_0 : i32, i32, i32
  }
  func.func @transform_3(%arg0: i32) -> (i32, i32) {
    %c0_i32 = arith.constant 0 : i32
    %c0_i32_0 = arith.constant 0 : i32
    %c0_i32_1 = arith.constant 0 : i32
    return %c0_i32, %c0_i32_0 : i32, i32
  }
  func.func @transform_4(%arg0: i32) -> (i32, i32) {
    %c0_i32 = arith.constant 0 : i32
    %c0_i32_0 = arith.constant 0 : i32
    %c0_i32_1 = arith.constant 0 : i32
    return %c0_i32, %c0_i32_0 : i32, i32
  }
  func.func @transform_5(%arg0: i32) -> (i32, i32) {
    %c0_i32 = arith.constant 0 : i32
    %c0_i32_0 = arith.constant 0 : i32
    %c0_i32_1 = arith.constant 0 : i32
    return %c0_i32, %c0_i32_0 : i32, i32
  }
  func.func @transform_6(%arg0: i32) -> (i32, i32) {
    %c0_i32 = arith.constant 0 : i32
    %c0_i32_0 = arith.constant 0 : i32
    %c0_i32_1 = arith.constant 0 : i32
    return %c0_i32, %c0_i32_0 : i32, i32
  }
  func.func @transform_7(%arg0: i32) -> (i32, i32) {
    %c0_i32 = arith.constant 0 : i32
    %c0_i32_0 = arith.constant 0 : i32
    %c0_i32_1 = arith.constant 0 : i32
    return %c0_i32, %c0_i32_0 : i32, i32
  }
  func.func @transform_8(%arg0: i32) -> (i32, i32) {
    %c0_i32 = arith.constant 0 : i32
    %c0_i32_0 = arith.constant 0 : i32
    %c0_i32_1 = arith.constant 0 : i32
    return %c0_i32, %c0_i32_0 : i32, i32
  }
  func.func @transform_9(%arg0: i32) -> (i32, i32) {
    %c0_i32 = arith.constant 0 : i32
    %c0_i32_0 = arith.constant 0 : i32
    %c0_i32_1 = arith.constant 0 : i32
    return %c0_i32, %c0_i32_0 : i32, i32
  }
  func.func @transform_10(%arg0: i32) -> (i32, i32) {
    %c0_i32 = arith.constant 0 : i32
    %c0_i32_0 = arith.constant 0 : i32
    %c0_i32_1 = arith.constant 0 : i32
    return %c0_i32, %c0_i32_0 : i32, i32
  }
  func.func @transform_11(%arg0: i32) -> (i32, i32) {
    %c0_i32 = arith.constant 0 : i32
    %c0_i32_0 = arith.constant 0 : i32
    %c0_i32_1 = arith.constant 0 : i32
    return %c0_i32, %c0_i32_0 : i32, i32
  }
  func.func @transform_12(%arg0: i32) -> (i32, i32) {
    %c0_i32 = arith.constant 0 : i32
    %c0_i32_0 = arith.constant 0 : i32
    %c0_i32_1 = arith.constant 0 : i32
    return %c0_i32, %c0_i32_0 : i32, i32
  }
  func.func @transform_13(%arg0: i32) -> (i32, i32) {
    %c0_i32 = arith.constant 0 : i32
    %c0_i32_0 = arith.constant 0 : i32
    %c0_i32_1 = arith.constant 0 : i32
    return %c0_i32, %c0_i32_0 : i32, i32
  }
  func.func @transform_14(%arg0: i32) -> (i32, i32) {
    %c0_i32 = arith.constant 0 : i32
    %c0_i32_0 = arith.constant 0 : i32
    %c0_i32_1 = arith.constant 0 : i32
    return %c0_i32, %c0_i32_0 : i32, i32
  }
  func.func @transform_15(%arg0: i32) -> (i32, i32, i32) {
    %c0_i32 = arith.constant 0 : i32
    %c0_i32_0 = arith.constant 0 : i32
    %c0_i32_1 = arith.constant 0 : i32
    return %arg0, %c0_i32, %c0_i32_0 : i32, i32, i32
  }
  func.func @transform_16(%arg0: i32) -> (i32, i32, i32) {
    %c0_i32 = arith.constant 0 : i32
    %c0_i32_0 = arith.constant 0 : i32
    %c0_i32_1 = arith.constant 0 : i32
    return %arg0, %c0_i32, %c0_i32_0 : i32, i32, i32
  }
  func.func @transform_17(%arg0: i32) -> (i32, i32, i32) {
    %c0_i32 = arith.constant 0 : i32
    %c0_i32_0 = arith.constant 0 : i32
    %c0_i32_1 = arith.constant 0 : i32
    return %arg0, %c0_i32, %c0_i32_0 : i32, i32, i32
  }
}

</mosaic_0001>

<llo_original>
// kernel: tile.9
$region0: #{tile.9}
  %s0 = inlined_call_operand.vmem [shape: f32[6,2,16], index: 0, kind: input, shape index: {}]
  %s1 = inlined_call_operand.vmem [shape: f32[12,16], index: 1, kind: output, shape index: {}]
  $region1: #{tile.9} parent=0
    #allocation0 [shape = 'u8[24576]{0}', space=vmem, size = 0x6000, scoped, tag = 'scoped mem for input reshape']
    %s3 = sshllo.u32 0, 2
    %s4 = smul.addr 2, 5
    %s5 = scalar_lea.vmem %s0, %s4
    %v6 = vld [vmem:[%s5] sm:%s3]
    %s7 = scalar_lea.vmem [#allocation0], 40
    %8 = vst [vmem:[%s7] sm:%s3] %v6
    %s9 = smul.addr 2, 4
    %s10 = scalar_lea.vmem %s0, %s9
    %v11 = vld [vmem:[%s10] sm:%s3]
    %s12 = scalar_lea.vmem [#allocation0], 32
    %13 = vst [vmem:[%s12] sm:%s3] %v11
    %s14 = smul.addr 2, 3
    %s15 = scalar_lea.vmem %s0, %s14
    %v16 = vld [vmem:[%s15] sm:%s3]
    %s17 = scalar_lea.vmem [#allocation0], 24
    %18 = vst [vmem:[%s17] sm:%s3] %v16
    %s19 = smul.addr 2, 2
    %s20 = scalar_lea.vmem %s0, %s19
    %v21 = vld [vmem:[%s20] sm:%s3]
    %s22 = scalar_lea.vmem [#allocation0], 16
    %23 = vst [vmem:[%s22] sm:%s3] %v21
    %s24 = scalar_lea.vmem %s0, 2
    %v25 = vld [vmem:[%s24] sm:%s3]
    %s26 = scalar_lea.vmem [#allocation0], 8
    %27 = vst [vmem:[%s26] sm:%s3] %v25
    %v28 = vld [vmem:[%s0] sm:%s3]
    %29 = vst [vmem:[#allocation0] sm:%s3] %v28
    %v30 = vld [vmem:[#allocation0] sm:$0x3]
    %vm31 = vcmask 130048
    %32 = vst.msk [vmem:[%s1] sm:$0x3] %vm31, %v30
    %s33 = scalar_lea.vmem [#allocation0], 8
    %v34 = vld [vmem:[%s33] sm:$0x3]
    %vm35 = vcmask 130048
    %s36 = scalar_lea.vmem %s1, 2
    %37 = vst.msk [vmem:[%s36] sm:$0x3] %vm35, %v34
    %s38 = scalar_lea.vmem [#allocation0], 16
    %v39 = vld [vmem:[%s38] sm:$0x3]
    %vm40 = vcmask 130048
    %s41 = scalar_lea.vmem %s1, 4
    %42 = vst.msk [vmem:[%s41] sm:$0x3] %vm40, %v39
    %s43 = scalar_lea.vmem [#allocation0], 24
    %v44 = vld [vmem:[%s43] sm:$0x3]
    %vm45 = vcmask 130048
    %s46 = scalar_lea.vmem %s1, 6
    %47 = vst.msk [vmem:[%s46] sm:$0x3] %vm45, %v44
    %s48 = scalar_lea.vmem [#allocation0], 32
    %v49 = vld [vmem:[%s48] sm:$0x3]
    %vm50 = vcmask 130048
    %s51 = scalar_lea.vmem %s1, 8
    %52 = vst.msk [vmem:[%s51] sm:$0x3] %vm50, %v49
    %s53 = scalar_lea.vmem [#allocation0], 40
    %v54 = vld [vmem:[%s53] sm:$0x3]
    %vm55 = vcmask 130048
    %s56 = scalar_lea.vmem %s1, 10
    %57 = vst.msk [vmem:[%s56] sm:$0x3] %vm55, %v54

// kernel: sst_classifier_forward.1
$region0: #{sst_classifier_forward.1}
  #allocation0 [shape = 'u32[]', space=smem, size = 0x4, offset = 0x4, fixed_abs, tag = 'smem constant byte address 0x4 - core index']
  #allocation1 [shape = 'u32[144,128]{1,0:T(1,128)}', space=vmem, size = 0x12000, scoped, tag = 'internal scratch']
  %s0 = inlined_call_operand.vmem [shape: f32[2,12,16], index: 0, kind: input, shape index: {}]
  %s1 = inlined_call_operand.vmem [shape: f32[12,16], index: 1, kind: input, shape index: {}]
  %s2 = inlined_call_operand.vmem [shape: f32[2,12,1], index: 2, kind: input, shape index: {}]
  %s3 = inlined_call_operand.vmem [shape: f32[16,32], index: 3, kind: input, shape index: {}]
  %s4 = inlined_call_operand.vmem [shape: f32[1,32], index: 4, kind: input, shape index: {}]
  %s5 = inlined_call_operand.vmem [shape: f32[1,32], index: 5, kind: input, shape index: {}]
  %s6 = inlined_call_operand.vmem [shape: f32[1,32], index: 6, kind: input, shape index: {}]
  %s7 = inlined_call_operand.vmem [shape: f32[32,128], index: 7, kind: input, shape index: {}]
  %s8 = inlined_call_operand.vmem [shape: f32[1,128], index: 8, kind: input, shape index: {}]
  %s9 = inlined_call_operand.vmem [shape: f32[1,8], index: 9, kind: input, shape index: {}]
  %s10 = inlined_call_operand.vmem [shape: f32[1,8], index: 10, kind: input, shape index: {}]
  %s11 = inlined_call_operand.vmem [shape: f32[128,64], index: 11, kind: input, shape index: {}]
  %s12 = inlined_call_operand.vmem [shape: f32[8,64], index: 12, kind: input, shape index: {}]
  %s13 = inlined_call_operand.vmem [shape: f32[8,4], index: 13, kind: input, shape index: {}]
  %s14 = inlined_call_operand.vmem [shape: f32[8,4], index: 14, kind: input, shape index: {}]
  %s15 = inlined_call_operand.hbm [shape: f32[2,1,4], index: 15, kind: output, shape index: {0}]
  %s16 = inlined_call_operand.vmem [shape: f32[2,1,64], index: 16, kind: output, shape index: {1}]
  %s17 = inlined_call_operand.vmem [shape: f32[2,1,64], index: 17, kind: output, shape index: {2}]
  %18 = xla_tuple %s15, %s16, %s17
  %s19 = sld [smem:[#allocation0]]
  $region109: #{sst_classifier_forward.1} parent=0
    _
  %s21 = ssub.s32 1, %s19
  %s22 = scalar_select 0, %s21, %s19
  $region1: #{sst_classifier_forward.1} parent=0
    #allocation2 [shape = 'u8[1024]{0}', space=vmem, size = 0x400, scoped, tag = 'output window, operand 0']
    #allocation3 [shape = 's32[2]{0}', space=sflag, size = 0x8, scoped, tag = 'scoped memory for sst_classifier_forward.1']
    %23 = vsyncpa [#allocation3], 0
    %s24 = scalar_lea.sflag [#allocation3], 1
    %25 = vsyncpa %s24, 0
    loop: start=0, step=1, limit=4
    $region2: #{sst_classifier_forward.1} parent=1 // loop_pre_header
      _
    $region3: #{sst_classifier_forward.1} parent=1 // loop_header
      %s27 = sphi 0, %s31
      %p28 = scmp.ge.s32.totalorder %s27, 4
      %s37 = sphi 0, %s39
      %s40 = sphi 0, %s37
      %s41 = sphi 0, %s40
      %s57 = sphi 0, %s41
      %s61 = sphi 0, %s61
      %s63 = sphi 0, %s61
      %s64 = sphi 0, %s63
      %s78 = sphi 0, %s64
      %s84 = sphi 0, %s86
      %s87 = sphi 0, %s84
      %s88 = sphi 0, %s87
      %s104 = sphi 0, %s88
      %s108 = sphi 0, %s108
      %s110 = sphi 0, %s108
      %s111 = sphi 0, %s110
      %s125 = sphi 0, %s111
      %s129 = sphi 0, %s129
      %s131 = sphi 0, %s129
      %s132 = sphi 0, %s131
      %s146 = sphi 0, %s132
      %s150 = sphi 0, %s150
      %s152 = sphi 0, %s150
      %s153 = sphi 0, %s152
      %s167 = sphi 0, %s153
      %s171 = sphi 0, %s171
      %s173 = sphi 0, %s171
      %s174 = sphi 0, %s173
      %s188 = sphi 0, %s174
      %s192 = sphi 0, %s192
      %s194 = sphi 0, %s192
      %s195 = sphi 0, %s194
      %s209 = sphi 0, %s195
      %s213 = sphi 0, %s213
      %s215 = sphi 0, %s213
      %s216 = sphi 0, %s215
      %s230 = sphi 0, %s216
      %s234 = sphi 0, %s234
      %s236 = sphi 0, %s234
      %s237 = sphi 0, %s236
      %s251 = sphi 0, %s237
      %s255 = sphi 0, %s255
      %s257 = sphi 0, %s255
      %s258 = sphi 0, %s257
      %s272 = sphi 0, %s258
      %s276 = sphi 0, %s276
      %s278 = sphi 0, %s276
      %s279 = sphi 0, %s278
      %s293 = sphi 0, %s279
      %s297 = sphi 0, %s297
      %s299 = sphi 0, %s297
      %s300 = sphi 0, %s299
      %s314 = sphi 0, %s300
      %s318 = sphi 0, %s318
      %s320 = sphi 0, %s318
      %s321 = sphi 0, %s320
      %s335 = sphi 0, %s321
      %s339 = sphi 0, %s339
      %s341 = sphi 0, %s339
      %s342 = sphi 0, %s341
      %s356 = sphi 0, %s342
      %s362 = sphi 0, %s364
      %s365 = sphi 0, %s362
      %s366 = sphi 0, %s365
      %s382 = sphi 0, %s366
      %s388 = sphi 0, %s390
      %s391 = sphi 0, %s388
      %s392 = sphi 0, %s391
      %s408 = sphi 0, %s392
      %s414 = sphi 0, %s416
      %s417 = sphi 0, %s414
      %s418 = sphi 0, %s417
      %s434 = sphi 0, %s418
    $region4: #{sst_classifier_forward.1} parent=1 // loop_header_branch
      %30 = sbr.rel (%p28) target = $region8
    $region5: #{sst_classifier_forward.1} parent=1 // loop_body
      %s32 = ssub.s32 %s27, 1
      %s33 = ssub.s32 %s27, 2
      %s34 = sadd.s32 %s27, 1
      %s35 = ssub.s32 %s27, %s34
      %p36 = scmp.eq.s32.totalorder %s35, 0
      %s38 = sadd.s32 %s37, 1
      %s39 = scalar_select %p36, %s37, %s38
      %p42 = pneg %p36
      %p43 = scmp.eq.s32.totalorder %s27, 1
      %p44 = por %p42, %p43
      %p45 = scmp.ne.s32.totalorder %s37, %s40
      %p46 = scmp.eq.s32.totalorder %s27, 0
      %p47 = por %p45, %p46
      %p48 = scmp.ne.s32.totalorder %s37, %s40
      %p49 = scmp.eq.s32.totalorder %s32, 1
      %p50 = por %p48, %p49
      %p51 = scmp.ne.s32.totalorder %s40, %s41
      %p52 = scmp.eq.s32.totalorder %s32, 0
      %p53 = por %p51, %p52
      %p54 = scmp.ne.s32.totalorder %s40, %s41
      %p55 = scmp.eq.s32.totalorder %s33, 1
      %p56 = por %p54, %p55
      %p58 = scmp.ne.s32.totalorder %s41, %s57
      %p59 = scmp.eq.s32.totalorder %s33, 0
      %p60 = por %p58, %p59
      %s62 = sadd.s32 %s61, 1
      %p65 = scmp.eq.s32.totalorder %s27, 1
      %p66 = scmp.ne.s32.totalorder %s61, %s63
      %p67 = scmp.eq.s32.totalorder %s27, 0
      %p68 = por %p66, %p67
      %p69 = scmp.ne.s32.totalorder %s61, %s63
      %p70 = scmp.eq.s32.totalorder %s32, 1
      %p71 = por %p69, %p70
      %p72 = scmp.ne.s32.totalorder %s63, %s64
      %p73 = scmp.eq.s32.totalorder %s32, 0
      %p74 = por %p72, %p73
      %p75 = scmp.ne.s32.totalorder %s63, %s64
      %p76 = scmp.eq.s32.totalorder %s33, 1
      %p77 = por %p75, %p76
      %p79 = scmp.ne.s32.totalorder %s64, %s78
      %p80 = scmp.eq.s32.totalorder %s33, 0
      %p81 = por %p79, %p80
      %s82 = ssub.s32 %s27, %s34
      %p83 = scmp.eq.s32.totalorder %s82, 0
      %s85 = sadd.s32 %s84, 1
      %s86 = scalar_select %p83, %s84, %s85
      %p89 = pneg %p83
      %p90 = scmp.eq.s32.totalorder %s27, 1
      %p91 = por %p89, %p90
      %p92 = scmp.ne.s32.totalorder %s84, %s87
      %p93 = scmp.eq.s32.totalorder %s27, 0
      %p94 = por %p92, %p93
      %p95 = scmp.ne.s32.totalorder %s84, %s87
      %p96 = scmp.eq.s32.totalorder %s32, 1
      %p97 = por %p95, %p96
      %p98 = scmp.ne.s32.totalorder %s87, %s88
      %p99 = scmp.eq.s32.totalorder %s32, 0
      %p100 = por %p98, %p99
      %p101 = scmp.ne.s32.totalorder %s87, %s88
      %p102 = scmp.eq.s32.totalorder %s33, 1
      %p103 = por %p101, %p102
      %p105 = scmp.ne.s32.totalorder %s88, %s104
      %p106 = scmp.eq.s32.totalorder %s33, 0
      %p107 = por %p105, %p106
      %s109 = sadd.s32 %s108, 1
      %p112 = scmp.eq.s32.totalorder %s27, 1
      %p113 = scmp.ne.s32.totalorder %s108, %s110
      %p114 = scmp.eq.s32.totalorder %s27, 0
      %p115 = por %p113, %p114
      %p116 = scmp.ne.s32.totalorder %s108, %s110
      %p117 = scmp.eq.s32.totalorder %s32, 1
      %p118 = por %p116, %p117
      %p119 = scmp.ne.s32.totalorder %s110, %s111
      %p120 = scmp.eq.s32.totalorder %s32, 0
      %p121 = por %p119, %p120
      %p122 = scmp.ne.s32.totalorder %s110, %s111
      %p123 = scmp.eq.s32.totalorder %s33, 1
      %p124 = por %p122, %p123
      %p126 = scmp.ne.s32.totalorder %s111, %s125
      %p127 = scmp.eq.s32.totalorder %s33, 0
      %p128 = por %p126, %p127
      %s130 = sadd.s32 %s129, 1
      %p133 = scmp.eq.s32.totalorder %s27, 1
      %p134 = scmp.ne.s32.totalorder %s129, %s131
      %p135 = scmp.eq.s32.totalorder %s27, 0
      %p136 = por %p134, %p135
      %p137 = scmp.ne.s32.totalorder %s129, %s131
      %p138 = scmp.eq.s32.totalorder %s32, 1
      %p139 = por %p137, %p138
      %p140 = scmp.ne.s32.totalorder %s131, %s132
      %p141 = scmp.eq.s32.totalorder %s32, 0
      %p142 = por %p140, %p141
      %p143 = scmp.ne.s32.totalorder %s131, %s132
      %p144 = scmp.eq.s32.totalorder %s33, 1
      %p145 = por %p143, %p144
      %p147 = scmp.ne.s32.totalorder %s132, %s146
      %p148 = scmp.eq.s32.totalorder %s33, 0
      %p149 = por %p147, %p148
      %s151 = sadd.s32 %s150, 1
      %p154 = scmp.eq.s32.totalorder %s27, 1
      %p155 = scmp.ne.s32.totalorder %s150, %s152
      %p156 = scmp.eq.s32.totalorder %s27, 0
      %p157 = por %p155, %p156
      %p158 = scmp.ne.s32.totalorder %s150, %s152
      %p159 = scmp.eq.s32.totalorder %s32, 1
      %p160 = por %p158, %p159
      %p161 = scmp.ne.s32.totalorder %s152, %s153
      %p162 = scmp.eq.s32.totalorder %s32, 0
      %p163 = por %p161, %p162
      %p164 = scmp.ne.s32.totalorder %s152, %s153
      %p165 = scmp.eq.s32.totalorder %s33, 1
      %p166 = por %p164, %p165
      %p168 = scmp.ne.s32.totalorder %s153, %s167
      %p169 = scmp.eq.s32.totalorder %s33, 0
      %p170 = por %p168, %p169
      %s172 = sadd.s32 %s171, 1
      %p175 = scmp.eq.s32.totalorder %s27, 1
      %p176 = scmp.ne.s32.totalorder %s171, %s173
      %p177 = scmp.eq.s32.totalorder %s27, 0
      %p178 = por %p176, %p177
      %p179 = scmp.ne.s32.totalorder %s171, %s173
      %p180 = scmp.eq.s32.totalorder %s32, 1
      %p181 = por %p179, %p180
      %p182 = scmp.ne.s32.totalorder %s173, %s174
      %p183 = scmp.eq.s32.totalorder %s32, 0
      %p184 = por %p182, %p183
      %p185 = scmp.ne.s32.totalorder %s173, %s174
      %p186 = scmp.eq.s32.totalorder %s33, 1
      %p187 = por %p185, %p186
      %p189 = scmp.ne.s32.totalorder %s174, %s188
      %p190 = scmp.eq.s32.totalorder %s33, 0
      %p191 = por %p189, %p190
      %s193 = sadd.s32 %s192, 1
      %p196 = scmp.eq.s32.totalorder %s27, 1
      %p197 = scmp.ne.s32.totalorder %s192, %s194
      %p198 = scmp.eq.s32.totalorder %s27, 0
      %p199 = por %p197, %p198
      %p200 = scmp.ne.s32.totalorder %s192, %s194
      %p201 = scmp.eq.s32.totalorder %s32, 1
      %p202 = por %p200, %p201
      %p203 = scmp.ne.s32.totalorder %s194, %s195
      %p204 = scmp.eq.s32.totalorder %s32, 0
      %p205 = por %p203, %p204
      %p206 = scmp.ne.s32.totalorder %s194, %s195
      %p207 = scmp.eq.s32.totalorder %s33, 1
      %p208 = por %p206, %p207
      %p210 = scmp.ne.s32.totalorder %s195, %s209
      %p211 = scmp.eq.s32.totalorder %s33, 0
      %p212 = por %p210, %p211
      %s214 = sadd.s32 %s213, 1
      %p217 = scmp.eq.s32.totalorder %s27, 1
      %p218 = scmp.ne.s32.totalorder %s213, %s215
      %p219 = scmp.eq.s32.totalorder %s27, 0
      %p220 = por %p218, %p219
      %p221 = scmp.ne.s32.totalorder %s213, %s215
      %p222 = scmp.eq.s32.totalorder %s32, 1
      %p223 = por %p221, %p222
      %p224 = scmp.ne.s32.totalorder %s215, %s216
      %p225 = scmp.eq.s32.totalorder %s32, 0
      %p226 = por %p224, %p225
      %p227 = scmp.ne.s32.totalorder %s215, %s216
      %p228 = scmp.eq.s32.totalorder %s33, 1
      %p229 = por %p227, %p228
      %p231 = scmp.ne.s32.totalorder %s216, %s230
      %p232 = scmp.eq.s32.totalorder %s33, 0
      %p233 = por %p231, %p232
      %s235 = sadd.s32 %s234, 1
      %p238 = scmp.eq.s32.totalorder %s27, 1
      %p239 = scmp.ne.s32.totalorder %s234, %s236
      %p240 = scmp.eq.s32.totalorder %s27, 0
      %p241 = por %p239, %p240
      %p242 = scmp.ne.s32.totalorder %s234, %s236
      %p243 = scmp.eq.s32.totalorder %s32, 1
      %p244 = por %p242, %p243
      %p245 = scmp.ne.s32.totalorder %s236, %s237
      %p246 = scmp.eq.s32.totalorder %s32, 0
      %p247 = por %p245, %p246
      %p248 = scmp.ne.s32.totalorder %s236, %s237
      %p249 = scmp.eq.s32.totalorder %s33, 1
      %p250 = por %p248, %p249
      %p252 = scmp.ne.s32.totalorder %s237, %s251
      %p253 = scmp.eq.s32.totalorder %s33, 0
      %p254 = por %p252, %p253
      %s256 = sadd.s32 %s255, 1
      %p259 = scmp.eq.s32.totalorder %s27, 1
      %p260 = scmp.ne.s32.totalorder %s255, %s257
      %p261 = scmp.eq.s32.totalorder %s27, 0
      %p262 = por %p260, %p261
      %p263 = scmp.ne.s32.totalorder %s255, %s257
      %p264 = scmp.eq.s32.totalorder %s32, 1
      %p265 = por %p263, %p264
      %p266 = scmp.ne.s32.totalorder %s257, %s258
      %p267 = scmp.eq.s32.totalorder %s32, 0
      %p268 = por %p266, %p267
      %p269 = scmp.ne.s32.totalorder %s257, %s258
      %p270 = scmp.eq.s32.totalorder %s33, 1
      %p271 = por %p269, %p270
      %p273 = scmp.ne.s32.totalorder %s258, %s272
      %p274 = scmp.eq.s32.totalorder %s33, 0
      %p275 = por %p273, %p274
      %s277 = sadd.s32 %s276, 1
      %p280 = scmp.eq.s32.totalorder %s27, 1
      %p281 = scmp.ne.s32.totalorder %s276, %s278
      %p282 = scmp.eq.s32.totalorder %s27, 0
      %p283 = por %p281, %p282
      %p284 = scmp.ne.s32.totalorder %s276, %s278
      %p285 = scmp.eq.s32.totalorder %s32, 1
      %p286 = por %p284, %p285
      %p287 = scmp.ne.s32.totalorder %s278, %s279
      %p288 = scmp.eq.s32.totalorder %s32, 0
      %p289 = por %p287, %p288
      %p290 = scmp.ne.s32.totalorder %s278, %s279
      %p291 = scmp.eq.s32.totalorder %s33, 1
      %p292 = por %p290, %p291
      %p294 = scmp.ne.s32.totalorder %s279, %s293
      %p295 = scmp.eq.s32.totalorder %s33, 0
      %p296 = por %p294, %p295
      %s298 = sadd.s32 %s297, 1
      %p301 = scmp.eq.s32.totalorder %s27, 1
      %p302 = scmp.ne.s32.totalorder %s297, %s299
      %p303 = scmp.eq.s32.totalorder %s27, 0
      %p304 = por %p302, %p303
      %p305 = scmp.ne.s32.totalorder %s297, %s299
      %p306 = scmp.eq.s32.totalorder %s32, 1
      %p307 = por %p305, %p306
      %p308 = scmp.ne.s32.totalorder %s299, %s300
      %p309 = scmp.eq.s32.totalorder %s32, 0
      %p310 = por %p308, %p309
      %p311 = scmp.ne.s32.totalorder %s299, %s300
      %p312 = scmp.eq.s32.totalorder %s33, 1
      %p313 = por %p311, %p312
      %p315 = scmp.ne.s32.totalorder %s300, %s314
      %p316 = scmp.eq.s32.totalorder %s33, 0
      %p317 = por %p315, %p316
      %s319 = sadd.s32 %s318, 1
      %p322 = scmp.eq.s32.totalorder %s27, 1
      %p323 = scmp.ne.s32.totalorder %s318, %s320
      %p324 = scmp.eq.s32.totalorder %s27, 0
      %p325 = por %p323, %p324
      %p326 = scmp.ne.s32.totalorder %s318, %s320
      %p327 = scmp.eq.s32.totalorder %s32, 1
      %p328 = por %p326, %p327
      %p329 = scmp.ne.s32.totalorder %s320, %s321
      %p330 = scmp.eq.s32.totalorder %s32, 0
      %p331 = por %p329, %p330
      %p332 = scmp.ne.s32.totalorder %s320, %s321
      %p333 = scmp.eq.s32.totalorder %s33, 1
      %p334 = por %p332, %p333
      %p336 = scmp.ne.s32.totalorder %s321, %s335
      %p337 = scmp.eq.s32.totalorder %s33, 0
      %p338 = por %p336, %p337
      %s340 = sadd.s32 %s339, 1
      %p343 = scmp.eq.s32.totalorder %s27, 1
      %p344 = scmp.ne.s32.totalorder %s339, %s341
      %p345 = scmp.eq.s32.totalorder %s27, 0
      %p346 = por %p344, %p345
      %p347 = scmp.ne.s32.totalorder %s339, %s341
      %p348 = scmp.eq.s32.totalorder %s32, 1
      %p349 = por %p347, %p348
      %p350 = scmp.ne.s32.totalorder %s341, %s342
      %p351 = scmp.eq.s32.totalorder %s32, 0
      %p352 = por %p350, %p351
      %p353 = scmp.ne.s32.totalorder %s341, %s342
      %p354 = scmp.eq.s32.totalorder %s33, 1
      %p355 = por %p353, %p354
      %p357 = scmp.ne.s32.totalorder %s342, %s356
      %p358 = scmp.eq.s32.totalorder %s33, 0
      %p359 = por %p357, %p358
      %s360 = ssub.s32 %s27, %s34
      %p361 = scmp.eq.s32.totalorder %s360, 0
      %s363 = sadd.s32 %s362, 1
      %s364 = scalar_select %p361, %s362, %s363
      %p367 = pneg %p361
      %p368 = scmp.eq.s32.totalorder %s27, 1
      %p369 = por %p367, %p368
      %p370 = scmp.ne.s32.totalorder %s362, %s365
      %p371 = scmp.eq.s32.totalorder %s27, 0
      %p372 = por %p370, %p371
      %p373 = scmp.ne.s32.totalorder %s362, %s365
      %p374 = scmp.eq.s32.totalorder %s32, 1
      %p375 = por %p373, %p374
      %p376 = scmp.ne.s32.totalorder %s365, %s366
      %p377 = scmp.eq.s32.totalorder %s32, 0
      %p378 = por %p376, %p377
      %p379 = scmp.ne.s32.totalorder %s365, %s366
      %p380 = scmp.eq.s32.totalorder %s33, 1
      %p381 = por %p379, %p380
      %p383 = scmp.ne.s32.totalorder %s366, %s382
      %p384 = scmp.eq.s32.totalorder %s33, 0
      %p385 = por %p383, %p384
      %s386 = ssub.s32 %s27, %s34
      %p387 = scmp.eq.s32.totalorder %s386, 0
      %s389 = sadd.s32 %s388, 1
      %s390 = scalar_select %p387, %s388, %s389
      %p393 = pneg %p387
      %p394 = scmp.eq.s32.totalorder %s27, 1
      %p395 = por %p393, %p394
      %p396 = scmp.ne.s32.totalorder %s388, %s391
      %p397 = scmp.eq.s32.totalorder %s27, 0
      %p398 = por %p396, %p397
      %p399 = scmp.ne.s32.totalorder %s388, %s391
      %p400 = scmp.eq.s32.totalorder %s32, 1
      %p401 = por %p399, %p400
      %p402 = scmp.ne.s32.totalorder %s391, %s392
      %p403 = scmp.eq.s32.totalorder %s32, 0
      %p404 = por %p402, %p403
      %p405 = scmp.ne.s32.totalorder %s391, %s392
      %p406 = scmp.eq.s32.totalorder %s33, 1
      %p407 = por %p405, %p406
      %p409 = scmp.ne.s32.totalorder %s392, %s408
      %p410 = scmp.eq.s32.totalorder %s33, 0
      %p411 = por %p409, %p410
      %s412 = ssub.s32 %s27, %s34
      %p413 = scmp.eq.s32.totalorder %s412, 0
      %s415 = sadd.s32 %s414, 1
      %s416 = scalar_select %p413, %s414, %s415
      %p419 = pneg %p413
      %p420 = scmp.eq.s32.totalorder %s27, 1
      %p421 = por %p419, %p420
      %p422 = scmp.ne.s32.totalorder %s414, %s417
      %p423 = scmp.eq.s32.totalorder %s27, 0
      %p424 = por %p422, %p423
      %p425 = scmp.ne.s32.totalorder %s414, %s417
      %p426 = scmp.eq.s32.totalorder %s32, 1
      %p427 = por %p425, %p426
      %p428 = scmp.ne.s32.totalorder %s417, %s418
      %p429 = scmp.eq.s32.totalorder %s32, 0
      %p430 = por %p428, %p429
      %p431 = scmp.ne.s32.totalorder %s417, %s418
      %p432 = scmp.eq.s32.totalorder %s33, 1
      %p433 = por %p431, %p432
      %p435 = scmp.ne.s32.totalorder %s418, %s434
      %p436 = scmp.eq.s32.totalorder %s33, 0
      %p437 = por %p435, %p436
      %p438 = scmp.le.s32.totalorder 1, %s27
      %p439 = scmp.lt.s32.totalorder %s27, 3
      %p440 = pnand %p438, %p439
      %p441 = pneg %p440
      // Predicated region
      $region9: #{sst_classifier_forward.1} parent=5 // pred_check
        _
      $region10: #{sst_classifier_forward.1} parent=5 // pred_check_branch
        %443 = sbr.rel (%p440) target = $region12
      $region11: #{sst_classifier_forward.1} parent=5 // pred_region
        %s444 = ssub.s32 %s27, 1
        // Predicated region
        $region13: #{sst_classifier_forward.1} parent=11 // pred_check
          %p445 = pneg %p74
        $region14: #{sst_classifier_forward.1} parent=11 // pred_check_branch
          %447 = sbr.rel (%p445) target = $region16
        $region15: #{sst_classifier_forward.1} parent=11 // pred_region
          _
        $region16: #{sst_classifier_forward.1} parent=11 // pred_fallthru
          _
        // Predicated region
        $region17: #{sst_classifier_forward.1} parent=11 // pred_check
          %p448 = pneg %p121
        $region18: #{sst_classifier_forward.1} parent=11 // pred_check_branch
          %450 = sbr.rel (%p448) target = $region20
        $region19: #{sst_classifier_forward.1} parent=11 // pred_region
          _
        $region20: #{sst_classifier_forward.1} parent=11 // pred_fallthru
          _
        // Predicated region
        $region21: #{sst_classifier_forward.1} parent=11 // pred_check
          %p451 = pneg %p142
        $region22: #{sst_classifier_forward.1} parent=11 // pred_check_branch
          %453 = sbr.rel (%p451) target = $region24
        $region23: #{sst_classifier_forward.1} parent=11 // pred_region
          _
        $region24: #{sst_classifier_forward.1} parent=11 // pred_fallthru
          _
        // Predicated region
        $region25: #{sst_classifier_forward.1} parent=11 // pred_check
          %p454 = pneg %p163
        $region26: #{sst_classifier_forward.1} parent=11 // pred_check_branch
          %456 = sbr.rel (%p454) target = $region28
        $region27: #{sst_classifier_forward.1} parent=11 // pred_region
          _
        $region28: #{sst_classifier_forward.1} parent=11 // pred_fallthru
          _
        // Predicated region
        $region29: #{sst_classifier_forward.1} parent=11 // pred_check
          %p457 = pneg %p184
        $region30: #{sst_classifier_forward.1} parent=11 // pred_check_branch
          %459 = sbr.rel (%p457) target = $region32
        $region31: #{sst_classifier_forward.1} parent=11 // pred_region
          _
        $region32: #{sst_classifier_forward.1} parent=11 // pred_fallthru
          _
        // Predicated region
        $region33: #{sst_classifier_forward.1} parent=11 // pred_check
          %p460 = pneg %p205
        $region34: #{sst_classifier_forward.1} parent=11 // pred_check_branch
          %462 = sbr.rel (%p460) target = $region36
        $region35: #{sst_classifier_forward.1} parent=11 // pred_region
          _
        $region36: #{sst_classifier_forward.1} parent=11 // pred_fallthru
          _
        // Predicated region
        $region37: #{sst_classifier_forward.1} parent=11 // pred_check
          %p463 = pneg %p226
        $region38: #{sst_classifier_forward.1} parent=11 // pred_check_branch
          %465 = sbr.rel (%p463) target = $region40
        $region39: #{sst_classifier_forward.1} parent=11 // pred_region
          _
        $region40: #{sst_classifier_forward.1} parent=11 // pred_fallthru
          _
        // Predicated region
        $region41: #{sst_classifier_forward.1} parent=11 // pred_check
          %p466 = pneg %p247
        $region42: #{sst_classifier_forward.1} parent=11 // pred_check_branch
          %468 = sbr.rel (%p466) target = $region44
        $region43: #{sst_classifier_forward.1} parent=11 // pred_region
          _
        $region44: #{sst_classifier_forward.1} parent=11 // pred_fallthru
          _
        // Predicated region
        $region45: #{sst_classifier_forward.1} parent=11 // pred_check
          %p469 = pneg %p268
        $region46: #{sst_classifier_forward.1} parent=11 // pred_check_branch
          %471 = sbr.rel (%p469) target = $region48
        $region47: #{sst_classifier_forward.1} parent=11 // pred_region
          _
        $region48: #{sst_classifier_forward.1} parent=11 // pred_fallthru
          _
        // Predicated region
        $region49: #{sst_classifier_forward.1} parent=11 // pred_check
          %p472 = pneg %p289
        $region50: #{sst_classifier_forward.1} parent=11 // pred_check_branch
          %474 = sbr.rel (%p472) target = $region52
        $region51: #{sst_classifier_forward.1} parent=11 // pred_region
          _
        $region52: #{sst_classifier_forward.1} parent=11 // pred_fallthru
          _
        // Predicated region
        $region53: #{sst_classifier_forward.1} parent=11 // pred_check
          %p475 = pneg %p310
        $region54: #{sst_classifier_forward.1} parent=11 // pred_check_branch
          %477 = sbr.rel (%p475) target = $region56
        $region55: #{sst_classifier_forward.1} parent=11 // pred_region
          _
        $region56: #{sst_classifier_forward.1} parent=11 // pred_fallthru
          _
        // Predicated region
        $region57: #{sst_classifier_forward.1} parent=11 // pred_check
          %p478 = pneg %p331
        $region58: #{sst_classifier_forward.1} parent=11 // pred_check_branch
          %480 = sbr.rel (%p478) target = $region60
        $region59: #{sst_classifier_forward.1} parent=11 // pred_region
          _
        $region60: #{sst_classifier_forward.1} parent=11 // pred_fallthru
          _
        // Predicated region
        $region61: #{sst_classifier_forward.1} parent=11 // pred_check
          %p481 = pneg %p352
        $region62: #{sst_classifier_forward.1} parent=11 // pred_check_branch
          %483 = sbr.rel (%p481) target = $region64
        $region63: #{sst_classifier_forward.1} parent=11 // pred_region
          _
        $region64: #{sst_classifier_forward.1} parent=11 // pred_fallthru
          _
      $region12: #{sst_classifier_forward.1} parent=5 // pred_fallthru
        _
      %p484 = scmp.lt.s32.totalorder %s27, 2
      // Predicated region
      $region65: #{sst_classifier_forward.1} parent=5 // pred_check
        %p485 = pneg %p484
      $region66: #{sst_classifier_forward.1} parent=5 // pred_check_branch
        %487 = sbr.rel (%p485) target = $region68
      $region67: #{sst_classifier_forward.1} parent=5 // pred_region
        // Predicated region
        $region69: #{sst_classifier_forward.1} parent=67 // pred_check
          %p488 = pneg %p47
        $region70: #{sst_classifier_forward.1} parent=67 // pred_check_branch
          %490 = sbr.rel (%p488) target = $region72
        $region71: #{sst_classifier_forward.1} parent=67 // pred_region
          %p491 = scmp.lt.s32.totalorder %s27, 1
          %s492 = scalar_select %p491, %s27, 1
          %s493 = smul.addr %s492, 2
          %s494 = smul.addr %s493, 8
          %s495 = scalar_lea.vmem %s0, %s494
        $region72: #{sst_classifier_forward.1} parent=67 // pred_fallthru
          _
        // Predicated region
        $region73: #{sst_classifier_forward.1} parent=67 // pred_check
          %p496 = pneg %p94
        $region74: #{sst_classifier_forward.1} parent=67 // pred_check_branch
          %498 = sbr.rel (%p496) target = $region76
        $region75: #{sst_classifier_forward.1} parent=67 // pred_region
          %p499 = scmp.lt.s32.totalorder %s27, 1
          %s500 = scalar_select %p499, %s27, 1
          %s501 = smul.addr %s500, 2
          %s502 = smul.addr %s501, 8
          %s503 = scalar_lea.vmem %s2, %s502
        $region76: #{sst_classifier_forward.1} parent=67 // pred_fallthru
          _
      $region68: #{sst_classifier_forward.1} parent=5 // pred_fallthru
        _
      %p504 = scmp.le.s32.totalorder 1, %s27
      %p505 = scmp.lt.s32.totalorder %s27, 3
      %p506 = pnand %p504, %p505
      %p507 = pneg %p506
      // Predicated region
      $region77: #{sst_classifier_forward.1} parent=5 // pred_check
        _
      $region78: #{sst_classifier_forward.1} parent=5 // pred_check_branch
        %509 = sbr.rel (%p506) target = $region80
      $region79: #{sst_classifier_forward.1} parent=5 // pred_region
        %s510 = ssub.s32 %s27, 1
        %p511 = scmp.lt.s32.totalorder %s32, 1
        %s512 = scalar_select %p511, %s32, 1
        %s513 = smul.addr %s512, 2
        %s514 = smul.addr %s513, 8
        %s515 = scalar_lea.vmem %s0, %s514
        %p516 = pneg %p53
        %p517 = pneg %p50
        %p518 = pneg %p74
        %p519 = pneg %p71
        %p520 = scmp.lt.s32.totalorder %s32, 1
        %s521 = scalar_select %p520, %s32, 1
        %s522 = smul.addr %s521, 2
        %s523 = smul.addr %s522, 8
        %s524 = scalar_lea.vmem %s2, %s523
        %p525 = pneg %p100
        %p526 = pneg %p97
        %p527 = pneg %p121
        %p528 = pneg %p118
        %p529 = pneg %p142
        %p530 = pneg %p139
        %p531 = pneg %p163
        %p532 = pneg %p160
        %p533 = pneg %p184
        %p534 = pneg %p181
        %p535 = pneg %p205
        %p536 = pneg %p202
        %p537 = pneg %p226
        %p538 = pneg %p223
        %p539 = pneg %p247
        %p540 = pneg %p244
        %p541 = pneg %p268
        %p542 = pneg %p265
        %p543 = pneg %p289
        %p544 = pneg %p286
        %p545 = pneg %p310
        %p546 = pneg %p307
        %p547 = pneg %p331
        %p548 = pneg %p328
        %p549 = pneg %p352
        %p550 = pneg %p349
        %p551 = pneg %p378
        %p552 = pneg %p375
        %s553 = sand.u32 %s365, 1
        %s554 = scalar_lea.sflag [#allocation3], %s553
        %s555 = sand.u32 %s365, 1
        %s556 = scalar_lea.vmem [#allocation2], %s555
        %p557 = pneg %p404
        %p558 = pneg %p401
        %p559 = scmp.lt.s32.totalorder %s32, 1
        %s560 = scalar_select %p559, %s32, 1
        %s561 = scalar_lea.vmem %s16, %s560
        %p562 = pneg %p430
        %p563 = pneg %p427
        %p564 = scmp.lt.s32.totalorder %s32, 1
        %s565 = scalar_select %p564, %s32, 1
        %s566 = scalar_lea.vmem %s17, %s565
        %p567 = scmp.lt.s32.totalorder %s32, 1
        %s568 = scalar_select %p567, %s32, 1
        %s569 = smul.addr %s568, 2
        %s570 = smul.addr %s569, 8
        %s571 = scalar_lea.vmem %s0, %s570
        %p572 = scmp.lt.s32.totalorder %s32, 1
        %s573 = scalar_select %p572, %s32, 1
        %s574 = smul.addr %s573, 2
        %s575 = smul.addr %s574, 8
        %s576 = scalar_lea.vmem %s2, %s575
        %p577 = scmp.lt.s32.totalorder %s32, 1
        %s578 = scalar_select %p577, %s32, 1
        %s579 = scalar_lea.vmem %s16, %s578
        %p580 = scmp.lt.s32.totalorder %s32, 1
        %s581 = scalar_select %p580, %s32, 1
        %s582 = scalar_lea.vmem %s17, %s581
        %v583 = vld [vmem:[%s571] sm:$0xff]
        %v584 = vld [vmem:[%s571 + $0x8] sm:$0xf]
        %v585 = vld [vmem:[%s1] sm:$0xff]
        %v586 = vld [vmem:[%s1 + $0x8] sm:$0xf]
        %v587 = vadd.f32 %v583, %v585
        %v588 = vadd.f32 %v584, %v586
        %v589 = vld [vmem:[%s3] sm:$0xff]
        %v590 = vld [vmem:[%s3 + $0x8] sm:$0xff]
        %v591 = vld [vmem:[%s4] sm:$0x1]
        %v593 = vlaneseq
        %v594 = vshrl.u32 %v593, 7
        %v595 = vsub.s32 0, %v594
        %v596 = vrot.slane %v591, %v595
        %vm598 = vcmask 130048
        %v600 = vsel %vm598, %v587, 0
        %v603 = vsel %vm598, %v588, 0
        %605 = vmatprep.subr.mxu0 0.0
        %606 = vmatpush1.msra.mxu0 %v589
        %607 = vmatprep.subr.mxu0 0.0
        %608 = vmatpush1.msra.mxu0 %v590
        %609 = vmatprep.subr.mxu0 0.0
        %610 = vmatpush1.msra.mxu0 0.0
        %611 = vmatprep.subr.mxu0 0.0
        %612 = vmatpush1.msra.mxu0 0.0
        %613 = vmatprep.subr.mxu0 0.0
        %614 = vmatpush1.msra.mxu0 0.0
        %615 = vmatprep.subr.mxu0 0.0
        %616 = vmatpush1.msra.mxu0 0.0
        %617 = vmatprep.subr.mxu0 0.0
        %618 = vmatpush1.msra.mxu0 0.0
        %619 = vmatprep.subr.mxu0 0.0
        %620 = vmatpush1.msra.mxu0 0.0
        %621 = vmatprep.subr.mxu0 0.0
        %622 = vmatpush1.msra.mxu0 0.0
        %623 = vmatprep.subr.mxu0 0.0
        %624 = vmatpush1.msra.mxu0 0.0
        %625 = vmatprep.subr.mxu0 0.0
        %626 = vmatpush1.msra.mxu0 0.0
        %627 = vmatprep.subr.mxu0 0.0
        %628 = vmatpush1.msra.mxu0 0.0
        %629 = vmatprep.subr.mxu0 0.0
        %630 = vmatpush1.msra.mxu0 0.0
        %631 = vmatprep.subr.mxu0 0.0
        %632 = vmatpush1.msra.mxu0 0.0
        %633 = vmatprep.subr.mxu0 0.0
        %634 = vmatpush1.msra.mxu0 0.0
        %635 = vmatprep.subr.mxu0 0.0
        %636 = vmatpush1.msra.mxu0 0.0
        %637 = vmatprep.subr.mxu0 0.0
        %638 = vmatpush1.msra.mxu0 0.0
        %639 = vmatprep.subr.mxu0 0.0
        %640 = vmatpush1.msra.mxu0 0.0
        %641 = vmatprep.subr.mxu0 0.0
        %642 = vmatpush1.msra.mxu0 0.0
        %643 = vmatprep.subr.mxu0 0.0
        %644 = vmatpush1.msra.mxu0 0.0
        %645 = vmatprep.subr.mxu0 0.0
        %646 = vmatpush1.msra.mxu0 0.0
        %647 = vmatprep.subr.mxu0 0.0
        %648 = vmatpush1.msra.mxu0 0.0
        %649 = vmatprep.subr.mxu0 0.0
        %650 = vmatpush1.msra.mxu0 0.0
        %651 = vmatprep.subr.mxu0 0.0
        %652 = vmatpush1.msra.mxu0 0.0
        %653 = vmatprep.subr.mxu0 0.0
        %654 = vmatpush1.msra.mxu0 0.0
        %655 = vmatprep.subr.mxu0 0.0
        %656 = vmatpush1.msra.mxu0 0.0
        %657 = vmatprep.subr.mxu0 0.0
        %658 = vmatpush1.msra.mxu0 0.0
        %659 = vmatprep.subr.mxu0 0.0
        %660 = vmatpush1.msra.mxu0 0.0
        %661 = vmatprep.subr.mxu0 0.0
        %662 = vmatpush1.msra.mxu0 0.0
        %663 = vmatprep.subr.mxu0 0.0
        %664 = vmatpush1.msra.mxu0 0.0
        %665 = vmatprep.subr.mxu0 0.0
        %666 = vmatpush1.msra.mxu0 0.0
        %667 = vmatprep.subr.mxu0 0.0
        %668 = vmatpush1.msra.mxu0 0.0
        %669 = vmatprep.mubr.f32.mxu0 0.0
        %670 = vmatmul.mubr.f32.gmra.mrb[0].mxu0 %v600
        %v671 = vpop.f32.mrb[0].mxu0
        %v672 = vadd.f32 %v596, %v671
        %v673 = vpop.f32.mrb[0].mxu0
        %674 = vmatprep.mubr.f32.mxu0 0.0
        %675 = vmatmul.mubr.f32.gmra.mrb[0].mxu0 %v603
        %v676 = vpop.f32.mrb[0].mxu0
        %v677 = vadd.f32 %v596, %v676
        %v678 = vpop.f32.mrb[0].mxu0
        %679 = vdwg.mxu0
        %v680 = vsub.f32 0.0, %v672
        %v681 = vsub.f32 0.0, %v677
        %v682 = vmul.f32 %v680, 1.442695
        %v683 = vpow.pop %v682
        %v684 = vmul.f32 %v681, 1.442695
        %v685 = vpow.pop %v684
        %v686 = vadd.f32 %v683, 1.0
        %v687 = vadd.f32 %v685, 1.0
        %v688 = vrcp.pop %v686
        %v689 = vmul.f32 1.0, %v688
        %v690 = vrcp.pop %v687
        %v691 = vmul.f32 1.0, %v690
        %v692 = vmul.f32 %v672, %v689
        %v693 = vmul.f32 %v677, %v691
        %vm694 = vcmask 261120
        %v695 = vsel %vm694, %v692, 0.0
        %696 = vadd.xlane.f32.xlu0 %v695
        %v697 = vpop.xlane.xlu0 %696
        %vm698 = vcmask 257024
        %v699 = vsel %vm698, %v693, 0.0
        %700 = vadd.xlane.f32.xlu0 %v699
        %v701 = vpop.xlane.xlu0 %700
        %v702 = vrcp.pop 32.0
        %v703 = vmul.f32 %v697, %v702
        %v704 = vmul.f32 %v701, %v702
        %v705 = vmul.f32 %v692, %v692
        %v706 = vmul.f32 %v693, %v693
        %v707 = vsel %vm694, %v705, 0.0
        %708 = vadd.xlane.f32.xlu0 %v707
        %v709 = vpop.xlane.xlu0 %708
        %v710 = vsel %vm698, %v706, 0.0
        %711 = vadd.xlane.f32.xlu0 %v710
        %v712 = vpop.xlane.xlu0 %711
        %v713 = vmul.f32 %v709, %v702
        %v714 = vmul.f32 %v712, %v702
        %v715 = vmul.f32 %v703, %v703
        %v716 = vmul.f32 %v704, %v704
        %v717 = vsub.f32 %v713, %v715
        %v718 = vsub.f32 %v714, %v716
        %v719 = vsub.f32 %v692, %v703
        %v720 = vsub.f32 %v693, %v704
        %v721 = vadd.f32 %v717, 1e-05
        %v722 = vadd.f32 %v718, 1e-05
        %v723 = vrsqrt.pop %v721
        %v724 = vrsqrt.pop %v722
        %v725 = vmul.f32 %v719, %v723
        %v726 = vmul.f32 %v720, %v724
        %v727 = vld [vmem:[%s5] sm:$0x1]
        %v729 = vlaneseq
        %v730 = vshrl.u32 %v729, 7
        %v731 = vsub.s32 0, %v730
        %v732 = vrot.slane %v727, %v731
        %v734 = vmul.f32 %v725, %v732
        %v735 = vmul.f32 %v726, %v732
        %v736 = vld [vmem:[%s6] sm:$0x1]
        %v738 = vlaneseq
        %v739 = vshrl.u32 %v738, 7
        %v740 = vsub.s32 0, %v739
        %v741 = vrot.slane %v736, %v740
        %v743 = vadd.f32 %v734, %v741
        %v744 = vadd.f32 %v735, %v741
        %v745 = vlaneseq
        %v746 = vand.u32 %v745, 127
        %v747 = vlaneseq
        %v748 = vshrl.u32 %v747, 7
        %v749 = vmul.u32 %v748, 16
        %vm750 = vcmp.ge.s32.totalorder %v746, %v749
        %v751 = vadd.s32 %v748, 1
        %v752 = vmul.u32 %v751, 16
        %vm753 = vcmp.lt.s32.totalorder %v746, %v752
        %vm754 = vmand %vm750, %vm753
        %v755 = vsel %vm754, 1.0, 0.0
        %v756 = vld [vmem:[%s7] sm:$0xff]
        %v757 = vld [vmem:[%s7 + $0x8] sm:$0xff]
        %v758 = vld [vmem:[%s7 + $0x10] sm:$0xff]
        %v759 = vld [vmem:[%s7 + $0x18] sm:$0xff]
        %v760 = vld [vmem:[%s8] sm:$0x1]
        %v762 = vlaneseq
        %v763 = vshrl.u32 %v762, 7
        %v764 = vsub.s32 0, %v763
        %v765 = vrot.slane %v760, %v764
        %v768 = vsel %vm694, %v743, 0
        %v771 = vsel %vm694, %v744, 0
        %773 = vmatprep.subr.mxu0 0.0
        %774 = vmatpush1.msra.mxu0 %v756
        %775 = vmatprep.subr.mxu0 0.0
        %776 = vmatpush1.msra.mxu0 %v757
        %777 = vmatprep.subr.mxu0 0.0
        %778 = vmatpush1.msra.mxu0 %v758
        %779 = vmatprep.subr.mxu0 0.0
        %780 = vmatpush1.msra.mxu0 %v759
        %781 = vmatprep.subr.mxu0 0.0
        %782 = vmatpush1.msra.mxu0 0.0
        %783 = vmatprep.subr.mxu0 0.0
        %784 = vmatpush1.msra.mxu0 0.0
        %785 = vmatprep.subr.mxu0 0.0
        %786 = vmatpush1.msra.mxu0 0.0
        %787 = vmatprep.subr.mxu0 0.0
        %788 = vmatpush1.msra.mxu0 0.0
        %789 = vmatprep.subr.mxu0 0.0
        %790 = vmatpush1.msra.mxu0 0.0
        %791 = vmatprep.subr.mxu0 0.0
        %792 = vmatpush1.msra.mxu0 0.0
        %793 = vmatprep.subr.mxu0 0.0
        %794 = vmatpush1.msra.mxu0 0.0
        %795 = vmatprep.subr.mxu0 0.0
        %796 = vmatpush1.msra.mxu0 0.0
        %797 = vmatprep.subr.mxu0 0.0
        %798 = vmatpush1.msra.mxu0 0.0
        %799 = vmatprep.subr.mxu0 0.0
        %800 = vmatpush1.msra.mxu0 0.0
        %801 = vmatprep.subr.mxu0 0.0
        %802 = vmatpush1.msra.mxu0 0.0
        %803 = vmatprep.subr.mxu0 0.0
        %804 = vmatpush1.msra.mxu0 0.0
        %805 = vmatprep.subr.mxu0 0.0
        %806 = vmatpush1.msra.mxu0 0.0
        %807 = vmatprep.subr.mxu0 0.0
        %808 = vmatpush1.msra.mxu0 0.0
        %809 = vmatprep.subr.mxu0 0.0
        %810 = vmatpush1.msra.mxu0 0.0
        %811 = vmatprep.subr.mxu0 0.0
        %812 = vmatpush1.msra.mxu0 0.0
        %813 = vmatprep.subr.mxu0 0.0
        %814 = vmatpush1.msra.mxu0 0.0
        %815 = vmatprep.subr.mxu0 0.0
        %816 = vmatpush1.msra.mxu0 0.0
        %817 = vmatprep.subr.mxu0 0.0
        %818 = vmatpush1.msra.mxu0 0.0
        %819 = vmatprep.subr.mxu0 0.0
        %820 = vmatpush1.msra.mxu0 0.0
        %821 = vmatprep.subr.mxu0 0.0
        %822 = vmatpush1.msra.mxu0 0.0
        %823 = vmatprep.subr.mxu0 0.0
        %824 = vmatpush1.msra.mxu0 0.0
        %825 = vmatprep.subr.mxu0 0.0
        %826 = vmatpush1.msra.mxu0 0.0
        %827 = vmatprep.subr.mxu0 0.0
        %828 = vmatpush1.msra.mxu0 0.0
        %829 = vmatprep.subr.mxu0 0.0
        %830 = vmatpush1.msra.mxu0 0.0
        %831 = vmatprep.subr.mxu0 0.0
        %832 = vmatpush1.msra.mxu0 0.0
        %833 = vmatprep.subr.mxu0 0.0
        %834 = vmatpush1.msra.mxu0 0.0
        %835 = vmatprep.subr.mxu0 0.0
        %836 = vmatpush1.msra.mxu0 0.0
        %837 = vmatprep.mubr.f32.mxu0 0.0
        %838 = vmatmul.mubr.f32.gmra.mrb[0].mxu0 %v768
        %v839 = vpop.f32.mrb[0].mxu0
        %v840 = vadd.f32 %v765, %v839
        %v841 = vpop.f32.mrb[0].mxu0
        %842 = vmatprep.mubr.f32.mxu0 0.0
        %843 = vmatmul.mubr.f32.gmra.mrb[0].mxu0 %v771
        %v844 = vpop.f32.mrb[0].mxu0
        %v845 = vadd.f32 %v765, %v844
        %v846 = vpop.f32.mrb[0].mxu0
        %847 = vdwg.mxu0
        %v848 = vld [vmem:[%s576] sm:$0xff]
        %v849 = vld [vmem:[%s576 + $0x8] sm:$0xf]
        %v850 = vld [vmem:[%s9] sm:$0x1]
        %v851 = vld [vmem:[%s10] sm:$0x1]
        %853 = vset.pattern.permute.xlu0 0
        %854 = vperm.xlu0 %853, %v848
        %v855 = vpop.permute.xlu0 %854
        %858 = vset.pattern.permute.xlu0 0
        %859 = vperm.xlu0 %858, %v849
        %v860 = vpop.permute.xlu0 %859
        %v862 = vmul.f32 %v855, 0.125
        %v863 = vmul.f32 %v860, 0.125
        %v864 = vsub.f32 %v855, %v862
        %v865 = vsub.f32 %v860, %v863
        %v867 = vlaneseq
        %v868 = vshrl.u32 %v867, 7
        %v869 = vsub.s32 0, %v868
        %v870 = vrot.slane %v850, %v869
        %v872 = vmul.f32 %v870, %v862
        %v873 = vmul.f32 %v870, %v863
        %vm874 = vcmask 64512
        %v875 = vsel %vm874, %v872, 0.0
        %vm876 = vcmask 60416
        %v877 = vsel %vm876, %v873, 0.0
        %v878 = vadd.f32 %v875, %v877
        %v879 = vrot.slane %v878, 4
        %v880 = vadd.f32 %v878, %v879
        %v881 = vrot.slane %v880, 2
        %v882 = vadd.f32 %v880, %v881
        %v883 = vrot.slane %v882, 1
        %v884 = vadd.f32 %v882, %v883
        %v886 = vlaneseq
        %v887 = vshrl.u32 %v886, 7
        %v888 = vsub.s32 0, %v887
        %v889 = vrot.slane %v851, %v888
        %v891 = vmul.f32 %v889, %v864
        %v892 = vmul.f32 %v889, %v865
        %v893 = vsel %vm874, %v891, 0.0
        %v894 = vsel %vm876, %v892, 0.0
        %v895 = vadd.f32 %v893, %v894
        %v896 = vrot.slane %v895, 4
        %v897 = vadd.f32 %v895, %v896
        %v898 = vrot.slane %v897, 2
        %v899 = vadd.f32 %v897, %v898
        %v900 = vrot.slane %v899, 1
        %v901 = vadd.f32 %v899, %v900
        %v902 = vsub.f32 %v884, %v901
        %vm903 = vcmask 1043456
        %v904 = vsel %vm903, %v863, 0.0
        %v905 = vadd.f32 %v862, %v904
        %v906 = vrot.slane %v905, 4
        %v907 = vadd.f32 %v905, %v906
        %v908 = vrot.slane %v907, 2
        %v909 = vadd.f32 %v907, %v908
        %v910 = vrot.slane %v909, 1
        %v911 = vadd.f32 %v909, %v910
        %v912 = vadd.f32 %v911, 1e-05
        %v913 = vrcp.pop %v912
        %v914 = vmul.f32 %v862, %v913
        %v915 = vmul.f32 %v863, %v913
        %v917 = vsel %vm874, %v914, 0
        %v920 = vsel %vm874, %v915, 0
        %922 = vmatprep.subr.mxu0 0.0
        %923 = vmatpush1.msra.mxu0 %v755
        %924 = vmatprep.subr.mxu0 0.0
        %925 = vmatpush1.msra.mxu0 0.0
        %926 = vmatprep.subr.mxu0 0.0
        %927 = vmatpush1.msra.mxu0 0.0
        %928 = vmatprep.subr.mxu0 0.0
        %929 = vmatpush1.msra.mxu0 0.0
        %930 = vmatprep.subr.mxu0 0.0
        %931 = vmatpush1.msra.mxu0 0.0
        %932 = vmatprep.subr.mxu0 0.0
        %933 = vmatpush1.msra.mxu0 0.0
        %934 = vmatprep.subr.mxu0 0.0
        %935 = vmatpush1.msra.mxu0 0.0
        %936 = vmatprep.subr.mxu0 0.0
        %937 = vmatpush1.msra.mxu0 0.0
        %938 = vmatprep.subr.mxu0 0.0
        %939 = vmatpush1.msra.mxu0 0.0
        %940 = vmatprep.subr.mxu0 0.0
        %941 = vmatpush1.msra.mxu0 0.0
        %942 = vmatprep.subr.mxu0 0.0
        %943 = vmatpush1.msra.mxu0 0.0
        %944 = vmatprep.subr.mxu0 0.0
        %945 = vmatpush1.msra.mxu0 0.0
        %946 = vmatprep.subr.mxu0 0.0
        %947 = vmatpush1.msra.mxu0 0.0
        %948 = vmatprep.subr.mxu0 0.0
        %949 = vmatpush1.msra.mxu0 0.0
        %950 = vmatprep.subr.mxu0 0.0
        %951 = vmatpush1.msra.mxu0 0.0
        %952 = vmatprep.subr.mxu0 0.0
        %953 = vmatpush1.msra.mxu0 0.0
        %954 = vmatprep.subr.mxu0 0.0
        %955 = vmatpush1.msra.mxu0 0.0
        %956 = vmatprep.subr.mxu0 0.0
        %957 = vmatpush1.msra.mxu0 0.0
        %958 = vmatprep.subr.mxu0 0.0
        %959 = vmatpush1.msra.mxu0 0.0
        %960 = vmatprep.subr.mxu0 0.0
        %961 = vmatpush1.msra.mxu0 0.0
        %962 = vmatprep.subr.mxu0 0.0
        %963 = vmatpush1.msra.mxu0 0.0
        %964 = vmatprep.subr.mxu0 0.0
        %965 = vmatpush1.msra.mxu0 0.0
        %966 = vmatprep.subr.mxu0 0.0
        %967 = vmatpush1.msra.mxu0 0.0
        %968 = vmatprep.subr.mxu0 0.0
        %969 = vmatpush1.msra.mxu0 0.0
        %970 = vmatprep.subr.mxu0 0.0
        %971 = vmatpush1.msra.mxu0 0.0
        %972 = vmatprep.subr.mxu0 0.0
        %973 = vmatpush1.msra.mxu0 0.0
        %974 = vmatprep.subr.mxu0 0.0
        %975 = vmatpush1.msra.mxu0 0.0
        %976 = vmatprep.subr.mxu0 0.0
        %977 = vmatpush1.msra.mxu0 0.0
        %978 = vmatprep.subr.mxu0 0.0
        %979 = vmatpush1.msra.mxu0 0.0
        %980 = vmatprep.subr.mxu0 0.0
        %981 = vmatpush1.msra.mxu0 0.0
        %982 = vmatprep.subr.mxu0 0.0
        %983 = vmatpush1.msra.mxu0 0.0
        %984 = vmatprep.subr.mxu0 0.0
        %985 = vmatpush1.msra.mxu0 0.0
        %986 = vmatprep.mubr.f32.mxu0 0.0
        %987 = vmatmul.mubr.f32.gmra.mrb[0].mxu0 %v917
        %v988 = vpop.f32.mrb[0].mxu0
        %v989 = vadd.f32 0.0, %v988
        %v990 = vpop.f32.mrb[0].mxu0
        %991 = vmatprep.mubr.f32.mxu0 0.0
        %992 = vmatmul.mubr.f32.gmra.mrb[0].mxu0 %v920
        %v993 = vpop.f32.mrb[0].mxu0
        %v994 = vadd.f32 0.0, %v993
        %v995 = vpop.f32.mrb[0].mxu0
        %996 = vdwg.mxu0
        %v997 = vmul.f32 %v989, %v840
        %v998 = vmul.f32 %v994, %v845
        %v999 = vsel %vm903, %v998, 0.0
        %v1000 = vadd.f32 %v997, %v999
        %v1001 = vrot.slane %v1000, 4
        %v1002 = vadd.f32 %v1000, %v1001
        %v1003 = vrot.slane %v1002, 2
        %v1004 = vadd.f32 %v1002, %v1003
        %v1005 = vrot.slane %v1004, 1
        %v1006 = vadd.f32 %v1004, %v1005
        %v1007 = vsub.f32 %v840, %v1006
        %v1008 = vsub.f32 %v845, %v1006
        %v1009 = vmul.f32 %v1007, %v1007
        %v1010 = vmul.f32 %v1008, %v1008
        %v1011 = vmul.f32 %v989, %v1009
        %v1012 = vmul.f32 %v994, %v1010
        %v1013 = vsel %vm903, %v1012, 0.0
        %v1014 = vadd.f32 %v1011, %v1013
        %v1015 = vrot.slane %v1014, 4
        %v1016 = vadd.f32 %v1014, %v1015
        %v1017 = vrot.slane %v1016, 2
        %v1018 = vadd.f32 %v1016, %v1017
        %v1019 = vrot.slane %v1018, 1
        %v1020 = vadd.f32 %v1018, %v1019
        %v1021 = vadd.f32 %v1020, 1e-05
        %v1022 = vrcp.pop %v1021
        %v1023 = vmul.f32 %v1022, 0.5
        %v1024 = vmul.f32 %v1009, %v1023
        %v1025 = vmul.f32 %v1010, %v1023
        %v1026 = vlog2.pop %v1021
        %v1027 = vmul.f32 %v1026, 0.6931472
        %v1028 = vmul.f32 %v1027, 0.5
        %v1029 = vadd.f32 %v1024, %v1028
        %v1030 = vadd.f32 %v1025, %v1028
        %1031 = vmatprep.subr.mxu0 0.0
        %1032 = vmatpush1.xpose.msra.mxu0 %v755
        %1033 = vmatprep.subr.mxu0 0.0
        %1034 = vmatpush1.xpose.msra.mxu0 0.0
        %1035 = vmatprep.subr.mxu0 0.0
        %1036 = vmatpush1.xpose.msra.mxu0 0.0
        %1037 = vmatprep.subr.mxu0 0.0
        %1038 = vmatpush1.xpose.msra.mxu0 0.0
        %1039 = vmatprep.subr.mxu0 0.0
        %1040 = vmatpush1.xpose.msra.mxu0 0.0
        %1041 = vmatprep.subr.mxu0 0.0
        %1042 = vmatpush1.xpose.msra.mxu0 0.0
        %1043 = vmatprep.subr.mxu0 0.0
        %1044 = vmatpush1.xpose.msra.mxu0 0.0
        %1045 = vmatprep.subr.mxu0 0.0
        %1046 = vmatpush1.xpose.msra.mxu0 0.0
        %1047 = vmatprep.subr.mxu0 0.0
        %1048 = vmatpush1.xpose.msra.mxu0 0.0
        %1049 = vmatprep.subr.mxu0 0.0
        %1050 = vmatpush1.xpose.msra.mxu0 0.0
        %1051 = vmatprep.subr.mxu0 0.0
        %1052 = vmatpush1.xpose.msra.mxu0 0.0
        %1053 = vmatprep.subr.mxu0 0.0
        %1054 = vmatpush1.xpose.msra.mxu0 0.0
        %1055 = vmatprep.subr.mxu0 0.0
        %1056 = vmatpush1.xpose.msra.mxu0 0.0
        %1057 = vmatprep.subr.mxu0 0.0
        %1058 = vmatpush1.xpose.msra.mxu0 0.0
        %1059 = vmatprep.subr.mxu0 0.0
        %1060 = vmatpush1.xpose.msra.mxu0 0.0
        %1061 = vmatprep.subr.mxu0 0.0
        %1062 = vmatpush1.xpose.msra.mxu0 0.0
        %1063 = vmatprep.subr.mxu0 0.0
        %1064 = vmatpush1.xpose.msra.mxu0 0.0
        %1065 = vmatprep.subr.mxu0 0.0
        %1066 = vmatpush1.xpose.msra.mxu0 0.0
        %1067 = vmatprep.subr.mxu0 0.0
        %1068 = vmatpush1.xpose.msra.mxu0 0.0
        %1069 = vmatprep.subr.mxu0 0.0
        %1070 = vmatpush1.xpose.msra.mxu0 0.0
        %1071 = vmatprep.subr.mxu0 0.0
        %1072 = vmatpush1.xpose.msra.mxu0 0.0
        %1073 = vmatprep.subr.mxu0 0.0
        %1074 = vmatpush1.xpose.msra.mxu0 0.0
        %1075 = vmatprep.subr.mxu0 0.0
        %1076 = vmatpush1.xpose.msra.mxu0 0.0
        %1077 = vmatprep.subr.mxu0 0.0
        %1078 = vmatpush1.xpose.msra.mxu0 0.0
        %1079 = vmatprep.subr.mxu0 0.0
        %1080 = vmatpush1.xpose.msra.mxu0 0.0
        %1081 = vmatprep.subr.mxu0 0.0
        %1082 = vmatpush1.xpose.msra.mxu0 0.0
        %1083 = vmatprep.subr.mxu0 0.0
        %1084 = vmatpush1.xpose.msra.mxu0 0.0
        %1085 = vmatprep.subr.mxu0 0.0
        %1086 = vmatpush1.xpose.msra.mxu0 0.0
        %1087 = vmatprep.subr.mxu0 0.0
        %1088 = vmatpush1.xpose.msra.mxu0 0.0
        %1089 = vmatprep.subr.mxu0 0.0
        %1090 = vmatpush1.xpose.msra.mxu0 0.0
        %1091 = vmatprep.subr.mxu0 0.0
        %1092 = vmatpush1.xpose.msra.mxu0 0.0
        %1093 = vmatprep.subr.mxu0 0.0
        %1094 = vmatpush1.xpose.msra.mxu0 0.0
        %1095 = vmatprep.mubr.f32.mxu0 0.0
        %1096 = vmatmul.mubr.f32.gmra.mrb[0].mxu0 %v1029
        %v1097 = vpop.f32.mrb[0].mxu0
        %v1098 = vadd.f32 0.0, %v1097
        %v1099 = vpop.f32.mrb[0].mxu0
        %1100 = vmatprep.mubr.f32.mxu0 0.0
        %1101 = vmatmul.mubr.f32.gmra.mrb[0].mxu0 %v1030
        %v1102 = vpop.f32.mrb[0].mxu0
        %v1103 = vadd.f32 0.0, %v1102
        %v1104 = vpop.f32.mrb[0].mxu0
        %1105 = vdwg.mxu0
        %vm1106 = vcmp.ge.f32.partialorder %v902, 0.0
        %v1107 = vsub.f32 0.0, %v902
        %v1108 = vmul.f32 %v1107, 1.442695
        %v1109 = vpow.pop %v1108
        %v1110 = vadd.f32 %v1109, 1.0
        %v1111 = vlog2.pop %v1110
        %v1112 = vmul.f32 %v1111, 0.6931472
        %v1113 = vsub.f32 0.0, %v1112
        %v1114 = vmul.f32 %v902, 1.442695
        %v1115 = vpow.pop %v1114
        %v1116 = vadd.f32 %v1115, 1.0
        %v1117 = vlog2.pop %v1116
        %v1118 = vmul.f32 %v1117, 0.6931472
        %v1119 = vsub.f32 %v902, %v1118
        %v1120 = vsel %vm1106, %v1113, %v1119
        %v1121 = vsub.f32 %v1120, %v1098
        %v1122 = vsub.f32 %v1120, %v1103
        %v1123 = vsel %vm874, %v1121, -inf
        %1124 = vmax.xlane.f32.xlu0 %v1123
        %v1125 = vpop.xlane.xlu0 %1124
        %v1126 = vsel %vm876, %v1122, -inf
        %1127 = vmax.xlane.f32.xlu0 %v1126
        %v1128 = vpop.xlane.xlu0 %1127
        %v1129 = vsub.f32 %v1121, %v1125
        %v1130 = vsub.f32 %v1122, %v1128
        %v1131 = vmul.f32 %v1129, 1.442695
        %v1132 = vpow.pop %v1131
        %v1133 = vmul.f32 %v1130, 1.442695
        %v1134 = vpow.pop %v1133
        %v1135 = vsel %vm874, %v1132, 0.0
        %1136 = vadd.xlane.f32.xlu0 %v1135
        %v1137 = vpop.xlane.xlu0 %1136
        %v1138 = vsel %vm876, %v1134, 0.0
        %1139 = vadd.xlane.f32.xlu0 %v1138
        %v1140 = vpop.xlane.xlu0 %1139
        %v1141 = vrcp.pop %v1137
        %v1142 = vmul.f32 %v1132, %v1141
        %v1143 = vrcp.pop %v1140
        %v1144 = vmul.f32 %v1134, %v1143
        %v1145 = vmul.f32 %v855, %v1142
        %v1146 = vmul.f32 %v860, %v1144
        %v1147 = vsub.f32 %v855, %v1145
        %v1148 = vsub.f32 %v860, %v1146
        %v1149 = vmul.f32 %v870, %v1145
        %v1150 = vmul.f32 %v870, %v1146
        %v1151 = vsel %vm874, %v1149, 0.0
        %v1152 = vsel %vm876, %v1150, 0.0
        %v1153 = vadd.f32 %v1151, %v1152
        %v1154 = vrot.slane %v1153, 4
        %v1155 = vadd.f32 %v1153, %v1154
        %v1156 = vrot.slane %v1155, 2
        %v1157 = vadd.f32 %v1155, %v1156
        %v1158 = vrot.slane %v1157, 1
        %v1159 = vadd.f32 %v1157, %v1158
        %v1160 = vmul.f32 %v889, %v1147
        %v1161 = vmul.f32 %v889, %v1148
        %v1162 = vsel %vm874, %v1160, 0.0
        %v1163 = vsel %vm876, %v1161, 0.0
        %v1164 = vadd.f32 %v1162, %v1163
        %v1165 = vrot.slane %v1164, 4
        %v1166 = vadd.f32 %v1164, %v1165
        %v1167 = vrot.slane %v1166, 2
        %v1168 = vadd.f32 %v1166, %v1167
        %v1169 = vrot.slane %v1168, 1
        %v1170 = vadd.f32 %v1168, %v1169
        %v1171 = vsub.f32 %v1159, %v1170
        %v1172 = vsel %vm874, %v1145, 0.0
        %v1173 = vsel %vm876, %v1146, 0.0
        %v1174 = vadd.f32 %v1172, %v1173
        %v1175 = vrot.slane %v1174, 4
        %v1176 = vadd.f32 %v1174, %v1175
        %v1177 = vrot.slane %v1176, 2
        %v1178 = vadd.f32 %v1176, %v1177
        %v1179 = vrot.slane %v1178, 1
        %v1180 = vadd.f32 %v1178, %v1179
        %v1181 = vadd.f32 %v1180, 1e-05
        %v1182 = vrcp.pop %v1181
        %v1183 = vmul.f32 %v1145, %v1182
        %v1184 = vmul.f32 %v1146, %v1182
        %v1186 = vsel %vm874, %v1183, 0
        %v1189 = vsel %vm874, %v1184, 0
        %1191 = vmatprep.subr.mxu0 0.0
        %1192 = vmatpush1.msra.mxu0 %v755
        %1193 = vmatprep.subr.mxu0 0.0
        %1194 = vmatpush1.msra.mxu0 0.0
        %1195 = vmatprep.subr.mxu0 0.0
        %1196 = vmatpush1.msra.mxu0 0.0
        %1197 = vmatprep.subr.mxu0 0.0
        %1198 = vmatpush1.msra.mxu0 0.0
        %1199 = vmatprep.subr.mxu0 0.0
        %1200 = vmatpush1.msra.mxu0 0.0
        %1201 = vmatprep.subr.mxu0 0.0
        %1202 = vmatpush1.msra.mxu0 0.0
        %1203 = vmatprep.subr.mxu0 0.0
        %1204 = vmatpush1.msra.mxu0 0.0
        %1205 = vmatprep.subr.mxu0 0.0
        %1206 = vmatpush1.msra.mxu0 0.0
        %1207 = vmatprep.subr.mxu0 0.0
        %1208 = vmatpush1.msra.mxu0 0.0
        %1209 = vmatprep.subr.mxu0 0.0
        %1210 = vmatpush1.msra.mxu0 0.0
        %1211 = vmatprep.subr.mxu0 0.0
        %1212 = vmatpush1.msra.mxu0 0.0
        %1213 = vmatprep.subr.mxu0 0.0
        %1214 = vmatpush1.msra.mxu0 0.0
        %1215 = vmatprep.subr.mxu0 0.0
        %1216 = vmatpush1.msra.mxu0 0.0
        %1217 = vmatprep.subr.mxu0 0.0
        %1218 = vmatpush1.msra.mxu0 0.0
        %1219 = vmatprep.subr.mxu0 0.0
        %1220 = vmatpush1.msra.mxu0 0.0
        %1221 = vmatprep.subr.mxu0 0.0
        %1222 = vmatpush1.msra.mxu0 0.0
        %1223 = vmatprep.subr.mxu0 0.0
        %1224 = vmatpush1.msra.mxu0 0.0
        %1225 = vmatprep.subr.mxu0 0.0
        %1226 = vmatpush1.msra.mxu0 0.0
        %1227 = vmatprep.subr.mxu0 0.0
        %1228 = vmatpush1.msra.mxu0 0.0
        %1229 = vmatprep.subr.mxu0 0.0
        %1230 = vmatpush1.msra.mxu0 0.0
        %1231 = vmatprep.subr.mxu0 0.0
        %1232 = vmatpush1.msra.mxu0 0.0
        %1233 = vmatprep.subr.mxu0 0.0
        %1234 = vmatpush1.msra.mxu0 0.0
        %1235 = vmatprep.subr.mxu0 0.0
        %1236 = vmatpush1.msra.mxu0 0.0
        %1237 = vmatprep.subr.mxu0 0.0
        %1238 = vmatpush1.msra.mxu0 0.0
        %1239 = vmatprep.subr.mxu0 0.0
        %1240 = vmatpush1.msra.mxu0 0.0
        %1241 = vmatprep.subr.mxu0 0.0
        %1242 = vmatpush1.msra.mxu0 0.0
        %1243 = vmatprep.subr.mxu0 0.0
        %1244 = vmatpush1.msra.mxu0 0.0
        %1245 = vmatprep.subr.mxu0 0.0
        %1246 = vmatpush1.msra.mxu0 0.0
        %1247 = vmatprep.subr.mxu0 0.0
        %1248 = vmatpush1.msra.mxu0 0.0
        %1249 = vmatprep.subr.mxu0 0.0
        %1250 = vmatpush1.msra.mxu0 0.0
        %1251 = vmatprep.subr.mxu0 0.0
        %1252 = vmatpush1.msra.mxu0 0.0
        %1253 = vmatprep.subr.mxu0 0.0
        %1254 = vmatpush1.msra.mxu0 0.0
        %1255 = vmatprep.mubr.f32.mxu0 0.0
        %1256 = vmatmul.mubr.f32.gmra.mrb[0].mxu0 %v1186
        %v1257 = vpop.f32.mrb[0].mxu0
        %v1258 = vadd.f32 0.0, %v1257
        %v1259 = vpop.f32.mrb[0].mxu0
        %1260 = vmatprep.mubr.f32.mxu0 0.0
        %1261 = vmatmul.mubr.f32.gmra.mrb[0].mxu0 %v1189
        %v1262 = vpop.f32.mrb[0].mxu0
        %v1263 = vadd.f32 0.0, %v1262
        %v1264 = vpop.f32.mrb[0].mxu0
        %1265 = vdwg.mxu0
        %v1266 = vmul.f32 %v1258, %v840
        %v1267 = vmul.f32 %v1263, %v845
        %v1268 = vsel %vm903, %v1267, 0.0
        %v1269 = vadd.f32 %v1266, %v1268
        %v1270 = vrot.slane %v1269, 4
        %v1271 = vadd.f32 %v1269, %v1270
        %v1272 = vrot.slane %v1271, 2
        %v1273 = vadd.f32 %v1271, %v1272
        %v1274 = vrot.slane %v1273, 1
        %v1275 = vadd.f32 %v1273, %v1274
        %v1276 = vsub.f32 %v840, %v1275
        %v1277 = vsub.f32 %v845, %v1275
        %v1278 = vmul.f32 %v1276, %v1276
        %v1279 = vmul.f32 %v1277, %v1277
        %v1280 = vmul.f32 %v1258, %v1278
        %v1281 = vmul.f32 %v1263, %v1279
        %v1282 = vsel %vm903, %v1281, 0.0
        %v1283 = vadd.f32 %v1280, %v1282
        %v1284 = vrot.slane %v1283, 4
        %v1285 = vadd.f32 %v1283, %v1284
        %v1286 = vrot.slane %v1285, 2
        %v1287 = vadd.f32 %v1285, %v1286
        %v1288 = vrot.slane %v1287, 1
        %v1289 = vadd.f32 %v1287, %v1288
        %v1290 = vadd.f32 %v1289, 1e-05
        %v1291 = vrcp.pop %v1290
        %v1292 = vmul.f32 %v1291, 0.5
        %v1293 = vmul.f32 %v1278, %v1292
        %v1294 = vmul.f32 %v1279, %v1292
        %v1295 = vlog2.pop %v1290
        %v1296 = vmul.f32 %v1295, 0.6931472
        %v1297 = vmul.f32 %v1296, 0.5
        %v1298 = vadd.f32 %v1293, %v1297
        %v1299 = vadd.f32 %v1294, %v1297
        %1300 = vmatprep.subr.mxu0 0.0
        %1301 = vmatpush1.xpose.msra.mxu0 %v755
        %1302 = vmatprep.subr.mxu0 0.0
        %1303 = vmatpush1.xpose.msra.mxu0 0.0
        %1304 = vmatprep.subr.mxu0 0.0
        %1305 = vmatpush1.xpose.msra.mxu0 0.0
        %1306 = vmatprep.subr.mxu0 0.0
        %1307 = vmatpush1.xpose.msra.mxu0 0.0
        %1308 = vmatprep.subr.mxu0 0.0
        %1309 = vmatpush1.xpose.msra.mxu0 0.0
        %1310 = vmatprep.subr.mxu0 0.0
        %1311 = vmatpush1.xpose.msra.mxu0 0.0
        %1312 = vmatprep.subr.mxu0 0.0
        %1313 = vmatpush1.xpose.msra.mxu0 0.0
        %1314 = vmatprep.subr.mxu0 0.0
        %1315 = vmatpush1.xpose.msra.mxu0 0.0
        %1316 = vmatprep.subr.mxu0 0.0
        %1317 = vmatpush1.xpose.msra.mxu0 0.0
        %1318 = vmatprep.subr.mxu0 0.0
        %1319 = vmatpush1.xpose.msra.mxu0 0.0
        %1320 = vmatprep.subr.mxu0 0.0
        %1321 = vmatpush1.xpose.msra.mxu0 0.0
        %1322 = vmatprep.subr.mxu0 0.0
        %1323 = vmatpush1.xpose.msra.mxu0 0.0
        %1324 = vmatprep.subr.mxu0 0.0
        %1325 = vmatpush1.xpose.msra.mxu0 0.0
        %1326 = vmatprep.subr.mxu0 0.0
        %1327 = vmatpush1.xpose.msra.mxu0 0.0
        %1328 = vmatprep.subr.mxu0 0.0
        %1329 = vmatpush1.xpose.msra.mxu0 0.0
        %1330 = vmatprep.subr.mxu0 0.0
        %1331 = vmatpush1.xpose.msra.mxu0 0.0
        %1332 = vmatprep.subr.mxu0 0.0
        %1333 = vmatpush1.xpose.msra.mxu0 0.0
        %1334 = vmatprep.subr.mxu0 0.0
        %1335 = vmatpush1.xpose.msra.mxu0 0.0
        %1336 = vmatprep.subr.mxu0 0.0
        %1337 = vmatpush1.xpose.msra.mxu0 0.0
        %1338 = vmatprep.subr.mxu0 0.0
        %1339 = vmatpush1.xpose.msra.mxu0 0.0
        %1340 = vmatprep.subr.mxu0 0.0
        %1341 = vmatpush1.xpose.msra.mxu0 0.0
        %1342 = vmatprep.subr.mxu0 0.0
        %1343 = vmatpush1.xpose.msra.mxu0 0.0
        %1344 = vmatprep.subr.mxu0 0.0
        %1345 = vmatpush1.xpose.msra.mxu0 0.0
        %1346 = vmatprep.subr.mxu0 0.0
        %1347 = vmatpush1.xpose.msra.mxu0 0.0
        %1348 = vmatprep.subr.mxu0 0.0
        %1349 = vmatpush1.xpose.msra.mxu0 0.0
        %1350 = vmatprep.subr.mxu0 0.0
        %1351 = vmatpush1.xpose.msra.mxu0 0.0
        %1352 = vmatprep.subr.mxu0 0.0
        %1353 = vmatpush1.xpose.msra.mxu0 0.0
        %1354 = vmatprep.subr.mxu0 0.0
        %1355 = vmatpush1.xpose.msra.mxu0 0.0
        %1356 = vmatprep.subr.mxu0 0.0
        %1357 = vmatpush1.xpose.msra.mxu0 0.0
        %1358 = vmatprep.subr.mxu0 0.0
        %1359 = vmatpush1.xpose.msra.mxu0 0.0
        %1360 = vmatprep.subr.mxu0 0.0
        %1361 = vmatpush1.xpose.msra.mxu0 0.0
        %1362 = vmatprep.subr.mxu0 0.0
        %1363 = vmatpush1.xpose.msra.mxu0 0.0
        %1364 = vmatprep.mubr.f32.mxu0 0.0
        %1365 = vmatmul.mubr.f32.gmra.mrb[0].mxu0 %v1298
        %v1366 = vpop.f32.mrb[0].mxu0
        %v1367 = vadd.f32 0.0, %v1366
        %v1368 = vpop.f32.mrb[0].mxu0
        %1369 = vmatprep.mubr.f32.mxu0 0.0
        %1370 = vmatmul.mubr.f32.gmra.mrb[0].mxu0 %v1299
        %v1371 = vpop.f32.mrb[0].mxu0
        %v1372 = vadd.f32 0.0, %v1371
        %v1373 = vpop.f32.mrb[0].mxu0
        %1374 = vdwg.mxu0
        %vm1375 = vcmp.ge.f32.partialorder %v1171, 0.0
        %v1376 = vsub.f32 0.0, %v1171
        %v1377 = vmul.f32 %v1376, 1.442695
        %v1378 = vpow.pop %v1377
        %v1379 = vadd.f32 %v1378, 1.0
        %v1380 = vlog2.pop %v1379
        %v1381 = vmul.f32 %v1380, 0.6931472
        %v1382 = vsub.f32 0.0, %v1381
        %v1383 = vmul.f32 %v1171, 1.442695
        %v1384 = vpow.pop %v1383
        %v1385 = vadd.f32 %v1384, 1.0
        %v1386 = vlog2.pop %v1385
        %v1387 = vmul.f32 %v1386, 0.6931472
        %v1388 = vsub.f32 %v1171, %v1387
        %v1389 = vsel %vm1375, %v1382, %v1388
        %v1390 = vsub.f32 %v1389, %v1367
        %v1391 = vsub.f32 %v1389, %v1372
        %v1392 = vsel %vm874, %v1390, -inf
        %1393 = vmax.xlane.f32.xlu0 %v1392
        %v1394 = vpop.xlane.xlu0 %1393
        %v1395 = vsel %vm876, %v1391, -inf
        %1396 = vmax.xlane.f32.xlu0 %v1395
        %v1397 = vpop.xlane.xlu0 %1396
        %v1398 = vsub.f32 %v1390, %v1394
        %v1399 = vsub.f32 %v1391, %v1397
        %v1400 = vmul.f32 %v1398, 1.442695
        %v1401 = vpow.pop %v1400
        %v1402 = vmul.f32 %v1399, 1.442695
        %v1403 = vpow.pop %v1402
        %v1404 = vsel %vm874, %v1401, 0.0
        %1405 = vadd.xlane.f32.xlu0 %v1404
        %v1406 = vpop.xlane.xlu0 %1405
        %v1407 = vsel %vm876, %v1403, 0.0
        %1408 = vadd.xlane.f32.xlu0 %v1407
        %v1409 = vpop.xlane.xlu0 %1408
        %v1410 = vrcp.pop %v1406
        %v1411 = vmul.f32 %v1401, %v1410
        %v1412 = vrcp.pop %v1409
        %v1413 = vmul.f32 %v1403, %v1412
        %v1414 = vmul.f32 %v855, %v1411
        %v1415 = vmul.f32 %v860, %v1413
        %v1416 = vsub.f32 %v855, %v1414
        %v1417 = vsub.f32 %v860, %v1415
        %v1418 = vmul.f32 %v870, %v1414
        %v1419 = vmul.f32 %v870, %v1415
        %v1420 = vsel %vm874, %v1418, 0.0
        %v1421 = vsel %vm876, %v1419, 0.0
        %v1422 = vadd.f32 %v1420, %v1421
        %v1423 = vrot.slane %v1422, 4
        %v1424 = vadd.f32 %v1422, %v1423
        %v1425 = vrot.slane %v1424, 2
        %v1426 = vadd.f32 %v1424, %v1425
        %v1427 = vrot.slane %v1426, 1
        %v1428 = vadd.f32 %v1426, %v1427
        %v1429 = vmul.f32 %v889, %v1416
        %v1430 = vmul.f32 %v889, %v1417
        %v1431 = vsel %vm874, %v1429, 0.0
        %v1432 = vsel %vm876, %v1430, 0.0
        %v1433 = vadd.f32 %v1431, %v1432
        %v1434 = vrot.slane %v1433, 4
        %v1435 = vadd.f32 %v1433, %v1434
        %v1436 = vrot.slane %v1435, 2
        %v1437 = vadd.f32 %v1435, %v1436
        %v1438 = vrot.slane %v1437, 1
        %v1439 = vadd.f32 %v1437, %v1438
        %v1440 = vsub.f32 %v1428, %v1439
        %v1441 = vsel %vm874, %v1414, 0.0
        %v1442 = vsel %vm876, %v1415, 0.0
        %v1443 = vadd.f32 %v1441, %v1442
        %v1444 = vrot.slane %v1443, 4
        %v1445 = vadd.f32 %v1443, %v1444
        %v1446 = vrot.slane %v1445, 2
        %v1447 = vadd.f32 %v1445, %v1446
        %v1448 = vrot.slane %v1447, 1
        %v1449 = vadd.f32 %v1447, %v1448
        %v1450 = vadd.f32 %v1449, 1e-05
        %v1451 = vrcp.pop %v1450
        %v1452 = vmul.f32 %v1414, %v1451
        %v1453 = vmul.f32 %v1415, %v1451
        %v1455 = vsel %vm874, %v1452, 0
        %v1458 = vsel %vm874, %v1453, 0
        %1460 = vmatprep.subr.mxu0 0.0
        %1461 = vmatpush1.msra.mxu0 %v755
        %1462 = vmatprep.subr.mxu0 0.0
        %1463 = vmatpush1.msra.mxu0 0.0
        %1464 = vmatprep.subr.mxu0 0.0
        %1465 = vmatpush1.msra.mxu0 0.0
        %1466 = vmatprep.subr.mxu0 0.0
        %1467 = vmatpush1.msra.mxu0 0.0
        %1468 = vmatprep.subr.mxu0 0.0
        %1469 = vmatpush1.msra.mxu0 0.0
        %1470 = vmatprep.subr.mxu0 0.0
        %1471 = vmatpush1.msra.mxu0 0.0
        %1472 = vmatprep.subr.mxu0 0.0
        %1473 = vmatpush1.msra.mxu0 0.0
        %1474 = vmatprep.subr.mxu0 0.0
        %1475 = vmatpush1.msra.mxu0 0.0
        %1476 = vmatprep.subr.mxu0 0.0
        %1477 = vmatpush1.msra.mxu0 0.0
        %1478 = vmatprep.subr.mxu0 0.0
        %1479 = vmatpush1.msra.mxu0 0.0
        %1480 = vmatprep.subr.mxu0 0.0
        %1481 = vmatpush1.msra.mxu0 0.0
        %1482 = vmatprep.subr.mxu0 0.0
        %1483 = vmatpush1.msra.mxu0 0.0
        %1484 = vmatprep.subr.mxu0 0.0
        %1485 = vmatpush1.msra.mxu0 0.0
        %1486 = vmatprep.subr.mxu0 0.0
        %1487 = vmatpush1.msra.mxu0 0.0
        %1488 = vmatprep.subr.mxu0 0.0
        %1489 = vmatpush1.msra.mxu0 0.0
        %1490 = vmatprep.subr.mxu0 0.0
        %1491 = vmatpush1.msra.mxu0 0.0
        %1492 = vmatprep.subr.mxu0 0.0
        %1493 = vmatpush1.msra.mxu0 0.0
        %1494 = vmatprep.subr.mxu0 0.0
        %1495 = vmatpush1.msra.mxu0 0.0
        %1496 = vmatprep.subr.mxu0 0.0
        %1497 = vmatpush1.msra.mxu0 0.0
        %1498 = vmatprep.subr.mxu0 0.0
        %1499 = vmatpush1.msra.mxu0 0.0
        %1500 = vmatprep.subr.mxu0 0.0
        %1501 = vmatpush1.msra.mxu0 0.0
        %1502 = vmatprep.subr.mxu0 0.0
        %1503 = vmatpush1.msra.mxu0 0.0
        %1504 = vmatprep.subr.mxu0 0.0
        %1505 = vmatpush1.msra.mxu0 0.0
        %1506 = vmatprep.subr.mxu0 0.0
        %1507 = vmatpush1.msra.mxu0 0.0
        %1508 = vmatprep.subr.mxu0 0.0
        %1509 = vmatpush1.msra.mxu0 0.0
        %1510 = vmatprep.subr.mxu0 0.0
        %1511 = vmatpush1.msra.mxu0 0.0
        %1512 = vmatprep.subr.mxu0 0.0
        %1513 = vmatpush1.msra.mxu0 0.0
        %1514 = vmatprep.subr.mxu0 0.0
        %1515 = vmatpush1.msra.mxu0 0.0
        %1516 = vmatprep.subr.mxu0 0.0
        %1517 = vmatpush1.msra.mxu0 0.0
        %1518 = vmatprep.subr.mxu0 0.0
        %1519 = vmatpush1.msra.mxu0 0.0
        %1520 = vmatprep.subr.mxu0 0.0
        %1521 = vmatpush1.msra.mxu0 0.0
        %1522 = vmatprep.subr.mxu0 0.0
        %1523 = vmatpush1.msra.mxu0 0.0
        %1524 = vmatprep.mubr.f32.mxu0 0.0
        %1525 = vmatmul.mubr.f32.gmra.mrb[0].mxu0 %v1455
        %v1526 = vpop.f32.mrb[0].mxu0
        %v1527 = vadd.f32 0.0, %v1526
        %v1528 = vpop.f32.mrb[0].mxu0
        %1529 = vmatprep.mubr.f32.mxu0 0.0
        %1530 = vmatmul.mubr.f32.gmra.mrb[0].mxu0 %v1458
        %v1531 = vpop.f32.mrb[0].mxu0
        %v1532 = vadd.f32 0.0, %v1531
        %v1533 = vpop.f32.mrb[0].mxu0
        %1534 = vdwg.mxu0
        %v1535 = vmul.f32 %v1527, %v840
        %v1536 = vmul.f32 %v1532, %v845
        %v1537 = vsel %vm903, %v1536, 0.0
        %v1538 = vadd.f32 %v1535, %v1537
        %v1539 = vrot.slane %v1538, 4
        %v1540 = vadd.f32 %v1538, %v1539
        %v1541 = vrot.slane %v1540, 2
        %v1542 = vadd.f32 %v1540, %v1541
        %v1543 = vrot.slane %v1542, 1
        %v1544 = vadd.f32 %v1542, %v1543
        %v1545 = vsub.f32 0.0, %v1440
        %v1546 = vmul.f32 %v1545, 1.442695
        %v1547 = vpow.pop %v1546
        %v1548 = vadd.f32 %v1547, 1.0
        %v1549 = vrcp.pop %v1548
        %v1550 = vmul.f32 1.0, %v1549
        %vm1551 = vcmp.eq.s32.totalorder %v748, %v746
        %v1552 = vsel %vm1551, 1.0, 0.0
        %v1553 = vmul.f32 %v1552, %v1550
        %v1554 = vsel %vm874, %v1553, 0.0
        %1555 = vadd.xlane.f32.xlu0 %v1554
        %v1556 = vpop.xlane.xlu0 %1555
        %v1557 = vmul.f32 %v755, %v1544
        %v1558 = vld [vmem:[%s11] sm:$0xff]
        %v1559 = vld [vmem:[%s11 + $0x8] sm:$0xff]
        %v1560 = vld [vmem:[%s11 + $0x10] sm:$0xff]
        %v1561 = vld [vmem:[%s11 + $0x18] sm:$0xff]
        %v1562 = vld [vmem:[%s11 + $0x20] sm:$0xff]
        %v1563 = vld [vmem:[%s11 + $0x28] sm:$0xff]
        %v1564 = vld [vmem:[%s11 + $0x30] sm:$0xff]
        %v1565 = vld [vmem:[%s11 + $0x38] sm:$0xff]
        %v1566 = vld [vmem:[%s11 + $0x40] sm:$0xff]
        %v1567 = vld [vmem:[%s11 + $0x48] sm:$0xff]
        %v1568 = vld [vmem:[%s11 + $0x50] sm:$0xff]
        %v1569 = vld [vmem:[%s11 + $0x58] sm:$0xff]
        %v1570 = vld [vmem:[%s11 + $0x60] sm:$0xff]
        %v1571 = vld [vmem:[%s11 + $0x68] sm:$0xff]
        %v1572 = vld [vmem:[%s11 + $0x70] sm:$0xff]
        %v1573 = vld [vmem:[%s11 + $0x78] sm:$0xff]
        %v1574 = vld [vmem:[%s12] sm:$0xff]
        %1575 = vmatprep.subr.mxu0 0.0
        %1576 = vmatpush1.msra.mxu0 %v1558
        %1577 = vmatprep.subr.mxu0 0.0
        %1578 = vmatpush1.msra.mxu0 %v1559
        %1579 = vmatprep.subr.mxu0 0.0
        %1580 = vmatpush1.msra.mxu0 %v1560
        %1581 = vmatprep.subr.mxu0 0.0
        %1582 = vmatpush1.msra.mxu0 %v1561
        %1583 = vmatprep.subr.mxu0 0.0
        %1584 = vmatpush1.msra.mxu0 %v1562
        %1585 = vmatprep.subr.mxu0 0.0
        %1586 = vmatpush1.msra.mxu0 %v1563
        %1587 = vmatprep.subr.mxu0 0.0
        %1588 = vmatpush1.msra.mxu0 %v1564
        %1589 = vmatprep.subr.mxu0 0.0
        %1590 = vmatpush1.msra.mxu0 %v1565
        %1591 = vmatprep.subr.mxu0 0.0
        %1592 = vmatpush1.msra.mxu0 %v1566
        %1593 = vmatprep.subr.mxu0 0.0
        %1594 = vmatpush1.msra.mxu0 %v1567
        %1595 = vmatprep.subr.mxu0 0.0
        %1596 = vmatpush1.msra.mxu0 %v1568
        %1597 = vmatprep.subr.mxu0 0.0
        %1598 = vmatpush1.msra.mxu0 %v1569
        %1599 = vmatprep.subr.mxu0 0.0
        %1600 = vmatpush1.msra.mxu0 %v1570
        %1601 = vmatprep.subr.mxu0 0.0
        %1602 = vmatpush1.msra.mxu0 %v1571
        %1603 = vmatprep.subr.mxu0 0.0
        %1604 = vmatpush1.msra.mxu0 %v1572
        %1605 = vmatprep.subr.mxu0 0.0
        %1606 = vmatpush1.msra.mxu0 %v1573
        %1607 = vmatprep.subr.mxu0 0.0
        %1608 = vmatpush1.msra.mxu0 0.0
        %1609 = vmatprep.subr.mxu0 0.0
        %1610 = vmatpush1.msra.mxu0 0.0
        %1611 = vmatprep.subr.mxu0 0.0
        %1612 = vmatpush1.msra.mxu0 0.0
        %1613 = vmatprep.subr.mxu0 0.0
        %1614 = vmatpush1.msra.mxu0 0.0
        %1615 = vmatprep.subr.mxu0 0.0
        %1616 = vmatpush1.msra.mxu0 0.0
        %1617 = vmatprep.subr.mxu0 0.0
        %1618 = vmatpush1.msra.mxu0 0.0
        %1619 = vmatprep.subr.mxu0 0.0
        %1620 = vmatpush1.msra.mxu0 0.0
        %1621 = vmatprep.subr.mxu0 0.0
        %1622 = vmatpush1.msra.mxu0 0.0
        %1623 = vmatprep.subr.mxu0 0.0
        %1624 = vmatpush1.msra.mxu0 0.0
        %1625 = vmatprep.subr.mxu0 0.0
        %1626 = vmatpush1.msra.mxu0 0.0
        %1627 = vmatprep.subr.mxu0 0.0
        %1628 = vmatpush1.msra.mxu0 0.0
        %1629 = vmatprep.subr.mxu0 0.0
        %1630 = vmatpush1.msra.mxu0 0.0
        %1631 = vmatprep.subr.mxu0 0.0
        %1632 = vmatpush1.msra.mxu0 0.0
        %1633 = vmatprep.subr.mxu0 0.0
        %1634 = vmatpush1.msra.mxu0 0.0
        %1635 = vmatprep.subr.mxu0 0.0
        %1636 = vmatpush1.msra.mxu0 0.0
        %1637 = vmatprep.subr.mxu0 0.0
        %1638 = vmatpush1.msra.mxu0 0.0
        %1639 = vmatprep.mubr.f32.mxu0 0.0
        %1640 = vmatmul.mubr.f32.gmra.mrb[0].mxu0 %v1557
        %v1641 = vpop.f32.mrb[0].mxu0
        %v1642 = vadd.f32 %v1574, %v1641
        %v1643 = vpop.f32.mrb[0].mxu0
        %1644 = vdwg.mxu0
        %v1645 = vld [vmem:[%s13] sm:$0xff]
        %v1646 = vld [vmem:[%s14] sm:$0xff]
        %v1647 = vmul.f32 %v1556, 0.25
        %v1648 = vsub.f32 %v1556, %v1647
        %v1649 = vmul.f32 %v1645, %v1647
        %vm1650 = vcmask 31744
        %v1651 = vsel %vm1650, %v1649, 0.0
        %v1652 = vrot.slane %v1651, 4
        %v1653 = vadd.f32 %v1651, %v1652
        %v1654 = vrot.slane %v1653, 2
        %v1655 = vadd.f32 %v1653, %v1654
        %v1656 = vrot.slane %v1655, 1
        %v1657 = vadd.f32 %v1655, %v1656
        %v1658 = vmul.f32 %v1646, %v1648
        %v1659 = vsel %vm1650, %v1658, 0.0
        %v1660 = vrot.slane %v1659, 4
        %v1661 = vadd.f32 %v1659, %v1660
        %v1662 = vrot.slane %v1661, 2
        %v1663 = vadd.f32 %v1661, %v1662
        %v1664 = vrot.slane %v1663, 1
        %v1665 = vadd.f32 %v1663, %v1664
        %v1666 = vsub.f32 %v1657, %v1665
        %v1667 = vrot.slane %v1647, 4
        %v1668 = vadd.f32 %v1647, %v1667
        %v1669 = vrot.slane %v1668, 2
        %v1670 = vadd.f32 %v1668, %v1669
        %v1671 = vrot.slane %v1670, 1
        %v1672 = vadd.f32 %v1670, %v1671
        %v1673 = vadd.f32 %v1672, 1e-05
        %v1674 = vrcp.pop %v1673
        %v1675 = vmul.f32 %v1647, %v1674
        %v1677 = vsel %vm1650, %v1675, 0
        %v1680 = vsel %vm903, %v755, 0
        %1682 = vmatprep.subr.mxu0 0.0
        %1683 = vmatpush1.msra.mxu0 %v1680
        %1684 = vmatprep.subr.mxu0 0.0
        %1685 = vmatpush1.msra.mxu0 0.0
        %1686 = vmatprep.subr.mxu0 0.0
        %1687 = vmatpush1.msra.mxu0 0.0
        %1688 = vmatprep.subr.mxu0 0.0
        %1689 = vmatpush1.msra.mxu0 0.0
        %1690 = vmatprep.subr.mxu0 0.0
        %1691 = vmatpush1.msra.mxu0 0.0
        %1692 = vmatprep.subr.mxu0 0.0
        %1693 = vmatpush1.msra.mxu0 0.0
        %1694 = vmatprep.subr.mxu0 0.0
        %1695 = vmatpush1.msra.mxu0 0.0
        %1696 = vmatprep.subr.mxu0 0.0
        %1697 = vmatpush1.msra.mxu0 0.0
        %1698 = vmatprep.subr.mxu0 0.0
        %1699 = vmatpush1.msra.mxu0 0.0
        %1700 = vmatprep.subr.mxu0 0.0
        %1701 = vmatpush1.msra.mxu0 0.0
        %1702 = vmatprep.subr.mxu0 0.0
        %1703 = vmatpush1.msra.mxu0 0.0
        %1704 = vmatprep.subr.mxu0 0.0
        %1705 = vmatpush1.msra.mxu0 0.0
        %1706 = vmatprep.subr.mxu0 0.0
        %1707 = vmatpush1.msra.mxu0 0.0
        %1708 = vmatprep.subr.mxu0 0.0
        %1709 = vmatpush1.msra.mxu0 0.0
        %1710 = vmatprep.subr.mxu0 0.0
        %1711 = vmatpush1.msra.mxu0 0.0
        %1712 = vmatprep.subr.mxu0 0.0
        %1713 = vmatpush1.msra.mxu0 0.0
        %1714 = vmatprep.subr.mxu0 0.0
        %1715 = vmatpush1.msra.mxu0 0.0
        %1716 = vmatprep.subr.mxu0 0.0
        %1717 = vmatpush1.msra.mxu0 0.0
        %1718 = vmatprep.subr.mxu0 0.0
        %1719 = vmatpush1.msra.mxu0 0.0
        %1720 = vmatprep.subr.mxu0 0.0
        %1721 = vmatpush1.msra.mxu0 0.0
        %1722 = vmatprep.subr.mxu0 0.0
        %1723 = vmatpush1.msra.mxu0 0.0
        %1724 = vmatprep.subr.mxu0 0.0
        %1725 = vmatpush1.msra.mxu0 0.0
        %1726 = vmatprep.subr.mxu0 0.0
        %1727 = vmatpush1.msra.mxu0 0.0
        %1728 = vmatprep.subr.mxu0 0.0
        %1729 = vmatpush1.msra.mxu0 0.0
        %1730 = vmatprep.subr.mxu0 0.0
        %1731 = vmatpush1.msra.mxu0 0.0
        %1732 = vmatprep.subr.mxu0 0.0
        %1733 = vmatpush1.msra.mxu0 0.0
        %1734 = vmatprep.subr.mxu0 0.0
        %1735 = vmatpush1.msra.mxu0 0.0
        %1736 = vmatprep.subr.mxu0 0.0
        %1737 = vmatpush1.msra.mxu0 0.0
        %1738 = vmatprep.subr.mxu0 0.0
        %1739 = vmatpush1.msra.mxu0 0.0
        %1740 = vmatprep.subr.mxu0 0.0
        %1741 = vmatpush1.msra.mxu0 0.0
        %1742 = vmatprep.subr.mxu0 0.0
        %1743 = vmatpush1.msra.mxu0 0.0
        %1744 = vmatprep.subr.mxu0 0.0
        %1745 = vmatpush1.msra.mxu0 0.0
        %1746 = vmatprep.mubr.f32.mxu0 0.0
        %1747 = vmatmul.mubr.f32.gmra.mrb[0].mxu0 %v1677
        %v1748 = vpop.f32.mrb[0].mxu0
        %v1749 = vadd.f32 0.0, %v1748
        %v1750 = vpop.f32.mrb[0].mxu0
        %1751 = vdwg.mxu0
        %v1752 = vmul.f32 %v1749, %v1642
        %vm1753 = vcmask 523264
        %v1754 = vsel %vm1753, %v1752, 0.0
        %v1755 = vrot.slane %v1754, 4
        %v1756 = vadd.f32 %v1754, %v1755
        %v1757 = vrot.slane %v1756, 2
        %v1758 = vadd.f32 %v1756, %v1757
        %v1759 = vrot.slane %v1758, 1
        %v1760 = vadd.f32 %v1758, %v1759
        %v1761 = vsub.f32 %v1642, %v1760
        %v1762 = vmul.f32 %v1761, %v1761
        %v1763 = vmul.f32 %v1749, %v1762
        %v1764 = vsel %vm1753, %v1763, 0.0
        %v1765 = vrot.slane %v1764, 4
        %v1766 = vadd.f32 %v1764, %v1765
        %v1767 = vrot.slane %v1766, 2
        %v1768 = vadd.f32 %v1766, %v1767
        %v1769 = vrot.slane %v1768, 1
        %v1770 = vadd.f32 %v1768, %v1769
        %v1771 = vadd.f32 %v1770, 1e-05
        %v1772 = vrcp.pop %v1771
        %v1773 = vmul.f32 %v1772, 0.5
        %v1774 = vmul.f32 %v1762, %v1773
        %v1775 = vlog2.pop %v1771
        %v1776 = vmul.f32 %v1775, 0.6931472
        %v1777 = vmul.f32 %v1776, 0.5
        %v1778 = vadd.f32 %v1774, %v1777
        %v1780 = vsel %vm1753, %v1778, 0
        %v1782 = vsel %vm1753, %v755, 0
        %1784 = vmatprep.subr.mxu0 0.0
        %1785 = vmatpush1.xpose.msra.mxu0 %v1782
        %1786 = vmatprep.subr.mxu0 0.0
        %1787 = vmatpush1.xpose.msra.mxu0 0.0
        %1788 = vmatprep.subr.mxu0 0.0
        %1789 = vmatpush1.xpose.msra.mxu0 0.0
        %1790 = vmatprep.subr.mxu0 0.0
        %1791 = vmatpush1.xpose.msra.mxu0 0.0
        %1792 = vmatprep.subr.mxu0 0.0
        %1793 = vmatpush1.xpose.msra.mxu0 0.0
        %1794 = vmatprep.subr.mxu0 0.0
        %1795 = vmatpush1.xpose.msra.mxu0 0.0
        %1796 = vmatprep.subr.mxu0 0.0
        %1797 = vmatpush1.xpose.msra.mxu0 0.0
        %1798 = vmatprep.subr.mxu0 0.0
        %1799 = vmatpush1.xpose.msra.mxu0 0.0
        %1800 = vmatprep.subr.mxu0 0.0
        %1801 = vmatpush1.xpose.msra.mxu0 0.0
        %1802 = vmatprep.subr.mxu0 0.0
        %1803 = vmatpush1.xpose.msra.mxu0 0.0
        %1804 = vmatprep.subr.mxu0 0.0
        %1805 = vmatpush1.xpose.msra.mxu0 0.0
        %1806 = vmatprep.subr.mxu0 0.0
        %1807 = vmatpush1.xpose.msra.mxu0 0.0
        %1808 = vmatprep.subr.mxu0 0.0
        %1809 = vmatpush1.xpose.msra.mxu0 0.0
        %1810 = vmatprep.subr.mxu0 0.0
        %1811 = vmatpush1.xpose.msra.mxu0 0.0
        %1812 = vmatprep.subr.mxu0 0.0
        %1813 = vmatpush1.xpose.msra.mxu0 0.0
        %1814 = vmatprep.subr.mxu0 0.0
        %1815 = vmatpush1.xpose.msra.mxu0 0.0
        %1816 = vmatprep.subr.mxu0 0.0
        %1817 = vmatpush1.xpose.msra.mxu0 0.0
        %1818 = vmatprep.subr.mxu0 0.0
        %1819 = vmatpush1.xpose.msra.mxu0 0.0
        %1820 = vmatprep.subr.mxu0 0.0
        %1821 = vmatpush1.xpose.msra.mxu0 0.0
        %1822 = vmatprep.subr.mxu0 0.0
        %1823 = vmatpush1.xpose.msra.mxu0 0.0
        %1824 = vmatprep.subr.mxu0 0.0
        %1825 = vmatpush1.xpose.msra.mxu0 0.0
        %1826 = vmatprep.subr.mxu0 0.0
        %1827 = vmatpush1.xpose.msra.mxu0 0.0
        %1828 = vmatprep.subr.mxu0 0.0
        %1829 = vmatpush1.xpose.msra.mxu0 0.0
        %1830 = vmatprep.subr.mxu0 0.0
        %1831 = vmatpush1.xpose.msra.mxu0 0.0
        %1832 = vmatprep.subr.mxu0 0.0
        %1833 = vmatpush1.xpose.msra.mxu0 0.0
        %1834 = vmatprep.subr.mxu0 0.0
        %1835 = vmatpush1.xpose.msra.mxu0 0.0
        %1836 = vmatprep.subr.mxu0 0.0
        %1837 = vmatpush1.xpose.msra.mxu0 0.0
        %1838 = vmatprep.subr.mxu0 0.0
        %1839 = vmatpush1.xpose.msra.mxu0 0.0
        %1840 = vmatprep.subr.mxu0 0.0
        %1841 = vmatpush1.xpose.msra.mxu0 0.0
        %1842 = vmatprep.subr.mxu0 0.0
        %1843 = vmatpush1.xpose.msra.mxu0 0.0
        %1844 = vmatprep.subr.mxu0 0.0
        %1845 = vmatpush1.xpose.msra.mxu0 0.0
        %1846 = vmatprep.subr.mxu0 0.0
        %1847 = vmatpush1.xpose.msra.mxu0 0.0
        %1848 = vmatprep.mubr.f32.mxu0 0.0
        %1849 = vmatmul.mubr.f32.gmra.mrb[0].mxu0 %v1780
        %v1850 = vpop.f32.mrb[0].mxu0
        %v1851 = vadd.f32 0.0, %v1850
        %v1852 = vpop.f32.mrb[0].mxu0
        %1853 = vdwg.mxu0
        %vm1854 = vcmp.ge.f32.partialorder %v1666, 0.0
        %v1855 = vsub.f32 0.0, %v1666
        %v1856 = vmul.f32 %v1855, 1.442695
        %v1857 = vpow.pop %v1856
        %v1858 = vadd.f32 %v1857, 1.0
        %v1859 = vlog2.pop %v1858
        %v1860 = vmul.f32 %v1859, 0.6931472
        %v1861 = vsub.f32 0.0, %v1860
        %v1862 = vmul.f32 %v1666, 1.442695
        %v1863 = vpow.pop %v1862
        %v1864 = vadd.f32 %v1863, 1.0
        %v1865 = vlog2.pop %v1864
        %v1866 = vmul.f32 %v1865, 0.6931472
        %v1867 = vsub.f32 %v1666, %v1866
        %v1868 = vsel %vm1854, %v1861, %v1867
        %v1869 = vsub.f32 %v1868, %v1851
        %v1870 = vsel %vm1650, %v1869, -inf
        %1871 = vmax.xlane.f32.xlu0 %v1870
        %v1872 = vpop.xlane.xlu0 %1871
        %v1873 = vsub.f32 %v1869, %v1872
        %v1874 = vmul.f32 %v1873, 1.442695
        %v1875 = vpow.pop %v1874
        %v1876 = vsel %vm1650, %v1875, 0.0
        %1877 = vadd.xlane.f32.xlu0 %v1876
        %v1878 = vpop.xlane.xlu0 %1877
        %v1879 = vrcp.pop %v1878
        %v1880 = vmul.f32 %v1875, %v1879
        %v1881 = vmul.f32 %v1556, %v1880
        %v1882 = vsub.f32 %v1556, %v1881
        %v1883 = vmul.f32 %v1645, %v1881
        %v1884 = vsel %vm1650, %v1883, 0.0
        %v1885 = vrot.slane %v1884, 4
        %v1886 = vadd.f32 %v1884, %v1885
        %v1887 = vrot.slane %v1886, 2
        %v1888 = vadd.f32 %v1886, %v1887
        %v1889 = vrot.slane %v1888, 1
        %v1890 = vadd.f32 %v1888, %v1889
        %v1891 = vmul.f32 %v1646, %v1882
        %v1892 = vsel %vm1650, %v1891, 0.0
        %v1893 = vrot.slane %v1892, 4
        %v1894 = vadd.f32 %v1892, %v1893
        %v1895 = vrot.slane %v1894, 2
        %v1896 = vadd.f32 %v1894, %v1895
        %v1897 = vrot.slane %v1896, 1
        %v1898 = vadd.f32 %v1896, %v1897
        %v1899 = vsub.f32 %v1890, %v1898
        %v1900 = vsel %vm1650, %v1881, 0.0
        %v1901 = vrot.slane %v1900, 4
        %v1902 = vadd.f32 %v1900, %v1901
        %v1903 = vrot.slane %v1902, 2
        %v1904 = vadd.f32 %v1902, %v1903
        %v1905 = vrot.slane %v1904, 1
        %v1906 = vadd.f32 %v1904, %v1905
        %v1907 = vadd.f32 %v1906, 1e-05
        %v1908 = vrcp.pop %v1907
        %v1909 = vmul.f32 %v1881, %v1908
        %v1911 = vsel %vm1650, %v1909, 0
        %1913 = vmatprep.subr.mxu0 0.0
        %1914 = vmatpush1.msra.mxu0 %v1680
        %1915 = vmatprep.subr.mxu0 0.0
        %1916 = vmatpush1.msra.mxu0 0.0
        %1917 = vmatprep.subr.mxu0 0.0
        %1918 = vmatpush1.msra.mxu0 0.0
        %1919 = vmatprep.subr.mxu0 0.0
        %1920 = vmatpush1.msra.mxu0 0.0
        %1921 = vmatprep.subr.mxu0 0.0
        %1922 = vmatpush1.msra.mxu0 0.0
        %1923 = vmatprep.subr.mxu0 0.0
        %1924 = vmatpush1.msra.mxu0 0.0
        %1925 = vmatprep.subr.mxu0 0.0
        %1926 = vmatpush1.msra.mxu0 0.0
        %1927 = vmatprep.subr.mxu0 0.0
        %1928 = vmatpush1.msra.mxu0 0.0
        %1929 = vmatprep.subr.mxu0 0.0
        %1930 = vmatpush1.msra.mxu0 0.0
        %1931 = vmatprep.subr.mxu0 0.0
        %1932 = vmatpush1.msra.mxu0 0.0
        %1933 = vmatprep.subr.mxu0 0.0
        %1934 = vmatpush1.msra.mxu0 0.0
        %1935 = vmatprep.subr.mxu0 0.0
        %1936 = vmatpush1.msra.mxu0 0.0
        %1937 = vmatprep.subr.mxu0 0.0
        %1938 = vmatpush1.msra.mxu0 0.0
        %1939 = vmatprep.subr.mxu0 0.0
        %1940 = vmatpush1.msra.mxu0 0.0
        %1941 = vmatprep.subr.mxu0 0.0
        %1942 = vmatpush1.msra.mxu0 0.0
        %1943 = vmatprep.subr.mxu0 0.0
        %1944 = vmatpush1.msra.mxu0 0.0
        %1945 = vmatprep.subr.mxu0 0.0
        %1946 = vmatpush1.msra.mxu0 0.0
        %1947 = vmatprep.subr.mxu0 0.0
        %1948 = vmatpush1.msra.mxu0 0.0
        %1949 = vmatprep.subr.mxu0 0.0
        %1950 = vmatpush1.msra.mxu0 0.0
        %1951 = vmatprep.subr.mxu0 0.0
        %1952 = vmatpush1.msra.mxu0 0.0
        %1953 = vmatprep.subr.mxu0 0.0
        %1954 = vmatpush1.msra.mxu0 0.0
        %1955 = vmatprep.subr.mxu0 0.0
        %1956 = vmatpush1.msra.mxu0 0.0
        %1957 = vmatprep.subr.mxu0 0.0
        %1958 = vmatpush1.msra.mxu0 0.0
        %1959 = vmatprep.subr.mxu0 0.0
        %1960 = vmatpush1.msra.mxu0 0.0
        %1961 = vmatprep.subr.mxu0 0.0
        %1962 = vmatpush1.msra.mxu0 0.0
        %1963 = vmatprep.subr.mxu0 0.0
        %1964 = vmatpush1.msra.mxu0 0.0
        %1965 = vmatprep.subr.mxu0 0.0
        %1966 = vmatpush1.msra.mxu0 0.0
        %1967 = vmatprep.subr.mxu0 0.0
        %1968 = vmatpush1.msra.mxu0 0.0
        %1969 = vmatprep.subr.mxu0 0.0
        %1970 = vmatpush1.msra.mxu0 0.0
        %1971 = vmatprep.subr.mxu0 0.0
        %1972 = vmatpush1.msra.mxu0 0.0
        %1973 = vmatprep.subr.mxu0 0.0
        %1974 = vmatpush1.msra.mxu0 0.0
        %1975 = vmatprep.subr.mxu0 0.0
        %1976 = vmatpush1.msra.mxu0 0.0
        %1977 = vmatprep.mubr.f32.mxu0 0.0
        %1978 = vmatmul.mubr.f32.gmra.mrb[0].mxu0 %v1911
        %v1979 = vpop.f32.mrb[0].mxu0
        %v1980 = vadd.f32 0.0, %v1979
        %v1981 = vpop.f32.mrb[0].mxu0
        %1982 = vdwg.mxu0
        %v1983 = vmul.f32 %v1980, %v1642
        %v1984 = vsel %vm1753, %v1983, 0.0
        %v1985 = vrot.slane %v1984, 4
        %v1986 = vadd.f32 %v1984, %v1985
        %v1987 = vrot.slane %v1986, 2
        %v1988 = vadd.f32 %v1986, %v1987
        %v1989 = vrot.slane %v1988, 1
        %v1990 = vadd.f32 %v1988, %v1989
        %v1991 = vsub.f32 %v1642, %v1990
        %v1992 = vmul.f32 %v1991, %v1991
        %v1993 = vmul.f32 %v1980, %v1992
        %v1994 = vsel %vm1753, %v1993, 0.0
        %v1995 = vrot.slane %v1994, 4
        %v1996 = vadd.f32 %v1994, %v1995
        %v1997 = vrot.slane %v1996, 2
        %v1998 = vadd.f32 %v1996, %v1997
        %v1999 = vrot.slane %v1998, 1
        %v2000 = vadd.f32 %v1998, %v1999
        %v2001 = vadd.f32 %v2000, 1e-05
        %v2002 = vrcp.pop %v2001
        %v2003 = vmul.f32 %v2002, 0.5
        %v2004 = vmul.f32 %v1992, %v2003
        %v2005 = vlog2.pop %v2001
        %v2006 = vmul.f32 %v2005, 0.6931472
        %v2007 = vmul.f32 %v2006, 0.5
        %v2008 = vadd.f32 %v2004, %v2007
        %v2010 = vsel %vm1753, %v2008, 0
        %2012 = vmatprep.subr.mxu0 0.0
        %2013 = vmatpush1.xpose.msra.mxu0 %v1782
        %2014 = vmatprep.subr.mxu0 0.0
        %2015 = vmatpush1.xpose.msra.mxu0 0.0
        %2016 = vmatprep.subr.mxu0 0.0
        %2017 = vmatpush1.xpose.msra.mxu0 0.0
        %2018 = vmatprep.subr.mxu0 0.0
        %2019 = vmatpush1.xpose.msra.mxu0 0.0
        %2020 = vmatprep.subr.mxu0 0.0
        %2021 = vmatpush1.xpose.msra.mxu0 0.0
        %2022 = vmatprep.subr.mxu0 0.0
        %2023 = vmatpush1.xpose.msra.mxu0 0.0
        %2024 = vmatprep.subr.mxu0 0.0
        %2025 = vmatpush1.xpose.msra.mxu0 0.0
        %2026 = vmatprep.subr.mxu0 0.0
        %2027 = vmatpush1.xpose.msra.mxu0 0.0
        %2028 = vmatprep.subr.mxu0 0.0
        %2029 = vmatpush1.xpose.msra.mxu0 0.0
        %2030 = vmatprep.subr.mxu0 0.0
        %2031 = vmatpush1.xpose.msra.mxu0 0.0
        %2032 = vmatprep.subr.mxu0 0.0
        %2033 = vmatpush1.xpose.msra.mxu0 0.0
        %2034 = vmatprep.subr.mxu0 0.0
        %2035 = vmatpush1.xpose.msra.mxu0 0.0
        %2036 = vmatprep.subr.mxu0 0.0
        %2037 = vmatpush1.xpose.msra.mxu0 0.0
        %2038 = vmatprep.subr.mxu0 0.0
        %2039 = vmatpush1.xpose.msra.mxu0 0.0
        %2040 = vmatprep.subr.mxu0 0.0
        %2041 = vmatpush1.xpose.msra.mxu0 0.0
        %2042 = vmatprep.subr.mxu0 0.0
        %2043 = vmatpush1.xpose.msra.mxu0 0.0
        %2044 = vmatprep.subr.mxu0 0.0
        %2045 = vmatpush1.xpose.msra.mxu0 0.0
        %2046 = vmatprep.subr.mxu0 0.0
        %2047 = vmatpush1.xpose.msra.mxu0 0.0
        %2048 = vmatprep.subr.mxu0 0.0
        %2049 = vmatpush1.xpose.msra.mxu0 0.0
        %2050 = vmatprep.subr.mxu0 0.0
        %2051 = vmatpush1.xpose.msra.mxu0 0.0
        %2052 = vmatprep.subr.mxu0 0.0
        %2053 = vmatpush1.xpose.msra.mxu0 0.0
        %2054 = vmatprep.subr.mxu0 0.0
        %2055 = vmatpush1.xpose.msra.mxu0 0.0
        %2056 = vmatprep.subr.mxu0 0.0
        %2057 = vmatpush1.xpose.msra.mxu0 0.0
        %2058 = vmatprep.subr.mxu0 0.0
        %2059 = vmatpush1.xpose.msra.mxu0 0.0
        %2060 = vmatprep.subr.mxu0 0.0
        %2061 = vmatpush1.xpose.msra.mxu0 0.0
        %2062 = vmatprep.subr.mxu0 0.0
        %2063 = vmatpush1.xpose.msra.mxu0 0.0
        %2064 = vmatprep.subr.mxu0 0.0
        %2065 = vmatpush1.xpose.msra.mxu0 0.0
        %2066 = vmatprep.subr.mxu0 0.0
        %2067 = vmatpush1.xpose.msra.mxu0 0.0
        %2068 = vmatprep.subr.mxu0 0.0
        %2069 = vmatpush1.xpose.msra.mxu0 0.0
        %2070 = vmatprep.subr.mxu0 0.0
        %2071 = vmatpush1.xpose.msra.mxu0 0.0
        %2072 = vmatprep.subr.mxu0 0.0
        %2073 = vmatpush1.xpose.msra.mxu0 0.0
        %2074 = vmatprep.subr.mxu0 0.0
        %2075 = vmatpush1.xpose.msra.mxu0 0.0
        %2076 = vmatprep.mubr.f32.mxu0 0.0
        %2077 = vmatmul.mubr.f32.gmra.mrb[0].mxu0 %v2010
        %v2078 = vpop.f32.mrb[0].mxu0
        %v2079 = vadd.f32 0.0, %v2078
        %v2080 = vpop.f32.mrb[0].mxu0
        %2081 = vdwg.mxu0
        %vm2082 = vcmp.ge.f32.partialorder %v1899, 0.0
        %v2083 = vsub.f32 0.0, %v1899
        %v2084 = vmul.f32 %v2083, 1.442695
        %v2085 = vpow.pop %v2084
        %v2086 = vadd.f32 %v2085, 1.0
        %v2087 = vlog2.pop %v2086
        %v2088 = vmul.f32 %v2087, 0.6931472
        %v2089 = vsub.f32 0.0, %v2088
        %v2090 = vmul.f32 %v1899, 1.442695
        %v2091 = vpow.pop %v2090
        %v2092 = vadd.f32 %v2091, 1.0
        %v2093 = vlog2.pop %v2092
        %v2094 = vmul.f32 %v2093, 0.6931472
        %v2095 = vsub.f32 %v1899, %v2094
        %v2096 = vsel %vm2082, %v2089, %v2095
        %v2097 = vsub.f32 %v2096, %v2079
        %v2098 = vsel %vm1650, %v2097, -inf
        %2099 = vmax.xlane.f32.xlu0 %v2098
        %v2100 = vpop.xlane.xlu0 %2099
        %v2101 = vsub.f32 %v2097, %v2100
        %v2102 = vmul.f32 %v2101, 1.442695
        %v2103 = vpow.pop %v2102
        %v2104 = vsel %vm1650, %v2103, 0.0
        %2105 = vadd.xlane.f32.xlu0 %v2104
        %v2106 = vpop.xlane.xlu0 %2105
        %v2107 = vrcp.pop %v2106
        %v2108 = vmul.f32 %v2103, %v2107
        %v2109 = vmul.f32 %v1556, %v2108
        %v2110 = vsub.f32 %v1556, %v2109
        %v2111 = vmul.f32 %v1645, %v2109
        %v2112 = vsel %vm1650, %v2111, 0.0
        %v2113 = vrot.slane %v2112, 4
        %v2114 = vadd.f32 %v2112, %v2113
        %v2115 = vrot.slane %v2114, 2
        %v2116 = vadd.f32 %v2114, %v2115
        %v2117 = vrot.slane %v2116, 1
        %v2118 = vadd.f32 %v2116, %v2117
        %v2119 = vmul.f32 %v1646, %v2110
        %v2120 = vsel %vm1650, %v2119, 0.0
        %v2121 = vrot.slane %v2120, 4
        %v2122 = vadd.f32 %v2120, %v2121
        %v2123 = vrot.slane %v2122, 2
        %v2124 = vadd.f32 %v2122, %v2123
        %v2125 = vrot.slane %v2124, 1
        %v2126 = vadd.f32 %v2124, %v2125
        %v2127 = vsub.f32 %v2118, %v2126
        %v2128 = vsel %vm1650, %v2109, 0.0
        %v2129 = vrot.slane %v2128, 4
        %v2130 = vadd.f32 %v2128, %v2129
        %v2131 = vrot.slane %v2130, 2
        %v2132 = vadd.f32 %v2130, %v2131
        %v2133 = vrot.slane %v2132, 1
        %v2134 = vadd.f32 %v2132, %v2133
        %v2135 = vadd.f32 %v2134, 1e-05
        %v2136 = vrcp.pop %v2135
        %v2137 = vmul.f32 %v2109, %v2136
        %v2139 = vsel %vm1650, %v2137, 0
        %2141 = vmatprep.subr.mxu0 0.0
        %2142 = vmatpush1.msra.mxu0 %v1680
        %2143 = vmatprep.subr.mxu0 0.0
        %2144 = vmatpush1.msra.mxu0 0.0
        %2145 = vmatprep.subr.mxu0 0.0
        %2146 = vmatpush1.msra.mxu0 0.0
        %2147 = vmatprep.subr.mxu0 0.0
        %2148 = vmatpush1.msra.mxu0 0.0
        %2149 = vmatprep.subr.mxu0 0.0
        %2150 = vmatpush1.msra.mxu0 0.0
        %2151 = vmatprep.subr.mxu0 0.0
        %2152 = vmatpush1.msra.mxu0 0.0
        %2153 = vmatprep.subr.mxu0 0.0
        %2154 = vmatpush1.msra.mxu0 0.0
        %2155 = vmatprep.subr.mxu0 0.0
        %2156 = vmatpush1.msra.mxu0 0.0
        %2157 = vmatprep.subr.mxu0 0.0
        %2158 = vmatpush1.msra.mxu0 0.0
        %2159 = vmatprep.subr.mxu0 0.0
        %2160 = vmatpush1.msra.mxu0 0.0
        %2161 = vmatprep.subr.mxu0 0.0
        %2162 = vmatpush1.msra.mxu0 0.0
        %2163 = vmatprep.subr.mxu0 0.0
        %2164 = vmatpush1.msra.mxu0 0.0
        %2165 = vmatprep.subr.mxu0 0.0
        %2166 = vmatpush1.msra.mxu0 0.0
        %2167 = vmatprep.subr.mxu0 0.0
        %2168 = vmatpush1.msra.mxu0 0.0
        %2169 = vmatprep.subr.mxu0 0.0
        %2170 = vmatpush1.msra.mxu0 0.0
        %2171 = vmatprep.subr.mxu0 0.0
        %2172 = vmatpush1.msra.mxu0 0.0
        %2173 = vmatprep.subr.mxu0 0.0
        %2174 = vmatpush1.msra.mxu0 0.0
        %2175 = vmatprep.subr.mxu0 0.0
        %2176 = vmatpush1.msra.mxu0 0.0
        %2177 = vmatprep.subr.mxu0 0.0
        %2178 = vmatpush1.msra.mxu0 0.0
        %2179 = vmatprep.subr.mxu0 0.0
        %2180 = vmatpush1.msra.mxu0 0.0
        %2181 = vmatprep.subr.mxu0 0.0
        %2182 = vmatpush1.msra.mxu0 0.0
        %2183 = vmatprep.subr.mxu0 0.0
        %2184 = vmatpush1.msra.mxu0 0.0
        %2185 = vmatprep.subr.mxu0 0.0
        %2186 = vmatpush1.msra.mxu0 0.0
        %2187 = vmatprep.subr.mxu0 0.0
        %2188 = vmatpush1.msra.mxu0 0.0
        %2189 = vmatprep.subr.mxu0 0.0
        %2190 = vmatpush1.msra.mxu0 0.0
        %2191 = vmatprep.subr.mxu0 0.0
        %2192 = vmatpush1.msra.mxu0 0.0
        %2193 = vmatprep.subr.mxu0 0.0
        %2194 = vmatpush1.msra.mxu0 0.0
        %2195 = vmatprep.subr.mxu0 0.0
        %2196 = vmatpush1.msra.mxu0 0.0
        %2197 = vmatprep.subr.mxu0 0.0
        %2198 = vmatpush1.msra.mxu0 0.0
        %2199 = vmatprep.subr.mxu0 0.0
        %2200 = vmatpush1.msra.mxu0 0.0
        %2201 = vmatprep.subr.mxu0 0.0
        %2202 = vmatpush1.msra.mxu0 0.0
        %2203 = vmatprep.subr.mxu0 0.0
        %2204 = vmatpush1.msra.mxu0 0.0
        %2205 = vmatprep.mubr.f32.mxu0 0.0
        %2206 = vmatmul.mubr.f32.gmra.mrb[0].mxu0 %v2139
        %v2207 = vpop.f32.mrb[0].mxu0
        %v2208 = vadd.f32 0.0, %v2207
        %v2209 = vpop.f32.mrb[0].mxu0
        %2210 = vdwg.mxu0
        %v2211 = vmul.f32 %v2208, %v1642
        %v2212 = vsel %vm1753, %v2211, 0.0
        %v2213 = vrot.slane %v2212, 4
        %v2214 = vadd.f32 %v2212, %v2213
        %v2215 = vrot.slane %v2214, 2
        %v2216 = vadd.f32 %v2214, %v2215
        %v2217 = vrot.slane %v2216, 1
        %v2218 = vadd.f32 %v2216, %v2217
        %v2219 = vsub.f32 %v1642, %v2218
        %v2220 = vmul.f32 %v2219, %v2219
        %v2221 = vmul.f32 %v2208, %v2220
        %v2222 = vsel %vm1753, %v2221, 0.0
        %v2223 = vrot.slane %v2222, 4
        %v2224 = vadd.f32 %v2222, %v2223
        %v2225 = vrot.slane %v2224, 2
        %v2226 = vadd.f32 %v2224, %v2225
        %v2227 = vrot.slane %v2226, 1
        %v2228 = vadd.f32 %v2226, %v2227
        %v2229 = vadd.f32 %v2228, 1e-05
        %vm2230 = vcmask 24576
        %2231 = vst.msk [vmem:[%s556] sm:$0x1] %vm2230, %v2127
        %vm2232 = vcmask 516096
        %2233 = vst.msk [vmem:[%s579] sm:$0x1] %vm2232, %v2218
        %2234 = vst.msk [vmem:[%s582] sm:$0x1] %vm2232, %v2229
        %s2235 = sand.u32 %s365, 1
        %s2236 = scalar_lea.sflag [#allocation3], %s2235
        %s2237 = sand.u32 %s365, 1
        %s2238 = scalar_lea.vmem [#allocation2], %s2237
        %p2239 = scmp.lt.s32.totalorder %s32, 1
        %s2240 = scalar_select %p2239, %s32, 1
        %s2241 = scalar_lea.vmem %s16, %s2240
        %p2242 = scmp.lt.s32.totalorder %s32, 1
        %s2243 = scalar_select %p2242, %s32, 1
        %s2244 = scalar_lea.vmem %s17, %s2243
        // Predicated region
        $region81: #{sst_classifier_forward.1} parent=79 // pred_check
          %p2245 = pneg %p375
        $region82: #{sst_classifier_forward.1} parent=79 // pred_check_branch
          %2247 = sbr.rel (%p2245) target = $region84
        $region83: #{sst_classifier_forward.1} parent=79 // pred_region
          %s2249 = ssub.s32 16, 16
          %2250 = vsyncadd %s2236, %s2249
          %s2251 = smul.addr %s32, 16
          %s2252 = scalar_lea.hbm %s15, %s2251
          %s2254 = sshll.u32 %s2238, 4
          %s2255 = int_to_ptr.vmem [resolvable:$true] %s2254
          %2257 = dma.vmem_to_hbm [thread:$0]  %s2255, 16, %s2252, %s2236
        $region84: #{sst_classifier_forward.1} parent=79 // pred_fallthru
          _
        // Predicated region
        $region85: #{sst_classifier_forward.1} parent=79 // pred_check
          %p2258 = pneg %p401
        $region86: #{sst_classifier_forward.1} parent=79 // pred_check_branch
          %2260 = sbr.rel (%p2258) target = $region88
        $region87: #{sst_classifier_forward.1} parent=79 // pred_region
          _
        $region88: #{sst_classifier_forward.1} parent=79 // pred_fallthru
          _
        // Predicated region
        $region89: #{sst_classifier_forward.1} parent=79 // pred_check
          %p2261 = pneg %p427
        $region90: #{sst_classifier_forward.1} parent=79 // pred_check_branch
          %2263 = sbr.rel (%p2261) target = $region92
        $region91: #{sst_classifier_forward.1} parent=79 // pred_region
          _
        $region92: #{sst_classifier_forward.1} parent=79 // pred_fallthru
          _
      $region80: #{sst_classifier_forward.1} parent=5 // pred_fallthru
        _
      %p2264 = scmp.le.s32.totalorder 2, %s27
      // Predicated region
      $region93: #{sst_classifier_forward.1} parent=5 // pred_check
        %p2265 = pneg %p2264
      $region94: #{sst_classifier_forward.1} parent=5 // pred_check_branch
        %2267 = sbr.rel (%p2265) target = $region96
      $region95: #{sst_classifier_forward.1} parent=5 // pred_region
        %s2268 = ssub.s32 %s27, 2
        // Predicated region
        $region97: #{sst_classifier_forward.1} parent=95 // pred_check
          %p2269 = pneg %p381
        $region98: #{sst_classifier_forward.1} parent=95 // pred_check_branch
          %2271 = sbr.rel (%p2269) target = $region100
        $region99: #{sst_classifier_forward.1} parent=95 // pred_region
          %s2272 = sand.u32 %s366, 1
          %s2273 = scalar_lea.sflag [#allocation3], %s2272
          %s2274 = sand.u32 %s366, 1
          %s2275 = scalar_lea.vmem [#allocation2], %s2274
          %2276 = dma.done %s2273, 16
        $region100: #{sst_classifier_forward.1} parent=95 // pred_fallthru
          _
        // Predicated region
        $region101: #{sst_classifier_forward.1} parent=95 // pred_check
          %p2277 = pneg %p407
        $region102: #{sst_classifier_forward.1} parent=95 // pred_check_branch
          %2279 = sbr.rel (%p2277) target = $region104
        $region103: #{sst_classifier_forward.1} parent=95 // pred_region
          %p2280 = scmp.lt.s32.totalorder %s33, 1
          %s2281 = scalar_select %p2280, %s33, 1
          %s2282 = scalar_lea.vmem %s16, %s2281
        $region104: #{sst_classifier_forward.1} parent=95 // pred_fallthru
          _
        // Predicated region
        $region105: #{sst_classifier_forward.1} parent=95 // pred_check
          %p2283 = pneg %p433
        $region106: #{sst_classifier_forward.1} parent=95 // pred_check_branch
          %2285 = sbr.rel (%p2283) target = $region108
        $region107: #{sst_classifier_forward.1} parent=95 // pred_region
          %p2286 = scmp.lt.s32.totalorder %s33, 1
          %s2287 = scalar_select %p2286, %s33, 1
          %s2288 = scalar_lea.vmem %s17, %s2287
        $region108: #{sst_classifier_forward.1} parent=95 // pred_fallthru
          _
      $region96: #{sst_classifier_forward.1} parent=5 // pred_fallthru
        _
    $region6: #{sst_classifier_forward.1} parent=1 // loop_footer
      %s31 = sadd.s32 1, %s27
    $region7: #{sst_classifier_forward.1} parent=1 // loop_footer_branch
      %26 = sbr.rel target = $region3
    $region8: #{sst_classifier_forward.1} parent=1 // loop_exit
      _
    %2289 = vsyncpa [#allocation3], 1
    %s2290 = scalar_lea.sflag [#allocation3], 1
    %2291 = vsyncpa %s2290, 1

</llo_original>
